<compile_context>
chip_gen: v7x
topology: tpu7x:2x2x1
jax: 0.10.0
libtpu: 0.0.40
codegen_flags: <defaults>
</compile_context>

<pallas_src>
import functools

import jax
import jax.numpy as jnp
import numpy as np
from jax.experimental import pallas as pl
from jax.experimental.pallas import tpu as pltpu


def up_block_kernel(xin_ref, t1_ref, t2_ref, p1_ref, p2_ref, sg_ref,
                    o_ref, xp1_ref, xp2_ref,
                    *, Nb, H, WCin, WC1, G, n_per_group, eps, compute_dtype):
    """[pad + conv3x3 + GroupNorm + ReLU] x 2 for Nb batch elements, in VMEM.

    Layout: every image row is one lane-flattened vector row of W*C lanes.
    Each 3x3 conv is ONE matmul: LHS (Nb*H, 3*W*Cin) from lane-concatenated
    padded rows i-1 / i / i+1, RHS = banded weights (horizontal taps and
    horizontal padding folded in) reshaped to (3*W*Cin, W*Cout).
    """
    Hp = H + 2

    def build_k_stacked(xp_ref):
        parts = []
        for b in range(Nb):
            r0 = b * Hp
            parts.append(jnp.concatenate(
                [xp_ref[r0:r0 + H, :],           # rows i-1 (vertical tap dy=0)
                 xp_ref[r0 + 1:r0 + 1 + H, :],   # rows i   (dy=1)
                 xp_ref[r0 + 2:r0 + 2 + H, :]],  # rows i+1 (dy=2)
                axis=1))
        return jnp.concatenate(parts, axis=0).astype(compute_dtype)

    def conv_gn_relu(x3, t_ref, p_ref):
        # --- conv: one fat MXU matmul, f32 accumulation ----------------------
        acc = jnp.dot(x3, t_ref[...], preferred_element_type=jnp.float32)

        bias = p_ref[G:G + 1, :]       # (1, WC) conv bias (f32)
        beta = p_ref[G + 1:G + 2, :]   # (1, WC) GN beta   (f32)

        # --- GroupNorm(8): per-element stats, all in f32 ---------------------
        # Conv bias folded analytically:  sum(a+b)   = sum(a)   + H*b
        #                                 sum((a+b)^2) = sum(a^2) + 2b*sum(a) + H*b^2
        s_parts, ss_parts = [], []
        for b in range(Nb):
            ab = acc[b * H:(b + 1) * H, :]
            s_parts.append(jnp.sum(ab, axis=0, keepdims=True))
            ss_parts.append(jnp.sum(ab * ab, axis=0, keepdims=True))
        s = jnp.concatenate(s_parts, axis=0)       # (Nb, WC)
        ss = jnp.concatenate(ss_parts, axis=0)     # (Nb, WC)
        s_z = s + H * bias
        ss_z = ss + 2.0 * bias * s + H * (bias * bias)

        # one pooling matmul for both sums: (2*Nb, WC) x (WC, G)
        pooled = jnp.dot(jnp.concatenate([s_z, ss_z], axis=0), sg_ref[...],
                         preferred_element_type=jnp.float32)
        gsum = pooled[0:Nb, :]
        gsq = pooled[Nb:2 * Nb, :]
        inv_n = 1.0 / n_per_group
        mean_g = gsum * inv_n
        # TODO(synk): E[x^2]-E[x]^2 with a clamp is fine at these magnitudes;
        # switch to a two-pass (subtract-mean) variance before scaling up.
        var_g = jnp.maximum(gsq * inv_n - mean_g * mean_g, 0.0)
        inv_g = jax.lax.rsqrt(var_g + eps)

        # one broadcast matmul for both scale and mean*scale; gamma is already
        # folded into the one-hot rows p_ref[0:G]: (2*Nb, G) x (G, WC)
        q = jnp.dot(jnp.concatenate([inv_g, mean_g * inv_g], axis=0),
                    p_ref[0:G, :], preferred_element_type=jnp.float32)
        scale = q[0:Nb, :]                         # inv_std * gamma per lane
        msg = q[Nb:2 * Nb, :]                      # mean * inv_std * gamma
        shift = beta + bias * scale - msg          # (Nb, WC)

        # --- normalize + affine + ReLU: one mul + one add + one max ----------
        ys = []
        for b in range(Nb):
            ab = acc[b * H:(b + 1) * H, :]
            ys.append(jnp.maximum(
                ab * scale[b:b + 1, :] + shift[b:b + 1, :], 0.0))
        return ys                                  # list of (H, WC) f32

    # ---- stage 1: per-element padded scratch, single conv matmul ------------
    zci = jnp.zeros((1, WCin), jnp.float32)
    for b in range(Nb):
        r0 = b * Hp
        xp1_ref[r0:r0 + 1, :] = zci
        xp1_ref[r0 + H + 1:r0 + H + 2, :] = zci
        xp1_ref[r0 + 1:r0 + 1 + H, :] = (
            xin_ref[b * H:(b + 1) * H, :].astype(jnp.float32))
    y1 = conv_gn_relu(build_k_stacked(xp1_ref), t1_ref, p1_ref)

    # ---- stage 2: the intermediate activation never leaves VMEM -------------
    zc1 = jnp.zeros((1, WC1), jnp.float32)
    for b in range(Nb):
        r0 = b * Hp
        xp2_ref[r0:r0 + 1, :] = zc1
        xp2_ref[r0 + H + 1:r0 + H + 2, :] = zc1
        xp2_ref[r0 + 1:r0 + 1 + H, :] = y1[b]
    y2 = conv_gn_relu(build_k_stacked(xp2_ref), t2_ref, p2_ref)

    # ---- lane-dense output store (W*C2 is a multiple of 128 lanes) ----------
    for b in range(Nb):
        o_ref[b * H:(b + 1) * H, :] = y2[b].astype(o_ref.dtype)


def _band_weights(w_hwio, W):
    """(3, 3, Cin, Cout) conv weights -> (3, W*Cin, W*Cout) banded matrices.

    band[dy][jp*Cin + c, j*Cout + o] = w[dy, jp - j + 1, c, o] when the
    horizontal tap index lies in [0, 3), else 0.  This folds the 3 horizontal
    taps AND the horizontal zero-padding (padding=1) into the matmul; the
    caller flattens the dy axis into the contraction dim (K = 3*W*Cin) so the
    whole 3x3 conv is ONE matmul per stage.
    """
    kh, kw, Cin, Cout = w_hwio.shape
    jp = jnp.arange(W)[:, None]           # input (interior) column
    j = jnp.arange(W)[None, :]            # output column
    dx = jp - j + 1                       # horizontal tap index
    valid = (dx >= 0) & (dx < kw)
    dxc = jnp.clip(dx, 0, kw - 1)
    band = w_hwio[:, dxc]                                   # (3, W, W, Cin, Cout)
    band = jnp.where(valid[None, :, :, None, None], band, 0.0)
    band = band.transpose(0, 1, 3, 2, 4).reshape(kh, W * Cin, W * Cout)
    return band


def _pick_batch_group(N, H, target_rows=256):
    """Batch elements per grid step.

    Raise the conv-matmul M dim (Nb*H) toward ~256 rows (feeds the v6e/v7x
    256-deep MXU; >=128 already saturates v5e) while (a) keeping >= 2 grid
    steps when N >= 2 so the parallel axis can still split across v7x's two
    TensorCores and (b) keeping Nb a divisor of N.
    """
    cap = max(1, min(N if N < 2 else N // 2, max(1, target_rows // max(H, 1))))
    nb = 1
    for d in range(1, cap + 1):
        if N % d == 0:
            nb = d
    return nb


def up_block(x_nchw, skip_nchw, params, *, num_groups=8, eps=1e-5,
             compute_dtype=jnp.float32):
    """UpBlock.forward: nearest 2x upsample + channel concat + block(.).

    compute_dtype selects the conv-matmul operand dtype (float32 for exact
    parity with the f32 reference, bfloat16 for the v6e/v7x MXU fast path).
    GroupNorm statistics and normalization arithmetic are always f32.
    """
    compute_dtype = np.dtype(compute_dtype)
    N, Cx, h, w = x_nchw.shape
    _, Cs, H, W = skip_nchw.shape
    Cin = Cx + Cs
    C1 = params["w1"].shape[-1]
    C2 = params["w2"].shape[-1]
    assert C1 == C2, "both convs of the block produce out_channels"
    assert C2 % num_groups == 0
    cpg = C2 // num_groups
    G = num_groups
    Nb = _pick_batch_group(N, H)

    # --- glue (layout only): NCHW->NHWC, nearest-2x, concat, lane-flatten.
    #     Kept in XLA on the small pre-conv tensors, materialized in the kernel
    #     compute dtype (bf16 halves this HBM round-trip).
    # TODO(synk): fold the upsample + concat into the kernel to remove this
    #     round-trip entirely (biggest relative win on v5e).
    x = jnp.transpose(x_nchw, (0, 2, 3, 1))
    skip = jnp.transpose(skip_nchw, (0, 2, 3, 1))
    xu = jnp.repeat(jnp.repeat(x, 2, axis=1), 2, axis=2)          # nearest x2
    xin = jnp.concatenate([xu, skip], axis=-1).reshape(N * H, W * Cin)
    xin = xin.astype(compute_dtype)

    # --- parameter prep (once per call; would be cached in a real model) -----
    t1 = _band_weights(params["w1"].reshape(3, 3, Cin, C1), W)
    t2 = _band_weights(params["w2"].reshape(3, 3, C1, C2), W)
    t1 = t1.reshape(3 * W * Cin, W * C1).astype(compute_dtype)
    t2 = t2.reshape(3 * W * C1, W * C2).astype(compute_dtype)

    lane_group = jnp.tile(jnp.arange(C2) // cpg, W)                # (W*C2,)
    sg = (lane_group[:, None] == jnp.arange(G)[None, :]).astype(jnp.float32)
    sgt = sg.T                                                     # (G, W*C2)

    def pack_params(gamma, bias, beta):
        # rows 0..G-1: one-hot broadcast rows pre-scaled by gamma,
        # row G: conv bias, row G+1: GN beta (all f32, all lane-tiled).
        return jnp.concatenate([sgt * jnp.tile(gamma, W)[None, :],
                                jnp.tile(bias, W)[None, :],
                                jnp.tile(beta, W)[None, :]], axis=0)

    p1 = pack_params(params["g1"], params["b1"], params["be1"])    # (G+2, W*C1)
    p2 = pack_params(params["g2"], params["b2"], params["be2"])    # (G+2, W*C2)

    kernel = functools.partial(
        up_block_kernel, Nb=Nb, H=H, WCin=W * Cin, WC1=W * C1, G=G,
        n_per_group=float(H * W * cpg), eps=eps, compute_dtype=compute_dtype)

    def build(single_buffer_consts):
        const_kw = (dict(pipeline_mode=pl.Buffered(1))
                    if single_buffer_consts else {})
        return pl.pallas_call(
            kernel,
            out_shape=jax.ShapeDtypeStruct((N * H, W * C2), x_nchw.dtype),
            grid_spec=pltpu.PrefetchScalarGridSpec(
                num_scalar_prefetch=0,
                grid=(N // Nb,),
                in_specs=[
                    pl.BlockSpec((Nb * H, W * Cin), lambda g: (g, 0)),
                    pl.BlockSpec((3 * W * Cin, W * C1), lambda g: (0, 0),
                                 **const_kw),
                    pl.BlockSpec((3 * W * C1, W * C2), lambda g: (0, 0),
                                 **const_kw),
                    pl.BlockSpec((G + 2, W * C1), lambda g: (0, 0), **const_kw),
                    pl.BlockSpec((G + 2, W * C2), lambda g: (0, 0), **const_kw),
                    pl.BlockSpec((W * C2, G), lambda g: (0, 0), **const_kw),
                ],
                out_specs=pl.BlockSpec((Nb * H, W * C2), lambda g: (g, 0)),
                scratch_shapes=[
                    pltpu.VMEM((Nb * (H + 2), W * Cin), jnp.float32),
                    pltpu.VMEM((Nb * (H + 2), W * C1), jnp.float32),
                ],
            ),
            compiler_params=pltpu.CompilerParams(
                dimension_semantics=("parallel",),
                vmem_limit_bytes=32 * 1024 * 1024),
        )

    try:
        # constant blocks single-buffered (saves VMEM; matters on v7x's 64 MiB)
        out_flat = build(True)(xin, t1, t2, p1, p2, sg)
    except Exception:
        # this JAX/Mosaic version rejects pl.Buffered(1): use default buffering
        out_flat = build(False)(xin, t1, t2, p1, p2, sg)

    out = out_flat.reshape(N, H, W, C2)
    return jnp.transpose(out, (0, 3, 1, 2))        # back to NCHW (module API)


def ref_up_block(x_nchw, skip_nchw, params, num_groups=8, eps=1e-5):
    """Pure-JAX reference mirroring the PyTorch forward (all f32)."""
    x = jnp.transpose(x_nchw, (0, 2, 3, 1))
    skip = jnp.transpose(skip_nchw, (0, 2, 3, 1))
    x = jnp.repeat(jnp.repeat(x, 2, axis=1), 2, axis=2)
    x = jnp.concatenate([x, skip], axis=-1)

    def block(x, w9, b, g, be):
        Cin, Cout = x.shape[-1], w9.shape[-1]
        w_hwio = w9.reshape(3, 3, Cin, Cout)
        y = jax.lax.conv_general_dilated(
            x, w_hwio, (1, 1), "SAME",
            dimension_numbers=("NHWC", "HWIO", "NHWC")) + b
        N, H, W, C = y.shape
        cpg = C // num_groups
        yg = y.reshape(N, H, W, num_groups, cpg)
        mean = yg.mean(axis=(1, 2, 4), keepdims=True)
        var = ((yg - mean) ** 2).mean(axis=(1, 2, 4), keepdims=True)
        yn = ((yg - mean) * jax.lax.rsqrt(var + eps)).reshape(N, H, W, C)
        return jnp.maximum(yn * g + be, 0.0)

    h = block(x, params["w1"], params["b1"], params["g1"], params["be1"])
    h = block(h, params["w2"], params["b2"], params["g2"], params["be2"])
    return jnp.transpose(h, (0, 3, 1, 2))


def init_params(key, in_channels, out_channels):
    """Deterministic synthetic parameters (shapes per nn.Conv2d/GroupNorm)."""
    ks = jax.random.split(key, 8)
    p = {
        # conv1: PyTorch weight (Cout, Cin, 3, 3) -> stored as (9, Cin, Cout)
        "w1": 0.1 * jax.random.normal(ks[0], (9, in_channels, out_channels),
                                      jnp.float32),
        "b1": 0.1 * jax.random.normal(ks[1], (out_channels,), jnp.float32),
        "g1": 1.0 + 0.1 * jax.random.normal(ks[2], (out_channels,), jnp.float32),
        "be1": 0.1 * jax.random.normal(ks[3], (out_channels,), jnp.float32),
        # conv2
        "w2": 0.1 * jax.random.normal(ks[4], (9, out_channels, out_channels),
                                      jnp.float32),
        "b2": 0.1 * jax.random.normal(ks[5], (out_channels,), jnp.float32),
        "g2": 1.0 + 0.1 * jax.random.normal(ks[6], (out_channels,), jnp.float32),
        "be2": 0.1 * jax.random.normal(ks[7], (out_channels,), jnp.float32),
    }
    return p


if __name__ == "__main__":
    key = jax.random.PRNGKey(0)
    k_x, k_skip, k_p = jax.random.split(key, 3)

    # UpBlock(in_channels=8, out_channels=8): x has 4 channels, skip has 4,
    # concat -> 8 = in_channels; out_channels must be divisible by 8 for GN.
    N, Cx, h, w = 2, 4, 8, 8
    Cs, H, W = 4, 16, 16           # skip is at the upsampled resolution
    in_channels, out_channels = Cx + Cs, 8

    x = jax.random.normal(k_x, (N, Cx, h, w), jnp.float32)        # NCHW
    skip = jax.random.normal(k_skip, (N, Cs, H, W), jnp.float32)  # NCHW
    params = init_params(k_p, in_channels, out_channels)

    ref = jax.block_until_ready(ref_up_block(x, skip, params))

    # 1) f32 matmul-operand path: tight parity with the XLA reference.
    out_f32 = jax.block_until_ready(
        up_block(x, skip, params, compute_dtype=jnp.float32))
    assert out_f32.shape == (N, out_channels, H, W), out_f32.shape
    assert jnp.allclose(out_f32, ref, rtol=1e-4, atol=1e-4), (
        float(jnp.max(jnp.abs(out_f32 - ref))))

    # 2) bf16 matmul-operand fast path (f32 GroupNorm stats): ~1e-2-level
    #    agreement with the full-f32 reference is the expected bf16 error.
    out_bf16 = jax.block_until_ready(
        up_block(x, skip, params, compute_dtype=jnp.bfloat16))
    assert jnp.allclose(out_bf16, ref, rtol=1e-1, atol=1e-1), (
        float(jnp.max(jnp.abs(out_bf16 - ref))))

    # 3) batch-stacked path: N=4 runs 2 batch elements per grid step (Nb=2).
    x4 = jnp.concatenate([x, 0.5 * x[::-1]], axis=0)
    skip4 = jnp.concatenate([skip, 0.5 * skip[::-1]], axis=0)
    out4 = jax.block_until_ready(
        up_block(x4, skip4, params, compute_dtype=jnp.float32))
    ref4 = jax.block_until_ready(ref_up_block(x4, skip4, params))
    assert jnp.allclose(out4, ref4, rtol=1e-4, atol=1e-4), (
        float(jnp.max(jnp.abs(out4 - ref4))))

    print("KERNEL_OK")
</pallas_src>

<mosaic_0001>
module attributes {stable_mosaic.version = 11 : i64} {
  func.func @up_block_kernel(%arg0: i32, %arg1: memref<16x128xf32, #tpu.memory_space<vmem>>, %arg2: memref<384x128xf32, #tpu.memory_space<vmem>>, %arg3: memref<384x128xf32, #tpu.memory_space<vmem>>, %arg4: memref<10x128xf32, #tpu.memory_space<vmem>>, %arg5: memref<10x128xf32, #tpu.memory_space<vmem>>, %arg6: memref<128x8xf32, #tpu.memory_space<vmem>>, %arg7: memref<16x128xf32, #tpu.memory_space<vmem>>, %arg8: memref<18x128xf32, #tpu.memory_space<vmem>>, %arg9: memref<18x128xf32, #tpu.memory_space<vmem>>) attributes {dimension_semantics = [#tpu.dimension_semantics<parallel>], iteration_bounds = array<i64: 2>, scalar_prefetch = 0 : i64, scratch_operands = 2 : i64, tpu.core_type = #tpu.core_type<tc>, window_params = [{transform_indices = @transform_0, window_bounds = array<i64: 16, 128>}, {pipeline_mode = #tpu.pipeline_mode<synchronous>, transform_indices = @transform_1, window_bounds = array<i64: 384, 128>}, {pipeline_mode = #tpu.pipeline_mode<synchronous>, transform_indices = @transform_2, window_bounds = array<i64: 384, 128>}, {pipeline_mode = #tpu.pipeline_mode<synchronous>, transform_indices = @transform_3, window_bounds = array<i64: 10, 128>}, {pipeline_mode = #tpu.pipeline_mode<synchronous>, transform_indices = @transform_4, window_bounds = array<i64: 10, 128>}, {pipeline_mode = #tpu.pipeline_mode<synchronous>, transform_indices = @transform_5, window_bounds = array<i64: 128, 8>}, {transform_indices = @transform_6, window_bounds = array<i64: 16, 128>}]} {
    %cst = arith.constant 0.000000e+00 : f32
    %0 = vector.broadcast %cst : f32 to vector<1x128xf32>
    %c0 = arith.constant 0 : index
    %c0_0 = arith.constant 0 : index
    %1 = vector.load %arg8[%c0, %c0_0] : memref<18x128xf32, #tpu.memory_space<vmem>>, vector<1x128xf32>
    tpu.vector_store %arg8[%c0, %c0_0], %0 {strides = array<i32>} : memref<18x128xf32, #tpu.memory_space<vmem>>, vector<1x128xf32>,
    %c17 = arith.constant 17 : index
    %c0_1 = arith.constant 0 : index
    %2 = vector.load %arg8[%c17, %c0_1] : memref<18x128xf32, #tpu.memory_space<vmem>>, vector<1x128xf32>
    tpu.vector_store %arg8[%c17, %c0_1], %0 {strides = array<i32>} : memref<18x128xf32, #tpu.memory_space<vmem>>, vector<1x128xf32>,
    %c0_2 = arith.constant 0 : index
    %c0_3 = arith.constant 0 : index
    %3 = vector.load %arg1[%c0_2, %c0_3] : memref<16x128xf32, #tpu.memory_space<vmem>>, vector<16x128xf32>
    %c1 = arith.constant 1 : index
    %c0_4 = arith.constant 0 : index
    %4 = vector.load %arg8[%c1, %c0_4] : memref<18x128xf32, #tpu.memory_space<vmem>>, vector<16x128xf32>
    tpu.vector_store %arg8[%c1, %c0_4], %3 {strides = array<i32>} : memref<18x128xf32, #tpu.memory_space<vmem>>, vector<16x128xf32>,
    %c0_5 = arith.constant 0 : index
    %c0_6 = arith.constant 0 : index
    %5 = vector.load %arg8[%c0_5, %c0_6] : memref<18x128xf32, #tpu.memory_space<vmem>>, vector<16x128xf32>
    %c1_7 = arith.constant 1 : index
    %c0_8 = arith.constant 0 : index
    %6 = vector.load %arg8[%c1_7, %c0_8] : memref<18x128xf32, #tpu.memory_space<vmem>>, vector<16x128xf32>
    %c2 = arith.constant 2 : index
    %c0_9 = arith.constant 0 : index
    %7 = vector.load %arg8[%c2, %c0_9] : memref<18x128xf32, #tpu.memory_space<vmem>>, vector<16x128xf32>
    %8 = tpu.concatenate %5, %6, %7 in 1 : vector<16x128xf32>, vector<16x128xf32>, vector<16x128xf32> -> vector<16x384xf32>
    %c0_10 = arith.constant 0 : index
    %c0_11 = arith.constant 0 : index
    %9 = vector.load %arg2[%c0_10, %c0_11] : memref<384x128xf32, #tpu.memory_space<vmem>>, vector<384x128xf32>
    %cst_12 = arith.constant dense<0.000000e+00> : vector<16x128xf32>
    %10 = tpu.matmul %8, %9, %cst_12 {dimension_numbers = #tpu.dot_dimension_numbers<[1], [0], [0], [1], [0, 0, 1, 1], [], []>} : vector<16x384xf32>, vector<384x128xf32>, vector<16x128xf32> -> vector<16x128xf32>
    %c8 = arith.constant 8 : index
    %c0_13 = arith.constant 0 : index
    %11 = vector.load %arg4[%c8, %c0_13] : memref<10x128xf32, #tpu.memory_space<vmem>>, vector<1x128xf32>
    %c9 = arith.constant 9 : index
    %c0_14 = arith.constant 0 : index
    %12 = vector.load %arg4[%c9, %c0_14] : memref<10x128xf32, #tpu.memory_space<vmem>>, vector<1x128xf32>
    %cst_15 = arith.constant dense<0.000000e+00> : vector<128xf32>
    %13 = vector.multi_reduction <add>, %10, %cst_15 [0] : vector<16x128xf32> to vector<128xf32>
    %14 = vector.shape_cast %13 : vector<128xf32> to vector<1x128xf32>
    %15 = arith.mulf %10, %10 : vector<16x128xf32>
    %cst_16 = arith.constant dense<0.000000e+00> : vector<128xf32>
    %16 = vector.multi_reduction <add>, %15, %cst_16 [0] : vector<16x128xf32> to vector<128xf32>
    %17 = vector.shape_cast %16 : vector<128xf32> to vector<1x128xf32>
    %cst_17 = arith.constant 1.600000e+01 : f32
    %18 = vector.broadcast %cst_17 : f32 to vector<1x128xf32>
    %19 = arith.mulf %18, %11 : vector<1x128xf32>
    %20 = arith.addf %14, %19 : vector<1x128xf32>
    %cst_18 = arith.constant 2.000000e+00 : f32
    %21 = vector.broadcast %cst_18 : f32 to vector<1x128xf32>
    %22 = arith.mulf %21, %11 : vector<1x128xf32>
    %23 = arith.mulf %22, %14 : vector<1x128xf32>
    %24 = arith.addf %17, %23 : vector<1x128xf32>
    %25 = arith.mulf %11, %11 : vector<1x128xf32>
    %cst_19 = arith.constant 1.600000e+01 : f32
    %26 = vector.broadcast %cst_19 : f32 to vector<1x128xf32>
    %27 = arith.mulf %26, %25 : vector<1x128xf32>
    %28 = arith.addf %24, %27 : vector<1x128xf32>
    %29 = tpu.concatenate %20, %28 in 0 : vector<1x128xf32>, vector<1x128xf32> -> vector<2x128xf32>
    %c0_20 = arith.constant 0 : index
    %c0_21 = arith.constant 0 : index
    %30 = vector.load %arg6[%c0_20, %c0_21] : memref<128x8xf32, #tpu.memory_space<vmem>>, vector<128x8xf32>
    %cst_22 = arith.constant dense<0.000000e+00> : vector<2x8xf32>
    %31 = tpu.matmul %29, %30, %cst_22 {dimension_numbers = #tpu.dot_dimension_numbers<[1], [0], [0], [1], [0, 0, 1, 1], [], []>} : vector<2x128xf32>, vector<128x8xf32>, vector<2x8xf32> -> vector<2x8xf32>
    %32 = vector.extract_strided_slice %31 {offsets = [0, 0], sizes = [1, 8], strides = [1, 1]} : vector<2x8xf32> to vector<1x8xf32>
    %33 = vector.extract_strided_slice %31 {offsets = [1, 0], sizes = [1, 8], strides = [1, 1]} : vector<2x8xf32> to vector<1x8xf32>
    %cst_23 = arith.constant 3.906250e-03 : f32
    %34 = vector.broadcast %cst_23 : f32 to vector<1x8xf32>
    %35 = arith.mulf %32, %34 : vector<1x8xf32>
    %cst_24 = arith.constant 3.906250e-03 : f32
    %36 = vector.broadcast %cst_24 : f32 to vector<1x8xf32>
    %37 = arith.mulf %33, %36 : vector<1x8xf32>
    %38 = arith.mulf %35, %35 : vector<1x8xf32>
    %39 = arith.subf %37, %38 : vector<1x8xf32>
    %cst_25 = arith.constant 0.000000e+00 : f32
    %40 = vector.broadcast %cst_25 : f32 to vector<1x8xf32>
    %41 = arith.maximumf %39, %40 : vector<1x8xf32>
    %cst_26 = arith.constant 9.99999974E-6 : f32
    %42 = vector.broadcast %cst_26 : f32 to vector<1x8xf32>
    %43 = arith.addf %41, %42 : vector<1x8xf32>
    %44 = math.rsqrt %43 : vector<1x8xf32>
    %45 = arith.mulf %35, %44 : vector<1x8xf32>
    %46 = tpu.concatenate %44, %45 in 0 : vector<1x8xf32>, vector<1x8xf32> -> vector<2x8xf32>
    %c0_27 = arith.constant 0 : index
    %c0_28 = arith.constant 0 : index
    %47 = vector.load %arg4[%c0_27, %c0_28] : memref<10x128xf32, #tpu.memory_space<vmem>>, vector<8x128xf32>
    %cst_29 = arith.constant dense<0.000000e+00> : vector<2x128xf32>
    %48 = tpu.matmul %46, %47, %cst_29 {dimension_numbers = #tpu.dot_dimension_numbers<[1], [0], [0], [1], [0, 0, 1, 1], [], []>} : vector<2x8xf32>, vector<8x128xf32>, vector<2x128xf32> -> vector<2x128xf32>
    %49 = vector.extract_strided_slice %48 {offsets = [0, 0], sizes = [1, 128], strides = [1, 1]} : vector<2x128xf32> to vector<1x128xf32>
    %50 = vector.extract_strided_slice %48 {offsets = [1, 0], sizes = [1, 128], strides = [1, 1]} : vector<2x128xf32> to vector<1x128xf32>
    %51 = arith.mulf %11, %49 : vector<1x128xf32>
    %52 = arith.addf %12, %51 : vector<1x128xf32>
    %53 = arith.subf %52, %50 : vector<1x128xf32>
    %54 = vector.broadcast %49 : vector<1x128xf32> to vector<16x128xf32>
    %55 = arith.mulf %10, %54 : vector<16x128xf32>
    %56 = vector.broadcast %53 : vector<1x128xf32> to vector<16x128xf32>
    %57 = arith.addf %55, %56 : vector<16x128xf32>
    %cst_30 = arith.constant 0.000000e+00 : f32
    %58 = vector.broadcast %cst_30 : f32 to vector<16x128xf32>
    %59 = arith.maximumf %57, %58 : vector<16x128xf32>
    %cst_31 = arith.constant 0.000000e+00 : f32
    %60 = vector.broadcast %cst_31 : f32 to vector<1x128xf32>
    %c0_32 = arith.constant 0 : index
    %c0_33 = arith.constant 0 : index
    %61 = vector.load %arg9[%c0_32, %c0_33] : memref<18x128xf32, #tpu.memory_space<vmem>>, vector<1x128xf32>
    tpu.vector_store %arg9[%c0_32, %c0_33], %60 {strides = array<i32>} : memref<18x128xf32, #tpu.memory_space<vmem>>, vector<1x128xf32>,
    %c17_34 = arith.constant 17 : index
    %c0_35 = arith.constant 0 : index
    %62 = vector.load %arg9[%c17_34, %c0_35] : memref<18x128xf32, #tpu.memory_space<vmem>>, vector<1x128xf32>
    tpu.vector_store %arg9[%c17_34, %c0_35], %60 {strides = array<i32>} : memref<18x128xf32, #tpu.memory_space<vmem>>, vector<1x128xf32>,
    %c1_36 = arith.constant 1 : index
    %c0_37 = arith.constant 0 : index
    %63 = vector.load %arg9[%c1_36, %c0_37] : memref<18x128xf32, #tpu.memory_space<vmem>>, vector<16x128xf32>
    tpu.vector_store %arg9[%c1_36, %c0_37], %59 {strides = array<i32>} : memref<18x128xf32, #tpu.memory_space<vmem>>, vector<16x128xf32>,
    %c0_38 = arith.constant 0 : index
    %c0_39 = arith.constant 0 : index
    %64 = vector.load %arg9[%c0_38, %c0_39] : memref<18x128xf32, #tpu.memory_space<vmem>>, vector<16x128xf32>
    %c1_40 = arith.constant 1 : index
    %c0_41 = arith.constant 0 : index
    %65 = vector.load %arg9[%c1_40, %c0_41] : memref<18x128xf32, #tpu.memory_space<vmem>>, vector<16x128xf32>
    %c2_42 = arith.constant 2 : index
    %c0_43 = arith.constant 0 : index
    %66 = vector.load %arg9[%c2_42, %c0_43] : memref<18x128xf32, #tpu.memory_space<vmem>>, vector<16x128xf32>
    %67 = tpu.concatenate %64, %65, %66 in 1 : vector<16x128xf32>, vector<16x128xf32>, vector<16x128xf32> -> vector<16x384xf32>
    %c0_44 = arith.constant 0 : index
    %c0_45 = arith.constant 0 : index
    %68 = vector.load %arg3[%c0_44, %c0_45] : memref<384x128xf32, #tpu.memory_space<vmem>>, vector<384x128xf32>
    %cst_46 = arith.constant dense<0.000000e+00> : vector<16x128xf32>
    %69 = tpu.matmul %67, %68, %cst_46 {dimension_numbers = #tpu.dot_dimension_numbers<[1], [0], [0], [1], [0, 0, 1, 1], [], []>} : vector<16x384xf32>, vector<384x128xf32>, vector<16x128xf32> -> vector<16x128xf32>
    %c8_47 = arith.constant 8 : index
    %c0_48 = arith.constant 0 : index
    %70 = vector.load %arg5[%c8_47, %c0_48] : memref<10x128xf32, #tpu.memory_space<vmem>>, vector<1x128xf32>
    %c9_49 = arith.constant 9 : index
    %c0_50 = arith.constant 0 : index
    %71 = vector.load %arg5[%c9_49, %c0_50] : memref<10x128xf32, #tpu.memory_space<vmem>>, vector<1x128xf32>
    %cst_51 = arith.constant dense<0.000000e+00> : vector<128xf32>
    %72 = vector.multi_reduction <add>, %69, %cst_51 [0] : vector<16x128xf32> to vector<128xf32>
    %73 = vector.shape_cast %72 : vector<128xf32> to vector<1x128xf32>
    %74 = arith.mulf %69, %69 : vector<16x128xf32>
    %cst_52 = arith.constant dense<0.000000e+00> : vector<128xf32>
    %75 = vector.multi_reduction <add>, %74, %cst_52 [0] : vector<16x128xf32> to vector<128xf32>
    %76 = vector.shape_cast %75 : vector<128xf32> to vector<1x128xf32>
    %cst_53 = arith.constant 1.600000e+01 : f32
    %77 = vector.broadcast %cst_53 : f32 to vector<1x128xf32>
    %78 = arith.mulf %77, %70 : vector<1x128xf32>
    %79 = arith.addf %73, %78 : vector<1x128xf32>
    %cst_54 = arith.constant 2.000000e+00 : f32
    %80 = vector.broadcast %cst_54 : f32 to vector<1x128xf32>
    %81 = arith.mulf %80, %70 : vector<1x128xf32>
    %82 = arith.mulf %81, %73 : vector<1x128xf32>
    %83 = arith.addf %76, %82 : vector<1x128xf32>
    %84 = arith.mulf %70, %70 : vector<1x128xf32>
    %cst_55 = arith.constant 1.600000e+01 : f32
    %85 = vector.broadcast %cst_55 : f32 to vector<1x128xf32>
    %86 = arith.mulf %85, %84 : vector<1x128xf32>
    %87 = arith.addf %83, %86 : vector<1x128xf32>
    %88 = tpu.concatenate %79, %87 in 0 : vector<1x128xf32>, vector<1x128xf32> -> vector<2x128xf32>
    %c0_56 = arith.constant 0 : index
    %c0_57 = arith.constant 0 : index
    %89 = vector.load %arg6[%c0_56, %c0_57] : memref<128x8xf32, #tpu.memory_space<vmem>>, vector<128x8xf32>
    %cst_58 = arith.constant dense<0.000000e+00> : vector<2x8xf32>
    %90 = tpu.matmul %88, %89, %cst_58 {dimension_numbers = #tpu.dot_dimension_numbers<[1], [0], [0], [1], [0, 0, 1, 1], [], []>} : vector<2x128xf32>, vector<128x8xf32>, vector<2x8xf32> -> vector<2x8xf32>
    %91 = vector.extract_strided_slice %90 {offsets = [0, 0], sizes = [1, 8], strides = [1, 1]} : vector<2x8xf32> to vector<1x8xf32>
    %92 = vector.extract_strided_slice %90 {offsets = [1, 0], sizes = [1, 8], strides = [1, 1]} : vector<2x8xf32> to vector<1x8xf32>
    %cst_59 = arith.constant 3.906250e-03 : f32
    %93 = vector.broadcast %cst_59 : f32 to vector<1x8xf32>
    %94 = arith.mulf %91, %93 : vector<1x8xf32>
    %cst_60 = arith.constant 3.906250e-03 : f32
    %95 = vector.broadcast %cst_60 : f32 to vector<1x8xf32>
    %96 = arith.mulf %92, %95 : vector<1x8xf32>
    %97 = arith.mulf %94, %94 : vector<1x8xf32>
    %98 = arith.subf %96, %97 : vector<1x8xf32>
    %cst_61 = arith.constant 0.000000e+00 : f32
    %99 = vector.broadcast %cst_61 : f32 to vector<1x8xf32>
    %100 = arith.maximumf %98, %99 : vector<1x8xf32>
    %cst_62 = arith.constant 9.99999974E-6 : f32
    %101 = vector.broadcast %cst_62 : f32 to vector<1x8xf32>
    %102 = arith.addf %100, %101 : vector<1x8xf32>
    %103 = math.rsqrt %102 : vector<1x8xf32>
    %104 = arith.mulf %94, %103 : vector<1x8xf32>
    %105 = tpu.concatenate %103, %104 in 0 : vector<1x8xf32>, vector<1x8xf32> -> vector<2x8xf32>
    %c0_63 = arith.constant 0 : index
    %c0_64 = arith.constant 0 : index
    %106 = vector.load %arg5[%c0_63, %c0_64] : memref<10x128xf32, #tpu.memory_space<vmem>>, vector<8x128xf32>
    %cst_65 = arith.constant dense<0.000000e+00> : vector<2x128xf32>
    %107 = tpu.matmul %105, %106, %cst_65 {dimension_numbers = #tpu.dot_dimension_numbers<[1], [0], [0], [1], [0, 0, 1, 1], [], []>} : vector<2x8xf32>, vector<8x128xf32>, vector<2x128xf32> -> vector<2x128xf32>
    %108 = vector.extract_strided_slice %107 {offsets = [0, 0], sizes = [1, 128], strides = [1, 1]} : vector<2x128xf32> to vector<1x128xf32>
    %109 = vector.extract_strided_slice %107 {offsets = [1, 0], sizes = [1, 128], strides = [1, 1]} : vector<2x128xf32> to vector<1x128xf32>
    %110 = arith.mulf %70, %108 : vector<1x128xf32>
    %111 = arith.addf %71, %110 : vector<1x128xf32>
    %112 = arith.subf %111, %109 : vector<1x128xf32>
    %113 = vector.broadcast %108 : vector<1x128xf32> to vector<16x128xf32>
    %114 = arith.mulf %69, %113 : vector<16x128xf32>
    %115 = vector.broadcast %112 : vector<1x128xf32> to vector<16x128xf32>
    %116 = arith.addf %114, %115 : vector<16x128xf32>
    %cst_66 = arith.constant 0.000000e+00 : f32
    %117 = vector.broadcast %cst_66 : f32 to vector<16x128xf32>
    %118 = arith.maximumf %116, %117 : vector<16x128xf32>
    %c0_67 = arith.constant 0 : index
    %c0_68 = arith.constant 0 : index
    %119 = vector.load %arg7[%c0_67, %c0_68] : memref<16x128xf32, #tpu.memory_space<vmem>>, vector<16x128xf32>
    tpu.vector_store %arg7[%c0_67, %c0_68], %118 {strides = array<i32>} : memref<16x128xf32, #tpu.memory_space<vmem>>, vector<16x128xf32>,
    return
  }
  func.func @transform_0(%arg0: i32) -> (i32, i32) {
    %c0_i32 = arith.constant 0 : i32
    %c0_i32_0 = arith.constant 0 : i32
    return %arg0, %c0_i32 : i32, i32
  }
  func.func @transform_1(%arg0: i32) -> (i32, i32) {
    %c0_i32 = arith.constant 0 : i32
    %c0_i32_0 = arith.constant 0 : i32
    %c0_i32_1 = arith.constant 0 : i32
    return %c0_i32, %c0_i32_0 : i32, i32
  }
  func.func @transform_2(%arg0: i32) -> (i32, i32) {
    %c0_i32 = arith.constant 0 : i32
    %c0_i32_0 = arith.constant 0 : i32
    %c0_i32_1 = arith.constant 0 : i32
    return %c0_i32, %c0_i32_0 : i32, i32
  }
  func.func @transform_3(%arg0: i32) -> (i32, i32) {
    %c0_i32 = arith.constant 0 : i32
    %c0_i32_0 = arith.constant 0 : i32
    %c0_i32_1 = arith.constant 0 : i32
    return %c0_i32, %c0_i32_0 : i32, i32
  }
  func.func @transform_4(%arg0: i32) -> (i32, i32) {
    %c0_i32 = arith.constant 0 : i32
    %c0_i32_0 = arith.constant 0 : i32
    %c0_i32_1 = arith.constant 0 : i32
    return %c0_i32, %c0_i32_0 : i32, i32
  }
  func.func @transform_5(%arg0: i32) -> (i32, i32) {
    %c0_i32 = arith.constant 0 : i32
    %c0_i32_0 = arith.constant 0 : i32
    %c0_i32_1 = arith.constant 0 : i32
    return %c0_i32, %c0_i32_0 : i32, i32
  }
  func.func @transform_6(%arg0: i32) -> (i32, i32) {
    %c0_i32 = arith.constant 0 : i32
    %c0_i32_0 = arith.constant 0 : i32
    return %arg0, %c0_i32 : i32, i32
  }
}

module attributes {stable_mosaic.version = 11 : i64} {
  func.func @up_block_kernel(%arg0: i32, %arg1: memref<16x128xf32, #tpu.memory_space<vmem>>, %arg2: memref<384x128xf32, #tpu.memory_space<vmem>>, %arg3: memref<384x128xf32, #tpu.memory_space<vmem>>, %arg4: memref<10x128xf32, #tpu.memory_space<vmem>>, %arg5: memref<10x128xf32, #tpu.memory_space<vmem>>, %arg6: memref<128x8xf32, #tpu.memory_space<vmem>>, %arg7: memref<16x128xf32, #tpu.memory_space<vmem>>, %arg8: memref<18x128xf32, #tpu.memory_space<vmem>>, %arg9: memref<18x128xf32, #tpu.memory_space<vmem>>) attributes {dimension_semantics = [#tpu.dimension_semantics<parallel>], iteration_bounds = array<i64: 2>, scalar_prefetch = 0 : i64, scratch_operands = 2 : i64, tpu.core_type = #tpu.core_type<tc>, window_params = [{transform_indices = @transform_0, window_bounds = array<i64: 16, 128>}, {pipeline_mode = #tpu.pipeline_mode<synchronous>, transform_indices = @transform_1, window_bounds = array<i64: 384, 128>}, {pipeline_mode = #tpu.pipeline_mode<synchronous>, transform_indices = @transform_2, window_bounds = array<i64: 384, 128>}, {pipeline_mode = #tpu.pipeline_mode<synchronous>, transform_indices = @transform_3, window_bounds = array<i64: 10, 128>}, {pipeline_mode = #tpu.pipeline_mode<synchronous>, transform_indices = @transform_4, window_bounds = array<i64: 10, 128>}, {pipeline_mode = #tpu.pipeline_mode<synchronous>, transform_indices = @transform_5, window_bounds = array<i64: 128, 8>}, {transform_indices = @transform_6, window_bounds = array<i64: 16, 128>}]} {
    %cst = arith.constant 0.000000e+00 : f32
    %0 = vector.broadcast %cst : f32 to vector<1x128xf32>
    %c0 = arith.constant 0 : index
    %c0_0 = arith.constant 0 : index
    %1 = vector.load %arg8[%c0, %c0_0] : memref<18x128xf32, #tpu.memory_space<vmem>>, vector<1x128xf32>
    tpu.vector_store %arg8[%c0, %c0_0], %0 {strides = array<i32>} : memref<18x128xf32, #tpu.memory_space<vmem>>, vector<1x128xf32>,
    %c17 = arith.constant 17 : index
    %c0_1 = arith.constant 0 : index
    %2 = vector.load %arg8[%c17, %c0_1] : memref<18x128xf32, #tpu.memory_space<vmem>>, vector<1x128xf32>
    tpu.vector_store %arg8[%c17, %c0_1], %0 {strides = array<i32>} : memref<18x128xf32, #tpu.memory_space<vmem>>, vector<1x128xf32>,
    %c0_2 = arith.constant 0 : index
    %c0_3 = arith.constant 0 : index
    %3 = vector.load %arg1[%c0_2, %c0_3] : memref<16x128xf32, #tpu.memory_space<vmem>>, vector<16x128xf32>
    %c1 = arith.constant 1 : index
    %c0_4 = arith.constant 0 : index
    %4 = vector.load %arg8[%c1, %c0_4] : memref<18x128xf32, #tpu.memory_space<vmem>>, vector<16x128xf32>
    tpu.vector_store %arg8[%c1, %c0_4], %3 {strides = array<i32>} : memref<18x128xf32, #tpu.memory_space<vmem>>, vector<16x128xf32>,
    %c0_5 = arith.constant 0 : index
    %c0_6 = arith.constant 0 : index
    %5 = vector.load %arg8[%c0_5, %c0_6] : memref<18x128xf32, #tpu.memory_space<vmem>>, vector<16x128xf32>
    %c1_7 = arith.constant 1 : index
    %c0_8 = arith.constant 0 : index
    %6 = vector.load %arg8[%c1_7, %c0_8] : memref<18x128xf32, #tpu.memory_space<vmem>>, vector<16x128xf32>
    %c2 = arith.constant 2 : index
    %c0_9 = arith.constant 0 : index
    %7 = vector.load %arg8[%c2, %c0_9] : memref<18x128xf32, #tpu.memory_space<vmem>>, vector<16x128xf32>
    %8 = tpu.concatenate %5, %6, %7 in 1 : vector<16x128xf32>, vector<16x128xf32>, vector<16x128xf32> -> vector<16x384xf32>
    %c0_10 = arith.constant 0 : index
    %c0_11 = arith.constant 0 : index
    %9 = vector.load %arg2[%c0_10, %c0_11] : memref<384x128xf32, #tpu.memory_space<vmem>>, vector<384x128xf32>
    %cst_12 = arith.constant dense<0.000000e+00> : vector<16x128xf32>
    %10 = tpu.matmul %8, %9, %cst_12 {dimension_numbers = #tpu.dot_dimension_numbers<[1], [0], [0], [1], [0, 0, 1, 1], [], []>} : vector<16x384xf32>, vector<384x128xf32>, vector<16x128xf32> -> vector<16x128xf32>
    %c8 = arith.constant 8 : index
    %c0_13 = arith.constant 0 : index
    %11 = vector.load %arg4[%c8, %c0_13] : memref<10x128xf32, #tpu.memory_space<vmem>>, vector<1x128xf32>
    %c9 = arith.constant 9 : index
    %c0_14 = arith.constant 0 : index
    %12 = vector.load %arg4[%c9, %c0_14] : memref<10x128xf32, #tpu.memory_space<vmem>>, vector<1x128xf32>
    %cst_15 = arith.constant dense<0.000000e+00> : vector<128xf32>
    %13 = vector.multi_reduction <add>, %10, %cst_15 [0] : vector<16x128xf32> to vector<128xf32>
    %14 = vector.shape_cast %13 : vector<128xf32> to vector<1x128xf32>
    %15 = arith.mulf %10, %10 : vector<16x128xf32>
    %cst_16 = arith.constant dense<0.000000e+00> : vector<128xf32>
    %16 = vector.multi_reduction <add>, %15, %cst_16 [0] : vector<16x128xf32> to vector<128xf32>
    %17 = vector.shape_cast %16 : vector<128xf32> to vector<1x128xf32>
    %cst_17 = arith.constant 1.600000e+01 : f32
    %18 = vector.broadcast %cst_17 : f32 to vector<1x128xf32>
    %19 = arith.mulf %18, %11 : vector<1x128xf32>
    %20 = arith.addf %14, %19 : vector<1x128xf32>
    %cst_18 = arith.constant 2.000000e+00 : f32
    %21 = vector.broadcast %cst_18 : f32 to vector<1x128xf32>
    %22 = arith.mulf %21, %11 : vector<1x128xf32>
    %23 = arith.mulf %22, %14 : vector<1x128xf32>
    %24 = arith.addf %17, %23 : vector<1x128xf32>
    %25 = arith.mulf %11, %11 : vector<1x128xf32>
    %cst_19 = arith.constant 1.600000e+01 : f32
    %26 = vector.broadcast %cst_19 : f32 to vector<1x128xf32>
    %27 = arith.mulf %26, %25 : vector<1x128xf32>
    %28 = arith.addf %24, %27 : vector<1x128xf32>
    %29 = tpu.concatenate %20, %28 in 0 : vector<1x128xf32>, vector<1x128xf32> -> vector<2x128xf32>
    %c0_20 = arith.constant 0 : index
    %c0_21 = arith.constant 0 : index
    %30 = vector.load %arg6[%c0_20, %c0_21] : memref<128x8xf32, #tpu.memory_space<vmem>>, vector<128x8xf32>
    %cst_22 = arith.constant dense<0.000000e+00> : vector<2x8xf32>
    %31 = tpu.matmul %29, %30, %cst_22 {dimension_numbers = #tpu.dot_dimension_numbers<[1], [0], [0], [1], [0, 0, 1, 1], [], []>} : vector<2x128xf32>, vector<128x8xf32>, vector<2x8xf32> -> vector<2x8xf32>
    %32 = vector.extract_strided_slice %31 {offsets = [0, 0], sizes = [1, 8], strides = [1, 1]} : vector<2x8xf32> to vector<1x8xf32>
    %33 = vector.extract_strided_slice %31 {offsets = [1, 0], sizes = [1, 8], strides = [1, 1]} : vector<2x8xf32> to vector<1x8xf32>
    %cst_23 = arith.constant 3.906250e-03 : f32
    %34 = vector.broadcast %cst_23 : f32 to vector<1x8xf32>
    %35 = arith.mulf %32, %34 : vector<1x8xf32>
    %cst_24 = arith.constant 3.906250e-03 : f32
    %36 = vector.broadcast %cst_24 : f32 to vector<1x8xf32>
    %37 = arith.mulf %33, %36 : vector<1x8xf32>
    %38 = arith.mulf %35, %35 : vector<1x8xf32>
    %39 = arith.subf %37, %38 : vector<1x8xf32>
    %cst_25 = arith.constant 0.000000e+00 : f32
    %40 = vector.broadcast %cst_25 : f32 to vector<1x8xf32>
    %41 = arith.maximumf %39, %40 : vector<1x8xf32>
    %cst_26 = arith.constant 9.99999974E-6 : f32
    %42 = vector.broadcast %cst_26 : f32 to vector<1x8xf32>
    %43 = arith.addf %41, %42 : vector<1x8xf32>
    %44 = math.rsqrt %43 : vector<1x8xf32>
    %45 = arith.mulf %35, %44 : vector<1x8xf32>
    %46 = tpu.concatenate %44, %45 in 0 : vector<1x8xf32>, vector<1x8xf32> -> vector<2x8xf32>
    %c0_27 = arith.constant 0 : index
    %c0_28 = arith.constant 0 : index
    %47 = vector.load %arg4[%c0_27, %c0_28] : memref<10x128xf32, #tpu.memory_space<vmem>>, vector<8x128xf32>
    %cst_29 = arith.constant dense<0.000000e+00> : vector<2x128xf32>
    %48 = tpu.matmul %46, %47, %cst_29 {dimension_numbers = #tpu.dot_dimension_numbers<[1], [0], [0], [1], [0, 0, 1, 1], [], []>} : vector<2x8xf32>, vector<8x128xf32>, vector<2x128xf32> -> vector<2x128xf32>
    %49 = vector.extract_strided_slice %48 {offsets = [0, 0], sizes = [1, 128], strides = [1, 1]} : vector<2x128xf32> to vector<1x128xf32>
    %50 = vector.extract_strided_slice %48 {offsets = [1, 0], sizes = [1, 128], strides = [1, 1]} : vector<2x128xf32> to vector<1x128xf32>
    %51 = arith.mulf %11, %49 : vector<1x128xf32>
    %52 = arith.addf %12, %51 : vector<1x128xf32>
    %53 = arith.subf %52, %50 : vector<1x128xf32>
    %54 = vector.broadcast %49 : vector<1x128xf32> to vector<16x128xf32>
    %55 = arith.mulf %10, %54 : vector<16x128xf32>
    %56 = vector.broadcast %53 : vector<1x128xf32> to vector<16x128xf32>
    %57 = arith.addf %55, %56 : vector<16x128xf32>
    %cst_30 = arith.constant 0.000000e+00 : f32
    %58 = vector.broadcast %cst_30 : f32 to vector<16x128xf32>
    %59 = arith.maximumf %57, %58 : vector<16x128xf32>
    %cst_31 = arith.constant 0.000000e+00 : f32
    %60 = vector.broadcast %cst_31 : f32 to vector<1x128xf32>
    %c0_32 = arith.constant 0 : index
    %c0_33 = arith.constant 0 : index
    %61 = vector.load %arg9[%c0_32, %c0_33] : memref<18x128xf32, #tpu.memory_space<vmem>>, vector<1x128xf32>
    tpu.vector_store %arg9[%c0_32, %c0_33], %60 {strides = array<i32>} : memref<18x128xf32, #tpu.memory_space<vmem>>, vector<1x128xf32>,
    %c17_34 = arith.constant 17 : index
    %c0_35 = arith.constant 0 : index
    %62 = vector.load %arg9[%c17_34, %c0_35] : memref<18x128xf32, #tpu.memory_space<vmem>>, vector<1x128xf32>
    tpu.vector_store %arg9[%c17_34, %c0_35], %60 {strides = array<i32>} : memref<18x128xf32, #tpu.memory_space<vmem>>, vector<1x128xf32>,
    %c1_36 = arith.constant 1 : index
    %c0_37 = arith.constant 0 : index
    %63 = vector.load %arg9[%c1_36, %c0_37] : memref<18x128xf32, #tpu.memory_space<vmem>>, vector<16x128xf32>
    tpu.vector_store %arg9[%c1_36, %c0_37], %59 {strides = array<i32>} : memref<18x128xf32, #tpu.memory_space<vmem>>, vector<16x128xf32>,
    %c0_38 = arith.constant 0 : index
    %c0_39 = arith.constant 0 : index
    %64 = vector.load %arg9[%c0_38, %c0_39] : memref<18x128xf32, #tpu.memory_space<vmem>>, vector<16x128xf32>
    %c1_40 = arith.constant 1 : index
    %c0_41 = arith.constant 0 : index
    %65 = vector.load %arg9[%c1_40, %c0_41] : memref<18x128xf32, #tpu.memory_space<vmem>>, vector<16x128xf32>
    %c2_42 = arith.constant 2 : index
    %c0_43 = arith.constant 0 : index
    %66 = vector.load %arg9[%c2_42, %c0_43] : memref<18x128xf32, #tpu.memory_space<vmem>>, vector<16x128xf32>
    %67 = tpu.concatenate %64, %65, %66 in 1 : vector<16x128xf32>, vector<16x128xf32>, vector<16x128xf32> -> vector<16x384xf32>
    %c0_44 = arith.constant 0 : index
    %c0_45 = arith.constant 0 : index
    %68 = vector.load %arg3[%c0_44, %c0_45] : memref<384x128xf32, #tpu.memory_space<vmem>>, vector<384x128xf32>
    %cst_46 = arith.constant dense<0.000000e+00> : vector<16x128xf32>
    %69 = tpu.matmul %67, %68, %cst_46 {dimension_numbers = #tpu.dot_dimension_numbers<[1], [0], [0], [1], [0, 0, 1, 1], [], []>} : vector<16x384xf32>, vector<384x128xf32>, vector<16x128xf32> -> vector<16x128xf32>
    %c8_47 = arith.constant 8 : index
    %c0_48 = arith.constant 0 : index
    %70 = vector.load %arg5[%c8_47, %c0_48] : memref<10x128xf32, #tpu.memory_space<vmem>>, vector<1x128xf32>
    %c9_49 = arith.constant 9 : index
    %c0_50 = arith.constant 0 : index
    %71 = vector.load %arg5[%c9_49, %c0_50] : memref<10x128xf32, #tpu.memory_space<vmem>>, vector<1x128xf32>
    %cst_51 = arith.constant dense<0.000000e+00> : vector<128xf32>
    %72 = vector.multi_reduction <add>, %69, %cst_51 [0] : vector<16x128xf32> to vector<128xf32>
    %73 = vector.shape_cast %72 : vector<128xf32> to vector<1x128xf32>
    %74 = arith.mulf %69, %69 : vector<16x128xf32>
    %cst_52 = arith.constant dense<0.000000e+00> : vector<128xf32>
    %75 = vector.multi_reduction <add>, %74, %cst_52 [0] : vector<16x128xf32> to vector<128xf32>
    %76 = vector.shape_cast %75 : vector<128xf32> to vector<1x128xf32>
    %cst_53 = arith.constant 1.600000e+01 : f32
    %77 = vector.broadcast %cst_53 : f32 to vector<1x128xf32>
    %78 = arith.mulf %77, %70 : vector<1x128xf32>
    %79 = arith.addf %73, %78 : vector<1x128xf32>
    %cst_54 = arith.constant 2.000000e+00 : f32
    %80 = vector.broadcast %cst_54 : f32 to vector<1x128xf32>
    %81 = arith.mulf %80, %70 : vector<1x128xf32>
    %82 = arith.mulf %81, %73 : vector<1x128xf32>
    %83 = arith.addf %76, %82 : vector<1x128xf32>
    %84 = arith.mulf %70, %70 : vector<1x128xf32>
    %cst_55 = arith.constant 1.600000e+01 : f32
    %85 = vector.broadcast %cst_55 : f32 to vector<1x128xf32>
    %86 = arith.mulf %85, %84 : vector<1x128xf32>
    %87 = arith.addf %83, %86 : vector<1x128xf32>
    %88 = tpu.concatenate %79, %87 in 0 : vector<1x128xf32>, vector<1x128xf32> -> vector<2x128xf32>
    %c0_56 = arith.constant 0 : index
    %c0_57 = arith.constant 0 : index
    %89 = vector.load %arg6[%c0_56, %c0_57] : memref<128x8xf32, #tpu.memory_space<vmem>>, vector<128x8xf32>
    %cst_58 = arith.constant dense<0.000000e+00> : vector<2x8xf32>
    %90 = tpu.matmul %88, %89, %cst_58 {dimension_numbers = #tpu.dot_dimension_numbers<[1], [0], [0], [1], [0, 0, 1, 1], [], []>} : vector<2x128xf32>, vector<128x8xf32>, vector<2x8xf32> -> vector<2x8xf32>
    %91 = vector.extract_strided_slice %90 {offsets = [0, 0], sizes = [1, 8], strides = [1, 1]} : vector<2x8xf32> to vector<1x8xf32>
    %92 = vector.extract_strided_slice %90 {offsets = [1, 0], sizes = [1, 8], strides = [1, 1]} : vector<2x8xf32> to vector<1x8xf32>
    %cst_59 = arith.constant 3.906250e-03 : f32
    %93 = vector.broadcast %cst_59 : f32 to vector<1x8xf32>
    %94 = arith.mulf %91, %93 : vector<1x8xf32>
    %cst_60 = arith.constant 3.906250e-03 : f32
    %95 = vector.broadcast %cst_60 : f32 to vector<1x8xf32>
    %96 = arith.mulf %92, %95 : vector<1x8xf32>
    %97 = arith.mulf %94, %94 : vector<1x8xf32>
    %98 = arith.subf %96, %97 : vector<1x8xf32>
    %cst_61 = arith.constant 0.000000e+00 : f32
    %99 = vector.broadcast %cst_61 : f32 to vector<1x8xf32>
    %100 = arith.maximumf %98, %99 : vector<1x8xf32>
    %cst_62 = arith.constant 9.99999974E-6 : f32
    %101 = vector.broadcast %cst_62 : f32 to vector<1x8xf32>
    %102 = arith.addf %100, %101 : vector<1x8xf32>
    %103 = math.rsqrt %102 : vector<1x8xf32>
    %104 = arith.mulf %94, %103 : vector<1x8xf32>
    %105 = tpu.concatenate %103, %104 in 0 : vector<1x8xf32>, vector<1x8xf32> -> vector<2x8xf32>
    %c0_63 = arith.constant 0 : index
    %c0_64 = arith.constant 0 : index
    %106 = vector.load %arg5[%c0_63, %c0_64] : memref<10x128xf32, #tpu.memory_space<vmem>>, vector<8x128xf32>
    %cst_65 = arith.constant dense<0.000000e+00> : vector<2x128xf32>
    %107 = tpu.matmul %105, %106, %cst_65 {dimension_numbers = #tpu.dot_dimension_numbers<[1], [0], [0], [1], [0, 0, 1, 1], [], []>} : vector<2x8xf32>, vector<8x128xf32>, vector<2x128xf32> -> vector<2x128xf32>
    %108 = vector.extract_strided_slice %107 {offsets = [0, 0], sizes = [1, 128], strides = [1, 1]} : vector<2x128xf32> to vector<1x128xf32>
    %109 = vector.extract_strided_slice %107 {offsets = [1, 0], sizes = [1, 128], strides = [1, 1]} : vector<2x128xf32> to vector<1x128xf32>
    %110 = arith.mulf %70, %108 : vector<1x128xf32>
    %111 = arith.addf %71, %110 : vector<1x128xf32>
    %112 = arith.subf %111, %109 : vector<1x128xf32>
    %113 = vector.broadcast %108 : vector<1x128xf32> to vector<16x128xf32>
    %114 = arith.mulf %69, %113 : vector<16x128xf32>
    %115 = vector.broadcast %112 : vector<1x128xf32> to vector<16x128xf32>
    %116 = arith.addf %114, %115 : vector<16x128xf32>
    %cst_66 = arith.constant 0.000000e+00 : f32
    %117 = vector.broadcast %cst_66 : f32 to vector<16x128xf32>
    %118 = arith.maximumf %116, %117 : vector<16x128xf32>
    %c0_67 = arith.constant 0 : index
    %c0_68 = arith.constant 0 : index
    %119 = vector.load %arg7[%c0_67, %c0_68] : memref<16x128xf32, #tpu.memory_space<vmem>>, vector<16x128xf32>
    tpu.vector_store %arg7[%c0_67, %c0_68], %118 {strides = array<i32>} : memref<16x128xf32, #tpu.memory_space<vmem>>, vector<16x128xf32>,
    return
  }
  func.func @transform_0(%arg0: i32) -> (i32, i32) {
    %c0_i32 = arith.constant 0 : i32
    %c0_i32_0 = arith.constant 0 : i32
    return %arg0, %c0_i32 : i32, i32
  }
  func.func @transform_1(%arg0: i32) -> (i32, i32) {
    %c0_i32 = arith.constant 0 : i32
    %c0_i32_0 = arith.constant 0 : i32
    %c0_i32_1 = arith.constant 0 : i32
    return %c0_i32, %c0_i32_0 : i32, i32
  }
  func.func @transform_2(%arg0: i32) -> (i32, i32) {
    %c0_i32 = arith.constant 0 : i32
    %c0_i32_0 = arith.constant 0 : i32
    %c0_i32_1 = arith.constant 0 : i32
    return %c0_i32, %c0_i32_0 : i32, i32
  }
  func.func @transform_3(%arg0: i32) -> (i32, i32) {
    %c0_i32 = arith.constant 0 : i32
    %c0_i32_0 = arith.constant 0 : i32
    %c0_i32_1 = arith.constant 0 : i32
    return %c0_i32, %c0_i32_0 : i32, i32
  }
  func.func @transform_4(%arg0: i32) -> (i32, i32) {
    %c0_i32 = arith.constant 0 : i32
    %c0_i32_0 = arith.constant 0 : i32
    %c0_i32_1 = arith.constant 0 : i32
    return %c0_i32, %c0_i32_0 : i32, i32
  }
  func.func @transform_5(%arg0: i32) -> (i32, i32) {
    %c0_i32 = arith.constant 0 : i32
    %c0_i32_0 = arith.constant 0 : i32
    %c0_i32_1 = arith.constant 0 : i32
    return %c0_i32, %c0_i32_0 : i32, i32
  }
  func.func @transform_6(%arg0: i32) -> (i32, i32) {
    %c0_i32 = arith.constant 0 : i32
    %c0_i32_0 = arith.constant 0 : i32
    return %arg0, %c0_i32 : i32, i32
  }
}

</mosaic_0001>

<llo_original>
// kernel: tpu_custom_call.1
$region0: #{tpu_custom_call.1}
  #allocation0 [shape = 'u32[]', space=smem, size = 0x4, offset = 0x4, fixed_abs, tag = 'smem constant byte address 0x4 - core index']
  #allocation1 [shape = 'u32[144,128]{1,0:T(1,128)}', space=vmem, size = 0x12000, scoped, tag = 'internal scratch']
  #allocation2 [shape = 'f32[18,128]{1,0:T(8,128)}', space=vmem, size = 0x3000, scoped, tag = 'scratch operand']
  #allocation3 [shape = 'f32[18,128]{1,0:T(8,128)}', space=vmem, size = 0x3000, scoped, tag = 'scratch operand']
  %s0 = inlined_call_operand.vmem [shape: f32[32,128], index: 0, kind: input, shape index: {}]
  %s1 = inlined_call_operand.hbm [shape: f32[384,128], index: 1, kind: input, shape index: {}]
  %s2 = inlined_call_operand.hbm [shape: f32[384,128], index: 2, kind: input, shape index: {}]
  %s3 = inlined_call_operand.vmem [shape: f32[10,128], index: 3, kind: input, shape index: {}]
  %s4 = inlined_call_operand.vmem [shape: f32[10,128], index: 4, kind: input, shape index: {}]
  %s5 = inlined_call_operand.vmem [shape: f32[128,8], index: 5, kind: input, shape index: {}]
  %s6 = inlined_call_operand.hbm [shape: f32[32,128], index: 6, kind: output, shape index: {}]
  %s7 = sld [smem:[#allocation0]]
  $region65: #{tpu_custom_call.1} parent=0
    _
  %s9 = ssub.s32 1, %s7
  %s10 = scalar_select 0, %s9, %s7
  $region1: #{tpu_custom_call.1} parent=0
    #allocation4 [shape = 'u8[196608]{0}', space=vmem, size = 0x30000, scoped, tag = 'input window, operand 1, single buffered']
    #allocation5 [shape = 's32[2]{0}', space=sflag, size = 0x8, scoped, tag = 'scoped memory for tpu_custom_call.1']
    #allocation6 [shape = 's32[2]{0}', space=sflag, size = 0x8, scoped, tag = 'scoped memory for tpu_custom_call.1']
    #allocation7 [shape = 'u8[196608]{0}', space=vmem, size = 0x30000, scoped, tag = 'input window, operand 2, single buffered']
    #allocation8 [shape = 's32[1]{0}', space=sflag, size = 0x4, scoped, tag = 'scoped memory for tpu_custom_call.1']
    #allocation9 [shape = 'u8[16384]{0}', space=vmem, size = 0x4000, scoped, tag = 'output window, operand 0']
    %11 = vsyncpa [#allocation5], 0
    %12 = vsyncpa [#allocation8], 0
    %13 = vsyncpa [#allocation6], 0
    %s14 = scalar_lea.sflag [#allocation6], 1
    %15 = vsyncpa %s14, 0
    loop: start=0, step=1, limit=4
    $region2: #{tpu_custom_call.1} parent=1 // loop_pre_header
      _
    $region3: #{tpu_custom_call.1} parent=1 // loop_header
      %s17 = sphi 0, %s21
      %p18 = scmp.ge.s32.totalorder %s17, 4
      %s27 = sphi 0, %s29
      %s30 = sphi 0, %s27
      %s31 = sphi 0, %s30
      %s47 = sphi 0, %s31
      %s51 = sphi 0, %s51
      %s53 = sphi 0, %s51
      %s54 = sphi 0, %s53
      %s68 = sphi 0, %s54
      %s72 = sphi 0, %s72
      %s74 = sphi 0, %s72
      %s75 = sphi 0, %s74
      %s89 = sphi 0, %s75
      %s93 = sphi 0, %s93
      %s95 = sphi 0, %s93
      %s96 = sphi 0, %s95
      %s110 = sphi 0, %s96
      %s114 = sphi 0, %s114
      %s116 = sphi 0, %s114
      %s117 = sphi 0, %s116
      %s131 = sphi 0, %s117
      %s135 = sphi 0, %s135
      %s137 = sphi 0, %s135
      %s138 = sphi 0, %s137
      %s152 = sphi 0, %s138
      %s158 = sphi 0, %s160
      %s161 = sphi 0, %s158
      %s162 = sphi 0, %s161
      %s178 = sphi 0, %s162
    $region4: #{tpu_custom_call.1} parent=1 // loop_header_branch
      %20 = sbr.rel (%p18) target = $region8
    $region5: #{tpu_custom_call.1} parent=1 // loop_body
      %s22 = ssub.s32 %s17, 1
      %s23 = ssub.s32 %s17, 2
      %s24 = sadd.s32 %s17, 1
      %s25 = ssub.s32 %s17, %s24
      %p26 = scmp.eq.s32.totalorder %s25, 0
      %s28 = sadd.s32 %s27, 1
      %s29 = scalar_select %p26, %s27, %s28
      %p32 = pneg %p26
      %p33 = scmp.eq.s32.totalorder %s17, 1
      %p34 = por %p32, %p33
      %p35 = scmp.ne.s32.totalorder %s27, %s30
      %p36 = scmp.eq.s32.totalorder %s17, 0
      %p37 = por %p35, %p36
      %p38 = scmp.ne.s32.totalorder %s27, %s30
      %p39 = scmp.eq.s32.totalorder %s22, 1
      %p40 = por %p38, %p39
      %p41 = scmp.ne.s32.totalorder %s30, %s31
      %p42 = scmp.eq.s32.totalorder %s22, 0
      %p43 = por %p41, %p42
      %p44 = scmp.ne.s32.totalorder %s30, %s31
      %p45 = scmp.eq.s32.totalorder %s23, 1
      %p46 = por %p44, %p45
      %p48 = scmp.ne.s32.totalorder %s31, %s47
      %p49 = scmp.eq.s32.totalorder %s23, 0
      %p50 = por %p48, %p49
      %s52 = sadd.s32 %s51, 1
      %p55 = scmp.eq.s32.totalorder %s17, 1
      %p56 = scmp.ne.s32.totalorder %s51, %s53
      %p57 = scmp.eq.s32.totalorder %s17, 0
      %p58 = por %p56, %p57
      %p59 = scmp.ne.s32.totalorder %s51, %s53
      %p60 = scmp.eq.s32.totalorder %s22, 1
      %p61 = por %p59, %p60
      %p62 = scmp.ne.s32.totalorder %s53, %s54
      %p63 = scmp.eq.s32.totalorder %s22, 0
      %p64 = por %p62, %p63
      %p65 = scmp.ne.s32.totalorder %s53, %s54
      %p66 = scmp.eq.s32.totalorder %s23, 1
      %p67 = por %p65, %p66
      %p69 = scmp.ne.s32.totalorder %s54, %s68
      %p70 = scmp.eq.s32.totalorder %s23, 0
      %p71 = por %p69, %p70
      %s73 = sadd.s32 %s72, 1
      %p76 = scmp.eq.s32.totalorder %s17, 1
      %p77 = scmp.ne.s32.totalorder %s72, %s74
      %p78 = scmp.eq.s32.totalorder %s17, 0
      %p79 = por %p77, %p78
      %p80 = scmp.ne.s32.totalorder %s72, %s74
      %p81 = scmp.eq.s32.totalorder %s22, 1
      %p82 = por %p80, %p81
      %p83 = scmp.ne.s32.totalorder %s74, %s75
      %p84 = scmp.eq.s32.totalorder %s22, 0
      %p85 = por %p83, %p84
      %p86 = scmp.ne.s32.totalorder %s74, %s75
      %p87 = scmp.eq.s32.totalorder %s23, 1
      %p88 = por %p86, %p87
      %p90 = scmp.ne.s32.totalorder %s75, %s89
      %p91 = scmp.eq.s32.totalorder %s23, 0
      %p92 = por %p90, %p91
      %s94 = sadd.s32 %s93, 1
      %p97 = scmp.eq.s32.totalorder %s17, 1
      %p98 = scmp.ne.s32.totalorder %s93, %s95
      %p99 = scmp.eq.s32.totalorder %s17, 0
      %p100 = por %p98, %p99
      %p101 = scmp.ne.s32.totalorder %s93, %s95
      %p102 = scmp.eq.s32.totalorder %s22, 1
      %p103 = por %p101, %p102
      %p104 = scmp.ne.s32.totalorder %s95, %s96
      %p105 = scmp.eq.s32.totalorder %s22, 0
      %p106 = por %p104, %p105
      %p107 = scmp.ne.s32.totalorder %s95, %s96
      %p108 = scmp.eq.s32.totalorder %s23, 1
      %p109 = por %p107, %p108
      %p111 = scmp.ne.s32.totalorder %s96, %s110
      %p112 = scmp.eq.s32.totalorder %s23, 0
      %p113 = por %p111, %p112
      %s115 = sadd.s32 %s114, 1
      %p118 = scmp.eq.s32.totalorder %s17, 1
      %p119 = scmp.ne.s32.totalorder %s114, %s116
      %p120 = scmp.eq.s32.totalorder %s17, 0
      %p121 = por %p119, %p120
      %p122 = scmp.ne.s32.totalorder %s114, %s116
      %p123 = scmp.eq.s32.totalorder %s22, 1
      %p124 = por %p122, %p123
      %p125 = scmp.ne.s32.totalorder %s116, %s117
      %p126 = scmp.eq.s32.totalorder %s22, 0
      %p127 = por %p125, %p126
      %p128 = scmp.ne.s32.totalorder %s116, %s117
      %p129 = scmp.eq.s32.totalorder %s23, 1
      %p130 = por %p128, %p129
      %p132 = scmp.ne.s32.totalorder %s117, %s131
      %p133 = scmp.eq.s32.totalorder %s23, 0
      %p134 = por %p132, %p133
      %s136 = sadd.s32 %s135, 1
      %p139 = scmp.eq.s32.totalorder %s17, 1
      %p140 = scmp.ne.s32.totalorder %s135, %s137
      %p141 = scmp.eq.s32.totalorder %s17, 0
      %p142 = por %p140, %p141
      %p143 = scmp.ne.s32.totalorder %s135, %s137
      %p144 = scmp.eq.s32.totalorder %s22, 1
      %p145 = por %p143, %p144
      %p146 = scmp.ne.s32.totalorder %s137, %s138
      %p147 = scmp.eq.s32.totalorder %s22, 0
      %p148 = por %p146, %p147
      %p149 = scmp.ne.s32.totalorder %s137, %s138
      %p150 = scmp.eq.s32.totalorder %s23, 1
      %p151 = por %p149, %p150
      %p153 = scmp.ne.s32.totalorder %s138, %s152
      %p154 = scmp.eq.s32.totalorder %s23, 0
      %p155 = por %p153, %p154
      %s156 = ssub.s32 %s17, %s24
      %p157 = scmp.eq.s32.totalorder %s156, 0
      %s159 = sadd.s32 %s158, 1
      %s160 = scalar_select %p157, %s158, %s159
      %p163 = pneg %p157
      %p164 = scmp.eq.s32.totalorder %s17, 1
      %p165 = por %p163, %p164
      %p166 = scmp.ne.s32.totalorder %s158, %s161
      %p167 = scmp.eq.s32.totalorder %s17, 0
      %p168 = por %p166, %p167
      %p169 = scmp.ne.s32.totalorder %s158, %s161
      %p170 = scmp.eq.s32.totalorder %s22, 1
      %p171 = por %p169, %p170
      %p172 = scmp.ne.s32.totalorder %s161, %s162
      %p173 = scmp.eq.s32.totalorder %s22, 0
      %p174 = por %p172, %p173
      %p175 = scmp.ne.s32.totalorder %s161, %s162
      %p176 = scmp.eq.s32.totalorder %s23, 1
      %p177 = por %p175, %p176
      %p179 = scmp.ne.s32.totalorder %s162, %s178
      %p180 = scmp.eq.s32.totalorder %s23, 0
      %p181 = por %p179, %p180
      %p182 = scmp.le.s32.totalorder 1, %s17
      %p183 = scmp.lt.s32.totalorder %s17, 3
      %p184 = pnand %p182, %p183
      %p185 = pneg %p184
      // Predicated region
      $region9: #{tpu_custom_call.1} parent=5 // pred_check
        _
      $region10: #{tpu_custom_call.1} parent=5 // pred_check_branch
        %187 = sbr.rel (%p184) target = $region12
      $region11: #{tpu_custom_call.1} parent=5 // pred_region
        %s188 = ssub.s32 %s17, 1
        // Predicated region
        $region13: #{tpu_custom_call.1} parent=11 // pred_check
          %p189 = pneg %p64
        $region14: #{tpu_custom_call.1} parent=11 // pred_check_branch
          %191 = sbr.rel (%p189) target = $region16
        $region15: #{tpu_custom_call.1} parent=11 // pred_region
          %s193 = ssub.s32 6144, 6144
          %194 = vsyncadd [#allocation5], %s193
          %s195 = sshll.u32 [#allocation4], 4
          %s196 = int_to_ptr.vmem [resolvable:$true] %s195
          %201 = dma.hbm_to_vmem [thread:$0]  %s1, 6144, %s196, [#allocation5], 128, 128, 8
        $region16: #{tpu_custom_call.1} parent=11 // pred_fallthru
          _
        // Predicated region
        $region17: #{tpu_custom_call.1} parent=11 // pred_check
          %p202 = pneg %p85
        $region18: #{tpu_custom_call.1} parent=11 // pred_check_branch
          %204 = sbr.rel (%p202) target = $region20
        $region19: #{tpu_custom_call.1} parent=11 // pred_region
          %s206 = ssub.s32 6144, 6144
          %207 = vsyncadd [#allocation8], %s206
          %s208 = sshll.u32 [#allocation7], 4
          %s209 = int_to_ptr.vmem [resolvable:$true] %s208
          %214 = dma.hbm_to_vmem [thread:$0]  %s2, 6144, %s209, [#allocation8], 128, 128, 8
        $region20: #{tpu_custom_call.1} parent=11 // pred_fallthru
          _
        // Predicated region
        $region21: #{tpu_custom_call.1} parent=11 // pred_check
          %p215 = pneg %p106
        $region22: #{tpu_custom_call.1} parent=11 // pred_check_branch
          %217 = sbr.rel (%p215) target = $region24
        $region23: #{tpu_custom_call.1} parent=11 // pred_region
          _
        $region24: #{tpu_custom_call.1} parent=11 // pred_fallthru
          _
        // Predicated region
        $region25: #{tpu_custom_call.1} parent=11 // pred_check
          %p218 = pneg %p127
        $region26: #{tpu_custom_call.1} parent=11 // pred_check_branch
          %220 = sbr.rel (%p218) target = $region28
        $region27: #{tpu_custom_call.1} parent=11 // pred_region
          _
        $region28: #{tpu_custom_call.1} parent=11 // pred_fallthru
          _
        // Predicated region
        $region29: #{tpu_custom_call.1} parent=11 // pred_check
          %p221 = pneg %p148
        $region30: #{tpu_custom_call.1} parent=11 // pred_check_branch
          %223 = sbr.rel (%p221) target = $region32
        $region31: #{tpu_custom_call.1} parent=11 // pred_region
          _
        $region32: #{tpu_custom_call.1} parent=11 // pred_fallthru
          _
      $region12: #{tpu_custom_call.1} parent=5 // pred_fallthru
        _
      %p224 = scmp.lt.s32.totalorder %s17, 2
      // Predicated region
      $region33: #{tpu_custom_call.1} parent=5 // pred_check
        %p225 = pneg %p224
      $region34: #{tpu_custom_call.1} parent=5 // pred_check_branch
        %227 = sbr.rel (%p225) target = $region36
      $region35: #{tpu_custom_call.1} parent=5 // pred_region
        // Predicated region
        $region37: #{tpu_custom_call.1} parent=35 // pred_check
          %p228 = pneg %p37
        $region38: #{tpu_custom_call.1} parent=35 // pred_check_branch
          %230 = sbr.rel (%p228) target = $region40
        $region39: #{tpu_custom_call.1} parent=35 // pred_region
          %s231 = smul.u32 2, %s17
          %p232 = scmp.lt.s32.totalorder %s231, 3
          %s233 = scalar_select %p232, %s231, 3
          %s234 = smul.addr %s233, 8
          %s235 = scalar_lea.vmem %s0, %s234
          %s236 = smul.u32 2, %s17
        $region40: #{tpu_custom_call.1} parent=35 // pred_fallthru
          _
      $region36: #{tpu_custom_call.1} parent=5 // pred_fallthru
        _
      %p237 = scmp.le.s32.totalorder 1, %s17
      %p238 = scmp.lt.s32.totalorder %s17, 3
      %p239 = pnand %p237, %p238
      %p240 = pneg %p239
      // Predicated region
      $region41: #{tpu_custom_call.1} parent=5 // pred_check
        _
      $region42: #{tpu_custom_call.1} parent=5 // pred_check_branch
        %242 = sbr.rel (%p239) target = $region44
      $region43: #{tpu_custom_call.1} parent=5 // pred_region
        %s243 = ssub.s32 %s17, 1
        // Predicated region
        $region45: #{tpu_custom_call.1} parent=43 // pred_check
          %p244 = pneg %p64
        $region46: #{tpu_custom_call.1} parent=43 // pred_check_branch
          %246 = sbr.rel (%p244) target = $region48
        $region47: #{tpu_custom_call.1} parent=43 // pred_region
          %247 = dma.done [#allocation5], 6144
        $region48: #{tpu_custom_call.1} parent=43 // pred_fallthru
          _
        // Predicated region
        $region49: #{tpu_custom_call.1} parent=43 // pred_check
          %p248 = pneg %p85
        $region50: #{tpu_custom_call.1} parent=43 // pred_check_branch
          %250 = sbr.rel (%p248) target = $region52
        $region51: #{tpu_custom_call.1} parent=43 // pred_region
          %251 = dma.done [#allocation8], 6144
        $region52: #{tpu_custom_call.1} parent=43 // pred_fallthru
          _
        %s252 = smul.u32 2, %s22
        %p253 = scmp.lt.s32.totalorder %s252, 3
        %s254 = scalar_select %p253, %s252, 3
        %s255 = smul.addr %s254, 8
        %s256 = scalar_lea.vmem %s0, %s255
        %p257 = pneg %p43
        %p258 = pneg %p40
        %p259 = pneg %p64
        %p260 = pneg %p61
        %p261 = pneg %p85
        %p262 = pneg %p82
        %p263 = pneg %p106
        %p264 = pneg %p103
        %p265 = pneg %p127
        %p266 = pneg %p124
        %p267 = pneg %p148
        %p268 = pneg %p145
        %p269 = pneg %p174
        %p270 = pneg %p171
        %s271 = sand.u32 %s161, 1
        %s272 = scalar_lea.sflag [#allocation6], %s271
        %s273 = sand.u32 %s161, 1
        %s274 = smul.addr %s273, 16
        %s275 = scalar_lea.vmem [#allocation9], %s274
        %s276 = smul.u32 2, %s22
        %p277 = scmp.lt.s32.totalorder %s276, 3
        %s278 = scalar_select %p277, %s276, 3
        %s279 = smul.addr %s278, 8
        %s280 = scalar_lea.vmem %s0, %s279
        %s281 = smul.u32 2, %s22
        %s282 = smul.u32 2, %s22
        %283 = vst [vmem:[#allocation2] sm:$0x1] 0.0
        %284 = vst [vmem:[#allocation2 + $0x11] sm:$0x1] 0.0
        %v285 = vld [vmem:[%s280] sm:$0xff]
        %v286 = vld [vmem:[%s280 + $0x8] sm:$0xff]
        %287 = vst [vmem:[#allocation2 + $0x1] sm:$0xff] %v285
        %288 = vst [vmem:[#allocation2 + $0x9] sm:$0xff] %v286
        %v289 = vld [vmem:[#allocation2] sm:$0xff]
        %v290 = vld [vmem:[#allocation2 + $0x8] sm:$0xff]
        %v291 = vld [vmem:[#allocation2 + $0x1] sm:$0xff]
        %v292 = vld [vmem:[#allocation2 + $0x9] sm:$0xff]
        %v293 = vld [vmem:[#allocation2 + $0x2] sm:$0xff]
        %v294 = vld [vmem:[#allocation2 + $0xa] sm:$0xff]
        %v295 = vld [vmem:[#allocation4] sm:$0xff]
        %v296 = vld [vmem:[#allocation4 + $0x8] sm:$0xff]
        %v297 = vld [vmem:[#allocation4 + $0x10] sm:$0xff]
        %v298 = vld [vmem:[#allocation4 + $0x18] sm:$0xff]
        %v299 = vld [vmem:[#allocation4 + $0x20] sm:$0xff]
        %v300 = vld [vmem:[#allocation4 + $0x28] sm:$0xff]
        %v301 = vld [vmem:[#allocation4 + $0x30] sm:$0xff]
        %v302 = vld [vmem:[#allocation4 + $0x38] sm:$0xff]
        %v303 = vld [vmem:[#allocation4 + $0x40] sm:$0xff]
        %v304 = vld [vmem:[#allocation4 + $0x48] sm:$0xff]
        %v305 = vld [vmem:[#allocation4 + $0x50] sm:$0xff]
        %v306 = vld [vmem:[#allocation4 + $0x58] sm:$0xff]
        %v307 = vld [vmem:[#allocation4 + $0x60] sm:$0xff]
        %v308 = vld [vmem:[#allocation4 + $0x68] sm:$0xff]
        %v309 = vld [vmem:[#allocation4 + $0x70] sm:$0xff]
        %v310 = vld [vmem:[#allocation4 + $0x78] sm:$0xff]
        %v311 = vld [vmem:[#allocation4 + $0x80] sm:$0xff]
        %v312 = vld [vmem:[#allocation4 + $0x88] sm:$0xff]
        %v313 = vld [vmem:[#allocation4 + $0x90] sm:$0xff]
        %v314 = vld [vmem:[#allocation4 + $0x98] sm:$0xff]
        %v315 = vld [vmem:[#allocation4 + $0xa0] sm:$0xff]
        %v316 = vld [vmem:[#allocation4 + $0xa8] sm:$0xff]
        %v317 = vld [vmem:[#allocation4 + $0xb0] sm:$0xff]
        %v318 = vld [vmem:[#allocation4 + $0xb8] sm:$0xff]
        %v319 = vld [vmem:[#allocation4 + $0xc0] sm:$0xff]
        %v320 = vld [vmem:[#allocation4 + $0xc8] sm:$0xff]
        %v321 = vld [vmem:[#allocation4 + $0xd0] sm:$0xff]
        %v322 = vld [vmem:[#allocation4 + $0xd8] sm:$0xff]
        %v323 = vld [vmem:[#allocation4 + $0xe0] sm:$0xff]
        %v324 = vld [vmem:[#allocation4 + $0xe8] sm:$0xff]
        %v325 = vld [vmem:[#allocation4 + $0xf0] sm:$0xff]
        %v326 = vld [vmem:[#allocation4 + $0xf8] sm:$0xff]
        %v327 = vld [vmem:[#allocation4 + $0x100] sm:$0xff]
        %v328 = vld [vmem:[#allocation4 + $0x108] sm:$0xff]
        %v329 = vld [vmem:[#allocation4 + $0x110] sm:$0xff]
        %v330 = vld [vmem:[#allocation4 + $0x118] sm:$0xff]
        %v331 = vld [vmem:[#allocation4 + $0x120] sm:$0xff]
        %v332 = vld [vmem:[#allocation4 + $0x128] sm:$0xff]
        %v333 = vld [vmem:[#allocation4 + $0x130] sm:$0xff]
        %v334 = vld [vmem:[#allocation4 + $0x138] sm:$0xff]
        %v335 = vld [vmem:[#allocation4 + $0x140] sm:$0xff]
        %v336 = vld [vmem:[#allocation4 + $0x148] sm:$0xff]
        %v337 = vld [vmem:[#allocation4 + $0x150] sm:$0xff]
        %v338 = vld [vmem:[#allocation4 + $0x158] sm:$0xff]
        %v339 = vld [vmem:[#allocation4 + $0x160] sm:$0xff]
        %v340 = vld [vmem:[#allocation4 + $0x168] sm:$0xff]
        %v341 = vld [vmem:[#allocation4 + $0x170] sm:$0xff]
        %v342 = vld [vmem:[#allocation4 + $0x178] sm:$0xff]
        %343 = vmatprep.subr.mxu0 0.0
        %344 = vmatpush1.msra.mxu0 %v295
        %345 = vmatprep.subr.mxu0 0.0
        %346 = vmatpush1.msra.mxu0 %v296
        %347 = vmatprep.subr.mxu0 0.0
        %348 = vmatpush1.msra.mxu0 %v297
        %349 = vmatprep.subr.mxu0 0.0
        %350 = vmatpush1.msra.mxu0 %v298
        %351 = vmatprep.subr.mxu0 0.0
        %352 = vmatpush1.msra.mxu0 %v299
        %353 = vmatprep.subr.mxu0 0.0
        %354 = vmatpush1.msra.mxu0 %v300
        %355 = vmatprep.subr.mxu0 0.0
        %356 = vmatpush1.msra.mxu0 %v301
        %357 = vmatprep.subr.mxu0 0.0
        %358 = vmatpush1.msra.mxu0 %v302
        %359 = vmatprep.subr.mxu0 0.0
        %360 = vmatpush1.msra.mxu0 %v303
        %361 = vmatprep.subr.mxu0 0.0
        %362 = vmatpush1.msra.mxu0 %v304
        %363 = vmatprep.subr.mxu0 0.0
        %364 = vmatpush1.msra.mxu0 %v305
        %365 = vmatprep.subr.mxu0 0.0
        %366 = vmatpush1.msra.mxu0 %v306
        %367 = vmatprep.subr.mxu0 0.0
        %368 = vmatpush1.msra.mxu0 %v307
        %369 = vmatprep.subr.mxu0 0.0
        %370 = vmatpush1.msra.mxu0 %v308
        %371 = vmatprep.subr.mxu0 0.0
        %372 = vmatpush1.msra.mxu0 %v309
        %373 = vmatprep.subr.mxu0 0.0
        %374 = vmatpush1.msra.mxu0 %v310
        %375 = vmatprep.subr.mxu0 0.0
        %376 = vmatpush1.msra.mxu0 %v311
        %377 = vmatprep.subr.mxu0 0.0
        %378 = vmatpush1.msra.mxu0 %v312
        %379 = vmatprep.subr.mxu0 0.0
        %380 = vmatpush1.msra.mxu0 %v313
        %381 = vmatprep.subr.mxu0 0.0
        %382 = vmatpush1.msra.mxu0 %v314
        %383 = vmatprep.subr.mxu0 0.0
        %384 = vmatpush1.msra.mxu0 %v315
        %385 = vmatprep.subr.mxu0 0.0
        %386 = vmatpush1.msra.mxu0 %v316
        %387 = vmatprep.subr.mxu0 0.0
        %388 = vmatpush1.msra.mxu0 %v317
        %389 = vmatprep.subr.mxu0 0.0
        %390 = vmatpush1.msra.mxu0 %v318
        %391 = vmatprep.subr.mxu0 0.0
        %392 = vmatpush1.msra.mxu0 %v319
        %393 = vmatprep.subr.mxu0 0.0
        %394 = vmatpush1.msra.mxu0 %v320
        %395 = vmatprep.subr.mxu0 0.0
        %396 = vmatpush1.msra.mxu0 %v321
        %397 = vmatprep.subr.mxu0 0.0
        %398 = vmatpush1.msra.mxu0 %v322
        %399 = vmatprep.subr.mxu0 0.0
        %400 = vmatpush1.msra.mxu0 %v323
        %401 = vmatprep.subr.mxu0 0.0
        %402 = vmatpush1.msra.mxu0 %v324
        %403 = vmatprep.subr.mxu0 0.0
        %404 = vmatpush1.msra.mxu0 %v325
        %405 = vmatprep.subr.mxu0 0.0
        %406 = vmatpush1.msra.mxu0 %v326
        %407 = vmatprep.mubr.f32.mxu0 %v291
        %408 = vmatmul.mubr.f32.gmra.mrb[0].mxu0 %v289
        %v409 = vpop.f32.mrb[0].mxu0
        %v410 = vadd.f32 0.0, %v409
        %v411 = vpop.f32.mrb[0].mxu0
        %412 = vmatprep.mubr.f32.mxu0 %v292
        %413 = vmatmul.mubr.f32.gmra.mrb[0].mxu0 %v290
        %v414 = vpop.f32.mrb[0].mxu0
        %v415 = vadd.f32 0.0, %v414
        %v416 = vpop.f32.mrb[0].mxu0
        %417 = vdwg.mxu0
        %418 = vmatprep.subr.mxu0 0.0
        %419 = vmatpush1.msra.mxu0 %v327
        %420 = vmatprep.subr.mxu0 0.0
        %421 = vmatpush1.msra.mxu0 %v328
        %422 = vmatprep.subr.mxu0 0.0
        %423 = vmatpush1.msra.mxu0 %v329
        %424 = vmatprep.subr.mxu0 0.0
        %425 = vmatpush1.msra.mxu0 %v330
        %426 = vmatprep.subr.mxu0 0.0
        %427 = vmatpush1.msra.mxu0 %v331
        %428 = vmatprep.subr.mxu0 0.0
        %429 = vmatpush1.msra.mxu0 %v332
        %430 = vmatprep.subr.mxu0 0.0
        %431 = vmatpush1.msra.mxu0 %v333
        %432 = vmatprep.subr.mxu0 0.0
        %433 = vmatpush1.msra.mxu0 %v334
        %434 = vmatprep.subr.mxu0 0.0
        %435 = vmatpush1.msra.mxu0 %v335
        %436 = vmatprep.subr.mxu0 0.0
        %437 = vmatpush1.msra.mxu0 %v336
        %438 = vmatprep.subr.mxu0 0.0
        %439 = vmatpush1.msra.mxu0 %v337
        %440 = vmatprep.subr.mxu0 0.0
        %441 = vmatpush1.msra.mxu0 %v338
        %442 = vmatprep.subr.mxu0 0.0
        %443 = vmatpush1.msra.mxu0 %v339
        %444 = vmatprep.subr.mxu0 0.0
        %445 = vmatpush1.msra.mxu0 %v340
        %446 = vmatprep.subr.mxu0 0.0
        %447 = vmatpush1.msra.mxu0 %v341
        %448 = vmatprep.subr.mxu0 0.0
        %449 = vmatpush1.msra.mxu0 %v342
        %450 = vmatprep.subr.mxu0 0.0
        %451 = vmatpush1.msra.mxu0 0.0
        %452 = vmatprep.subr.mxu0 0.0
        %453 = vmatpush1.msra.mxu0 0.0
        %454 = vmatprep.subr.mxu0 0.0
        %455 = vmatpush1.msra.mxu0 0.0
        %456 = vmatprep.subr.mxu0 0.0
        %457 = vmatpush1.msra.mxu0 0.0
        %458 = vmatprep.subr.mxu0 0.0
        %459 = vmatpush1.msra.mxu0 0.0
        %460 = vmatprep.subr.mxu0 0.0
        %461 = vmatpush1.msra.mxu0 0.0
        %462 = vmatprep.subr.mxu0 0.0
        %463 = vmatpush1.msra.mxu0 0.0
        %464 = vmatprep.subr.mxu0 0.0
        %465 = vmatpush1.msra.mxu0 0.0
        %466 = vmatprep.subr.mxu0 0.0
        %467 = vmatpush1.msra.mxu0 0.0
        %468 = vmatprep.subr.mxu0 0.0
        %469 = vmatpush1.msra.mxu0 0.0
        %470 = vmatprep.subr.mxu0 0.0
        %471 = vmatpush1.msra.mxu0 0.0
        %472 = vmatprep.subr.mxu0 0.0
        %473 = vmatpush1.msra.mxu0 0.0
        %474 = vmatprep.subr.mxu0 0.0
        %475 = vmatpush1.msra.mxu0 0.0
        %476 = vmatprep.subr.mxu0 0.0
        %477 = vmatpush1.msra.mxu0 0.0
        %478 = vmatprep.subr.mxu0 0.0
        %479 = vmatpush1.msra.mxu0 0.0
        %480 = vmatprep.subr.mxu0 0.0
        %481 = vmatpush1.msra.mxu0 0.0
        %482 = vmatprep.mubr.f32.mxu0 0.0
        %483 = vmatmul.mubr.f32.gmra.mrb[0].mxu0 %v293
        %v484 = vpop.f32.mrb[0].mxu0
        %v485 = vadd.f32 %v410, %v484
        %v486 = vpop.f32.mrb[0].mxu0
        %487 = vmatprep.mubr.f32.mxu0 0.0
        %488 = vmatmul.mubr.f32.gmra.mrb[0].mxu0 %v294
        %v489 = vpop.f32.mrb[0].mxu0
        %v490 = vadd.f32 %v415, %v489
        %v491 = vpop.f32.mrb[0].mxu0
        %492 = vdwg.mxu0
        %v493 = vld [vmem:[%s3 + $0x8] sm:$0x1]
        %v494 = vld [vmem:[%s3 + $0x9] sm:$0x1]
        %v495 = vadd.f32 %v485, %v490
        %v496 = vrot.slane %v495, 4
        %v497 = vadd.f32 %v495, %v496
        %v498 = vrot.slane %v497, 2
        %v499 = vadd.f32 %v497, %v498
        %v500 = vrot.slane %v499, 1
        %v501 = vadd.f32 %v499, %v500
        %v502 = vmul.f32 %v485, %v485
        %v503 = vmul.f32 %v490, %v490
        %v504 = vadd.f32 %v502, %v503
        %v505 = vrot.slane %v504, 4
        %v506 = vadd.f32 %v504, %v505
        %v507 = vrot.slane %v506, 2
        %v508 = vadd.f32 %v506, %v507
        %v509 = vrot.slane %v508, 1
        %v510 = vadd.f32 %v508, %v509
        %v511 = vmul.f32 %v493, 16.0
        %v512 = vadd.f32 %v501, %v511
        %v513 = vmul.f32 %v493, 2.0
        %v514 = vmul.f32 %v513, %v501
        %v515 = vadd.f32 %v510, %v514
        %v516 = vmul.f32 %v493, %v493
        %v517 = vmul.f32 %v516, 16.0
        %v518 = vadd.f32 %v515, %v517
        %v520 = vrot.slane %v518, 7
        %vm522 = vcmask 1040384
        %v523 = vsel %vm522, %v512, %v520
        %v524 = vld [vmem:[%s5] sm:$0xff]
        %v525 = vld [vmem:[%s5 + $0x8] sm:$0xff]
        %v526 = vld [vmem:[%s5 + $0x10] sm:$0xff]
        %v527 = vld [vmem:[%s5 + $0x18] sm:$0xff]
        %v528 = vld [vmem:[%s5 + $0x20] sm:$0xff]
        %v529 = vld [vmem:[%s5 + $0x28] sm:$0xff]
        %v530 = vld [vmem:[%s5 + $0x30] sm:$0xff]
        %v531 = vld [vmem:[%s5 + $0x38] sm:$0xff]
        %v532 = vld [vmem:[%s5 + $0x40] sm:$0xff]
        %v533 = vld [vmem:[%s5 + $0x48] sm:$0xff]
        %v534 = vld [vmem:[%s5 + $0x50] sm:$0xff]
        %v535 = vld [vmem:[%s5 + $0x58] sm:$0xff]
        %v536 = vld [vmem:[%s5 + $0x60] sm:$0xff]
        %v537 = vld [vmem:[%s5 + $0x68] sm:$0xff]
        %v538 = vld [vmem:[%s5 + $0x70] sm:$0xff]
        %v539 = vld [vmem:[%s5 + $0x78] sm:$0xff]
        %540 = vmatprep.subr.mxu0 0.0
        %541 = vmatpush1.msra.mxu0 %v524
        %542 = vmatprep.subr.mxu0 0.0
        %543 = vmatpush1.msra.mxu0 %v525
        %544 = vmatprep.subr.mxu0 0.0
        %545 = vmatpush1.msra.mxu0 %v526
        %546 = vmatprep.subr.mxu0 0.0
        %547 = vmatpush1.msra.mxu0 %v527
        %548 = vmatprep.subr.mxu0 0.0
        %549 = vmatpush1.msra.mxu0 %v528
        %550 = vmatprep.subr.mxu0 0.0
        %551 = vmatpush1.msra.mxu0 %v529
        %552 = vmatprep.subr.mxu0 0.0
        %553 = vmatpush1.msra.mxu0 %v530
        %554 = vmatprep.subr.mxu0 0.0
        %555 = vmatpush1.msra.mxu0 %v531
        %556 = vmatprep.subr.mxu0 0.0
        %557 = vmatpush1.msra.mxu0 %v532
        %558 = vmatprep.subr.mxu0 0.0
        %559 = vmatpush1.msra.mxu0 %v533
        %560 = vmatprep.subr.mxu0 0.0
        %561 = vmatpush1.msra.mxu0 %v534
        %562 = vmatprep.subr.mxu0 0.0
        %563 = vmatpush1.msra.mxu0 %v535
        %564 = vmatprep.subr.mxu0 0.0
        %565 = vmatpush1.msra.mxu0 %v536
        %566 = vmatprep.subr.mxu0 0.0
        %567 = vmatpush1.msra.mxu0 %v537
        %568 = vmatprep.subr.mxu0 0.0
        %569 = vmatpush1.msra.mxu0 %v538
        %570 = vmatprep.subr.mxu0 0.0
        %571 = vmatpush1.msra.mxu0 %v539
        %572 = vmatprep.subr.mxu0 0.0
        %573 = vmatpush1.msra.mxu0 0.0
        %574 = vmatprep.subr.mxu0 0.0
        %575 = vmatpush1.msra.mxu0 0.0
        %576 = vmatprep.subr.mxu0 0.0
        %577 = vmatpush1.msra.mxu0 0.0
        %578 = vmatprep.subr.mxu0 0.0
        %579 = vmatpush1.msra.mxu0 0.0
        %580 = vmatprep.subr.mxu0 0.0
        %581 = vmatpush1.msra.mxu0 0.0
        %582 = vmatprep.subr.mxu0 0.0
        %583 = vmatpush1.msra.mxu0 0.0
        %584 = vmatprep.subr.mxu0 0.0
        %585 = vmatpush1.msra.mxu0 0.0
        %586 = vmatprep.subr.mxu0 0.0
        %587 = vmatpush1.msra.mxu0 0.0
        %588 = vmatprep.subr.mxu0 0.0
        %589 = vmatpush1.msra.mxu0 0.0
        %590 = vmatprep.subr.mxu0 0.0
        %591 = vmatpush1.msra.mxu0 0.0
        %592 = vmatprep.subr.mxu0 0.0
        %593 = vmatpush1.msra.mxu0 0.0
        %594 = vmatprep.subr.mxu0 0.0
        %595 = vmatpush1.msra.mxu0 0.0
        %596 = vmatprep.subr.mxu0 0.0
        %597 = vmatpush1.msra.mxu0 0.0
        %598 = vmatprep.subr.mxu0 0.0
        %599 = vmatpush1.msra.mxu0 0.0
        %600 = vmatprep.subr.mxu0 0.0
        %601 = vmatpush1.msra.mxu0 0.0
        %602 = vmatprep.subr.mxu0 0.0
        %603 = vmatpush1.msra.mxu0 0.0
        %604 = vmatprep.mubr.f32.mxu0 0.0
        %605 = vmatmul.mubr.f32.gmra.mrb[0].mxu0 %v523
        %v606 = vpop.f32.mrb[0].mxu0
        %v607 = vadd.f32 0.0, %v606
        %v608 = vpop.f32.mrb[0].mxu0
        %609 = vdwg.mxu0
        %v610 = vmul.f32 %v607, 0.00390625
        %v611 = vmul.f32 %v610, %v610
        %v613 = vrot.slane %v611, 7
        %v615 = vsub.f32 %v610, %v613
        %v616 = vmax.f32 %v615, 0.0
        %v617 = vadd.f32 %v616, 1e-05
        %v618 = vrsqrt.pop %v617
        %v620 = vrot.slane %v618, 1
        %v622 = vmul.f32 %v610, %v620
        %v624 = vrot.slane %v622, 7
        %v626 = vsel %vm522, %v620, %v624
        %v627 = vld [vmem:[%s3] sm:$0xff]
        %vm628 = vcmask 64512
        %v630 = vsel %vm628, %v626, 0
        %632 = vmatprep.subr.mxu0 0.0
        %633 = vmatpush1.msra.mxu0 %v627
        %634 = vmatprep.subr.mxu0 0.0
        %635 = vmatpush1.msra.mxu0 0.0
        %636 = vmatprep.subr.mxu0 0.0
        %637 = vmatpush1.msra.mxu0 0.0
        %638 = vmatprep.subr.mxu0 0.0
        %639 = vmatpush1.msra.mxu0 0.0
        %640 = vmatprep.subr.mxu0 0.0
        %641 = vmatpush1.msra.mxu0 0.0
        %642 = vmatprep.subr.mxu0 0.0
        %643 = vmatpush1.msra.mxu0 0.0
        %644 = vmatprep.subr.mxu0 0.0
        %645 = vmatpush1.msra.mxu0 0.0
        %646 = vmatprep.subr.mxu0 0.0
        %647 = vmatpush1.msra.mxu0 0.0
        %648 = vmatprep.subr.mxu0 0.0
        %649 = vmatpush1.msra.mxu0 0.0
        %650 = vmatprep.subr.mxu0 0.0
        %651 = vmatpush1.msra.mxu0 0.0
        %652 = vmatprep.subr.mxu0 0.0
        %653 = vmatpush1.msra.mxu0 0.0
        %654 = vmatprep.subr.mxu0 0.0
        %655 = vmatpush1.msra.mxu0 0.0
        %656 = vmatprep.subr.mxu0 0.0
        %657 = vmatpush1.msra.mxu0 0.0
        %658 = vmatprep.subr.mxu0 0.0
        %659 = vmatpush1.msra.mxu0 0.0
        %660 = vmatprep.subr.mxu0 0.0
        %661 = vmatpush1.msra.mxu0 0.0
        %662 = vmatprep.subr.mxu0 0.0
        %663 = vmatpush1.msra.mxu0 0.0
        %664 = vmatprep.subr.mxu0 0.0
        %665 = vmatpush1.msra.mxu0 0.0
        %666 = vmatprep.subr.mxu0 0.0
        %667 = vmatpush1.msra.mxu0 0.0
        %668 = vmatprep.subr.mxu0 0.0
        %669 = vmatpush1.msra.mxu0 0.0
        %670 = vmatprep.subr.mxu0 0.0
        %671 = vmatpush1.msra.mxu0 0.0
        %672 = vmatprep.subr.mxu0 0.0
        %673 = vmatpush1.msra.mxu0 0.0
        %674 = vmatprep.subr.mxu0 0.0
        %675 = vmatpush1.msra.mxu0 0.0
        %676 = vmatprep.subr.mxu0 0.0
        %677 = vmatpush1.msra.mxu0 0.0
        %678 = vmatprep.subr.mxu0 0.0
        %679 = vmatpush1.msra.mxu0 0.0
        %680 = vmatprep.subr.mxu0 0.0
        %681 = vmatpush1.msra.mxu0 0.0
        %682 = vmatprep.subr.mxu0 0.0
        %683 = vmatpush1.msra.mxu0 0.0
        %684 = vmatprep.subr.mxu0 0.0
        %685 = vmatpush1.msra.mxu0 0.0
        %686 = vmatprep.subr.mxu0 0.0
        %687 = vmatpush1.msra.mxu0 0.0
        %688 = vmatprep.subr.mxu0 0.0
        %689 = vmatpush1.msra.mxu0 0.0
        %690 = vmatprep.subr.mxu0 0.0
        %691 = vmatpush1.msra.mxu0 0.0
        %692 = vmatprep.subr.mxu0 0.0
        %693 = vmatpush1.msra.mxu0 0.0
        %694 = vmatprep.subr.mxu0 0.0
        %695 = vmatpush1.msra.mxu0 0.0
        %696 = vmatprep.mubr.f32.mxu0 0.0
        %697 = vmatmul.mubr.f32.gmra.mrb[0].mxu0 %v630
        %v698 = vpop.f32.mrb[0].mxu0
        %v699 = vadd.f32 0.0, %v698
        %v700 = vpop.f32.mrb[0].mxu0
        %701 = vdwg.mxu0
        %v702 = vmul.f32 %v493, %v699
        %v703 = vadd.f32 %v494, %v702
        %v705 = vrot.slane %v699, 1
        %v707 = vsub.f32 %v703, %v705
        %v708 = vlaneseq
        %v709 = vshrl.u32 %v708, 7
        %v710 = vsub.s32 0, %v709
        %v711 = vrot.slane %v699, %v710
        %v712 = vmul.f32 %v485, %v711
        %v713 = vmul.f32 %v490, %v711
        %v714 = vlaneseq
        %v715 = vshrl.u32 %v714, 7
        %v716 = vsub.s32 0, %v715
        %v717 = vrot.slane %v707, %v716
        %v718 = vadd.f32 %v712, %v717
        %v719 = vadd.f32 %v713, %v717
        %v720 = vmax.f32 %v718, 0.0
        %v721 = vmax.f32 %v719, 0.0
        %722 = vst [vmem:[#allocation3] sm:$0x1] 0.0
        %723 = vst [vmem:[#allocation3 + $0x11] sm:$0x1] 0.0
        %724 = vst [vmem:[#allocation3 + $0x1] sm:$0xff] %v720
        %725 = vst [vmem:[#allocation3 + $0x9] sm:$0xff] %v721
        %v726 = vld [vmem:[#allocation3] sm:$0xff]
        %v727 = vld [vmem:[#allocation3 + $0x8] sm:$0xff]
        %v728 = vld [vmem:[#allocation3 + $0x1] sm:$0xff]
        %v729 = vld [vmem:[#allocation3 + $0x9] sm:$0xff]
        %v730 = vld [vmem:[#allocation3 + $0x2] sm:$0xff]
        %v731 = vld [vmem:[#allocation3 + $0xa] sm:$0xff]
        %v732 = vld [vmem:[#allocation7] sm:$0xff]
        %v733 = vld [vmem:[#allocation7 + $0x8] sm:$0xff]
        %v734 = vld [vmem:[#allocation7 + $0x10] sm:$0xff]
        %v735 = vld [vmem:[#allocation7 + $0x18] sm:$0xff]
        %v736 = vld [vmem:[#allocation7 + $0x20] sm:$0xff]
        %v737 = vld [vmem:[#allocation7 + $0x28] sm:$0xff]
        %v738 = vld [vmem:[#allocation7 + $0x30] sm:$0xff]
        %v739 = vld [vmem:[#allocation7 + $0x38] sm:$0xff]
        %v740 = vld [vmem:[#allocation7 + $0x40] sm:$0xff]
        %v741 = vld [vmem:[#allocation7 + $0x48] sm:$0xff]
        %v742 = vld [vmem:[#allocation7 + $0x50] sm:$0xff]
        %v743 = vld [vmem:[#allocation7 + $0x58] sm:$0xff]
        %v744 = vld [vmem:[#allocation7 + $0x60] sm:$0xff]
        %v745 = vld [vmem:[#allocation7 + $0x68] sm:$0xff]
        %v746 = vld [vmem:[#allocation7 + $0x70] sm:$0xff]
        %v747 = vld [vmem:[#allocation7 + $0x78] sm:$0xff]
        %v748 = vld [vmem:[#allocation7 + $0x80] sm:$0xff]
        %v749 = vld [vmem:[#allocation7 + $0x88] sm:$0xff]
        %v750 = vld [vmem:[#allocation7 + $0x90] sm:$0xff]
        %v751 = vld [vmem:[#allocation7 + $0x98] sm:$0xff]
        %v752 = vld [vmem:[#allocation7 + $0xa0] sm:$0xff]
        %v753 = vld [vmem:[#allocation7 + $0xa8] sm:$0xff]
        %v754 = vld [vmem:[#allocation7 + $0xb0] sm:$0xff]
        %v755 = vld [vmem:[#allocation7 + $0xb8] sm:$0xff]
        %v756 = vld [vmem:[#allocation7 + $0xc0] sm:$0xff]
        %v757 = vld [vmem:[#allocation7 + $0xc8] sm:$0xff]
        %v758 = vld [vmem:[#allocation7 + $0xd0] sm:$0xff]
        %v759 = vld [vmem:[#allocation7 + $0xd8] sm:$0xff]
        %v760 = vld [vmem:[#allocation7 + $0xe0] sm:$0xff]
        %v761 = vld [vmem:[#allocation7 + $0xe8] sm:$0xff]
        %v762 = vld [vmem:[#allocation7 + $0xf0] sm:$0xff]
        %v763 = vld [vmem:[#allocation7 + $0xf8] sm:$0xff]
        %v764 = vld [vmem:[#allocation7 + $0x100] sm:$0xff]
        %v765 = vld [vmem:[#allocation7 + $0x108] sm:$0xff]
        %v766 = vld [vmem:[#allocation7 + $0x110] sm:$0xff]
        %v767 = vld [vmem:[#allocation7 + $0x118] sm:$0xff]
        %v768 = vld [vmem:[#allocation7 + $0x120] sm:$0xff]
        %v769 = vld [vmem:[#allocation7 + $0x128] sm:$0xff]
        %v770 = vld [vmem:[#allocation7 + $0x130] sm:$0xff]
        %v771 = vld [vmem:[#allocation7 + $0x138] sm:$0xff]
        %v772 = vld [vmem:[#allocation7 + $0x140] sm:$0xff]
        %v773 = vld [vmem:[#allocation7 + $0x148] sm:$0xff]
        %v774 = vld [vmem:[#allocation7 + $0x150] sm:$0xff]
        %v775 = vld [vmem:[#allocation7 + $0x158] sm:$0xff]
        %v776 = vld [vmem:[#allocation7 + $0x160] sm:$0xff]
        %v777 = vld [vmem:[#allocation7 + $0x168] sm:$0xff]
        %v778 = vld [vmem:[#allocation7 + $0x170] sm:$0xff]
        %v779 = vld [vmem:[#allocation7 + $0x178] sm:$0xff]
        %780 = vmatprep.subr.mxu0 0.0
        %781 = vmatpush1.msra.mxu0 %v732
        %782 = vmatprep.subr.mxu0 0.0
        %783 = vmatpush1.msra.mxu0 %v733
        %784 = vmatprep.subr.mxu0 0.0
        %785 = vmatpush1.msra.mxu0 %v734
        %786 = vmatprep.subr.mxu0 0.0
        %787 = vmatpush1.msra.mxu0 %v735
        %788 = vmatprep.subr.mxu0 0.0
        %789 = vmatpush1.msra.mxu0 %v736
        %790 = vmatprep.subr.mxu0 0.0
        %791 = vmatpush1.msra.mxu0 %v737
        %792 = vmatprep.subr.mxu0 0.0
        %793 = vmatpush1.msra.mxu0 %v738
        %794 = vmatprep.subr.mxu0 0.0
        %795 = vmatpush1.msra.mxu0 %v739
        %796 = vmatprep.subr.mxu0 0.0
        %797 = vmatpush1.msra.mxu0 %v740
        %798 = vmatprep.subr.mxu0 0.0
        %799 = vmatpush1.msra.mxu0 %v741
        %800 = vmatprep.subr.mxu0 0.0
        %801 = vmatpush1.msra.mxu0 %v742
        %802 = vmatprep.subr.mxu0 0.0
        %803 = vmatpush1.msra.mxu0 %v743
        %804 = vmatprep.subr.mxu0 0.0
        %805 = vmatpush1.msra.mxu0 %v744
        %806 = vmatprep.subr.mxu0 0.0
        %807 = vmatpush1.msra.mxu0 %v745
        %808 = vmatprep.subr.mxu0 0.0
        %809 = vmatpush1.msra.mxu0 %v746
        %810 = vmatprep.subr.mxu0 0.0
        %811 = vmatpush1.msra.mxu0 %v747
        %812 = vmatprep.subr.mxu0 0.0
        %813 = vmatpush1.msra.mxu0 %v748
        %814 = vmatprep.subr.mxu0 0.0
        %815 = vmatpush1.msra.mxu0 %v749
        %816 = vmatprep.subr.mxu0 0.0
        %817 = vmatpush1.msra.mxu0 %v750
        %818 = vmatprep.subr.mxu0 0.0
        %819 = vmatpush1.msra.mxu0 %v751
        %820 = vmatprep.subr.mxu0 0.0
        %821 = vmatpush1.msra.mxu0 %v752
        %822 = vmatprep.subr.mxu0 0.0
        %823 = vmatpush1.msra.mxu0 %v753
        %824 = vmatprep.subr.mxu0 0.0
        %825 = vmatpush1.msra.mxu0 %v754
        %826 = vmatprep.subr.mxu0 0.0
        %827 = vmatpush1.msra.mxu0 %v755
        %828 = vmatprep.subr.mxu0 0.0
        %829 = vmatpush1.msra.mxu0 %v756
        %830 = vmatprep.subr.mxu0 0.0
        %831 = vmatpush1.msra.mxu0 %v757
        %832 = vmatprep.subr.mxu0 0.0
        %833 = vmatpush1.msra.mxu0 %v758
        %834 = vmatprep.subr.mxu0 0.0
        %835 = vmatpush1.msra.mxu0 %v759
        %836 = vmatprep.subr.mxu0 0.0
        %837 = vmatpush1.msra.mxu0 %v760
        %838 = vmatprep.subr.mxu0 0.0
        %839 = vmatpush1.msra.mxu0 %v761
        %840 = vmatprep.subr.mxu0 0.0
        %841 = vmatpush1.msra.mxu0 %v762
        %842 = vmatprep.subr.mxu0 0.0
        %843 = vmatpush1.msra.mxu0 %v763
        %844 = vmatprep.mubr.f32.mxu0 %v728
        %845 = vmatmul.mubr.f32.gmra.mrb[0].mxu0 %v726
        %v846 = vpop.f32.mrb[0].mxu0
        %v847 = vadd.f32 0.0, %v846
        %v848 = vpop.f32.mrb[0].mxu0
        %849 = vmatprep.mubr.f32.mxu0 %v729
        %850 = vmatmul.mubr.f32.gmra.mrb[0].mxu0 %v727
        %v851 = vpop.f32.mrb[0].mxu0
        %v852 = vadd.f32 0.0, %v851
        %v853 = vpop.f32.mrb[0].mxu0
        %854 = vdwg.mxu0
        %855 = vmatprep.subr.mxu0 0.0
        %856 = vmatpush1.msra.mxu0 %v764
        %857 = vmatprep.subr.mxu0 0.0
        %858 = vmatpush1.msra.mxu0 %v765
        %859 = vmatprep.subr.mxu0 0.0
        %860 = vmatpush1.msra.mxu0 %v766
        %861 = vmatprep.subr.mxu0 0.0
        %862 = vmatpush1.msra.mxu0 %v767
        %863 = vmatprep.subr.mxu0 0.0
        %864 = vmatpush1.msra.mxu0 %v768
        %865 = vmatprep.subr.mxu0 0.0
        %866 = vmatpush1.msra.mxu0 %v769
        %867 = vmatprep.subr.mxu0 0.0
        %868 = vmatpush1.msra.mxu0 %v770
        %869 = vmatprep.subr.mxu0 0.0
        %870 = vmatpush1.msra.mxu0 %v771
        %871 = vmatprep.subr.mxu0 0.0
        %872 = vmatpush1.msra.mxu0 %v772
        %873 = vmatprep.subr.mxu0 0.0
        %874 = vmatpush1.msra.mxu0 %v773
        %875 = vmatprep.subr.mxu0 0.0
        %876 = vmatpush1.msra.mxu0 %v774
        %877 = vmatprep.subr.mxu0 0.0
        %878 = vmatpush1.msra.mxu0 %v775
        %879 = vmatprep.subr.mxu0 0.0
        %880 = vmatpush1.msra.mxu0 %v776
        %881 = vmatprep.subr.mxu0 0.0
        %882 = vmatpush1.msra.mxu0 %v777
        %883 = vmatprep.subr.mxu0 0.0
        %884 = vmatpush1.msra.mxu0 %v778
        %885 = vmatprep.subr.mxu0 0.0
        %886 = vmatpush1.msra.mxu0 %v779
        %887 = vmatprep.subr.mxu0 0.0
        %888 = vmatpush1.msra.mxu0 0.0
        %889 = vmatprep.subr.mxu0 0.0
        %890 = vmatpush1.msra.mxu0 0.0
        %891 = vmatprep.subr.mxu0 0.0
        %892 = vmatpush1.msra.mxu0 0.0
        %893 = vmatprep.subr.mxu0 0.0
        %894 = vmatpush1.msra.mxu0 0.0
        %895 = vmatprep.subr.mxu0 0.0
        %896 = vmatpush1.msra.mxu0 0.0
        %897 = vmatprep.subr.mxu0 0.0
        %898 = vmatpush1.msra.mxu0 0.0
        %899 = vmatprep.subr.mxu0 0.0
        %900 = vmatpush1.msra.mxu0 0.0
        %901 = vmatprep.subr.mxu0 0.0
        %902 = vmatpush1.msra.mxu0 0.0
        %903 = vmatprep.subr.mxu0 0.0
        %904 = vmatpush1.msra.mxu0 0.0
        %905 = vmatprep.subr.mxu0 0.0
        %906 = vmatpush1.msra.mxu0 0.0
        %907 = vmatprep.subr.mxu0 0.0
        %908 = vmatpush1.msra.mxu0 0.0
        %909 = vmatprep.subr.mxu0 0.0
        %910 = vmatpush1.msra.mxu0 0.0
        %911 = vmatprep.subr.mxu0 0.0
        %912 = vmatpush1.msra.mxu0 0.0
        %913 = vmatprep.subr.mxu0 0.0
        %914 = vmatpush1.msra.mxu0 0.0
        %915 = vmatprep.subr.mxu0 0.0
        %916 = vmatpush1.msra.mxu0 0.0
        %917 = vmatprep.subr.mxu0 0.0
        %918 = vmatpush1.msra.mxu0 0.0
        %919 = vmatprep.mubr.f32.mxu0 0.0
        %920 = vmatmul.mubr.f32.gmra.mrb[0].mxu0 %v730
        %v921 = vpop.f32.mrb[0].mxu0
        %v922 = vadd.f32 %v847, %v921
        %v923 = vpop.f32.mrb[0].mxu0
        %924 = vmatprep.mubr.f32.mxu0 0.0
        %925 = vmatmul.mubr.f32.gmra.mrb[0].mxu0 %v731
        %v926 = vpop.f32.mrb[0].mxu0
        %v927 = vadd.f32 %v852, %v926
        %v928 = vpop.f32.mrb[0].mxu0
        %929 = vdwg.mxu0
        %v930 = vld [vmem:[%s4 + $0x8] sm:$0x1]
        %v931 = vld [vmem:[%s4 + $0x9] sm:$0x1]
        %v932 = vadd.f32 %v922, %v927
        %v933 = vrot.slane %v932, 4
        %v934 = vadd.f32 %v932, %v933
        %v935 = vrot.slane %v934, 2
        %v936 = vadd.f32 %v934, %v935
        %v937 = vrot.slane %v936, 1
        %v938 = vadd.f32 %v936, %v937
        %v939 = vmul.f32 %v922, %v922
        %v940 = vmul.f32 %v927, %v927
        %v941 = vadd.f32 %v939, %v940
        %v942 = vrot.slane %v941, 4
        %v943 = vadd.f32 %v941, %v942
        %v944 = vrot.slane %v943, 2
        %v945 = vadd.f32 %v943, %v944
        %v946 = vrot.slane %v945, 1
        %v947 = vadd.f32 %v945, %v946
        %v948 = vmul.f32 %v930, 16.0
        %v949 = vadd.f32 %v938, %v948
        %v950 = vmul.f32 %v930, 2.0
        %v951 = vmul.f32 %v950, %v938
        %v952 = vadd.f32 %v947, %v951
        %v953 = vmul.f32 %v930, %v930
        %v954 = vmul.f32 %v953, 16.0
        %v955 = vadd.f32 %v952, %v954
        %v957 = vrot.slane %v955, 7
        %v959 = vsel %vm522, %v949, %v957
        %v960 = vld [vmem:[%s5] sm:$0xff]
        %v961 = vld [vmem:[%s5 + $0x8] sm:$0xff]
        %v962 = vld [vmem:[%s5 + $0x10] sm:$0xff]
        %v963 = vld [vmem:[%s5 + $0x18] sm:$0xff]
        %v964 = vld [vmem:[%s5 + $0x20] sm:$0xff]
        %v965 = vld [vmem:[%s5 + $0x28] sm:$0xff]
        %v966 = vld [vmem:[%s5 + $0x30] sm:$0xff]
        %v967 = vld [vmem:[%s5 + $0x38] sm:$0xff]
        %v968 = vld [vmem:[%s5 + $0x40] sm:$0xff]
        %v969 = vld [vmem:[%s5 + $0x48] sm:$0xff]
        %v970 = vld [vmem:[%s5 + $0x50] sm:$0xff]
        %v971 = vld [vmem:[%s5 + $0x58] sm:$0xff]
        %v972 = vld [vmem:[%s5 + $0x60] sm:$0xff]
        %v973 = vld [vmem:[%s5 + $0x68] sm:$0xff]
        %v974 = vld [vmem:[%s5 + $0x70] sm:$0xff]
        %v975 = vld [vmem:[%s5 + $0x78] sm:$0xff]
        %976 = vmatprep.subr.mxu0 0.0
        %977 = vmatpush1.msra.mxu0 %v960
        %978 = vmatprep.subr.mxu0 0.0
        %979 = vmatpush1.msra.mxu0 %v961
        %980 = vmatprep.subr.mxu0 0.0
        %981 = vmatpush1.msra.mxu0 %v962
        %982 = vmatprep.subr.mxu0 0.0
        %983 = vmatpush1.msra.mxu0 %v963
        %984 = vmatprep.subr.mxu0 0.0
        %985 = vmatpush1.msra.mxu0 %v964
        %986 = vmatprep.subr.mxu0 0.0
        %987 = vmatpush1.msra.mxu0 %v965
        %988 = vmatprep.subr.mxu0 0.0
        %989 = vmatpush1.msra.mxu0 %v966
        %990 = vmatprep.subr.mxu0 0.0
        %991 = vmatpush1.msra.mxu0 %v967
        %992 = vmatprep.subr.mxu0 0.0
        %993 = vmatpush1.msra.mxu0 %v968
        %994 = vmatprep.subr.mxu0 0.0
        %995 = vmatpush1.msra.mxu0 %v969
        %996 = vmatprep.subr.mxu0 0.0
        %997 = vmatpush1.msra.mxu0 %v970
        %998 = vmatprep.subr.mxu0 0.0
        %999 = vmatpush1.msra.mxu0 %v971
        %1000 = vmatprep.subr.mxu0 0.0
        %1001 = vmatpush1.msra.mxu0 %v972
        %1002 = vmatprep.subr.mxu0 0.0
        %1003 = vmatpush1.msra.mxu0 %v973
        %1004 = vmatprep.subr.mxu0 0.0
        %1005 = vmatpush1.msra.mxu0 %v974
        %1006 = vmatprep.subr.mxu0 0.0
        %1007 = vmatpush1.msra.mxu0 %v975
        %1008 = vmatprep.subr.mxu0 0.0
        %1009 = vmatpush1.msra.mxu0 0.0
        %1010 = vmatprep.subr.mxu0 0.0
        %1011 = vmatpush1.msra.mxu0 0.0
        %1012 = vmatprep.subr.mxu0 0.0
        %1013 = vmatpush1.msra.mxu0 0.0
        %1014 = vmatprep.subr.mxu0 0.0
        %1015 = vmatpush1.msra.mxu0 0.0
        %1016 = vmatprep.subr.mxu0 0.0
        %1017 = vmatpush1.msra.mxu0 0.0
        %1018 = vmatprep.subr.mxu0 0.0
        %1019 = vmatpush1.msra.mxu0 0.0
        %1020 = vmatprep.subr.mxu0 0.0
        %1021 = vmatpush1.msra.mxu0 0.0
        %1022 = vmatprep.subr.mxu0 0.0
        %1023 = vmatpush1.msra.mxu0 0.0
        %1024 = vmatprep.subr.mxu0 0.0
        %1025 = vmatpush1.msra.mxu0 0.0
        %1026 = vmatprep.subr.mxu0 0.0
        %1027 = vmatpush1.msra.mxu0 0.0
        %1028 = vmatprep.subr.mxu0 0.0
        %1029 = vmatpush1.msra.mxu0 0.0
        %1030 = vmatprep.subr.mxu0 0.0
        %1031 = vmatpush1.msra.mxu0 0.0
        %1032 = vmatprep.subr.mxu0 0.0
        %1033 = vmatpush1.msra.mxu0 0.0
        %1034 = vmatprep.subr.mxu0 0.0
        %1035 = vmatpush1.msra.mxu0 0.0
        %1036 = vmatprep.subr.mxu0 0.0
        %1037 = vmatpush1.msra.mxu0 0.0
        %1038 = vmatprep.subr.mxu0 0.0
        %1039 = vmatpush1.msra.mxu0 0.0
        %1040 = vmatprep.mubr.f32.mxu0 0.0
        %1041 = vmatmul.mubr.f32.gmra.mrb[0].mxu0 %v959
        %v1042 = vpop.f32.mrb[0].mxu0
        %v1043 = vadd.f32 0.0, %v1042
        %v1044 = vpop.f32.mrb[0].mxu0
        %1045 = vdwg.mxu0
        %v1046 = vmul.f32 %v1043, 0.00390625
        %v1047 = vmul.f32 %v1046, %v1046
        %v1049 = vrot.slane %v1047, 7
        %v1051 = vsub.f32 %v1046, %v1049
        %v1052 = vmax.f32 %v1051, 0.0
        %v1053 = vadd.f32 %v1052, 1e-05
        %v1054 = vrsqrt.pop %v1053
        %v1056 = vrot.slane %v1054, 1
        %v1058 = vmul.f32 %v1046, %v1056
        %v1060 = vrot.slane %v1058, 7
        %v1062 = vsel %vm522, %v1056, %v1060
        %v1063 = vld [vmem:[%s4] sm:$0xff]
        %v1065 = vsel %vm628, %v1062, 0
        %1067 = vmatprep.subr.mxu0 0.0
        %1068 = vmatpush1.msra.mxu0 %v1063
        %1069 = vmatprep.subr.mxu0 0.0
        %1070 = vmatpush1.msra.mxu0 0.0
        %1071 = vmatprep.subr.mxu0 0.0
        %1072 = vmatpush1.msra.mxu0 0.0
        %1073 = vmatprep.subr.mxu0 0.0
        %1074 = vmatpush1.msra.mxu0 0.0
        %1075 = vmatprep.subr.mxu0 0.0
        %1076 = vmatpush1.msra.mxu0 0.0
        %1077 = vmatprep.subr.mxu0 0.0
        %1078 = vmatpush1.msra.mxu0 0.0
        %1079 = vmatprep.subr.mxu0 0.0
        %1080 = vmatpush1.msra.mxu0 0.0
        %1081 = vmatprep.subr.mxu0 0.0
        %1082 = vmatpush1.msra.mxu0 0.0
        %1083 = vmatprep.subr.mxu0 0.0
        %1084 = vmatpush1.msra.mxu0 0.0
        %1085 = vmatprep.subr.mxu0 0.0
        %1086 = vmatpush1.msra.mxu0 0.0
        %1087 = vmatprep.subr.mxu0 0.0
        %1088 = vmatpush1.msra.mxu0 0.0
        %1089 = vmatprep.subr.mxu0 0.0
        %1090 = vmatpush1.msra.mxu0 0.0
        %1091 = vmatprep.subr.mxu0 0.0
        %1092 = vmatpush1.msra.mxu0 0.0
        %1093 = vmatprep.subr.mxu0 0.0
        %1094 = vmatpush1.msra.mxu0 0.0
        %1095 = vmatprep.subr.mxu0 0.0
        %1096 = vmatpush1.msra.mxu0 0.0
        %1097 = vmatprep.subr.mxu0 0.0
        %1098 = vmatpush1.msra.mxu0 0.0
        %1099 = vmatprep.subr.mxu0 0.0
        %1100 = vmatpush1.msra.mxu0 0.0
        %1101 = vmatprep.subr.mxu0 0.0
        %1102 = vmatpush1.msra.mxu0 0.0
        %1103 = vmatprep.subr.mxu0 0.0
        %1104 = vmatpush1.msra.mxu0 0.0
        %1105 = vmatprep.subr.mxu0 0.0
        %1106 = vmatpush1.msra.mxu0 0.0
        %1107 = vmatprep.subr.mxu0 0.0
        %1108 = vmatpush1.msra.mxu0 0.0
        %1109 = vmatprep.subr.mxu0 0.0
        %1110 = vmatpush1.msra.mxu0 0.0
        %1111 = vmatprep.subr.mxu0 0.0
        %1112 = vmatpush1.msra.mxu0 0.0
        %1113 = vmatprep.subr.mxu0 0.0
        %1114 = vmatpush1.msra.mxu0 0.0
        %1115 = vmatprep.subr.mxu0 0.0
        %1116 = vmatpush1.msra.mxu0 0.0
        %1117 = vmatprep.subr.mxu0 0.0
        %1118 = vmatpush1.msra.mxu0 0.0
        %1119 = vmatprep.subr.mxu0 0.0
        %1120 = vmatpush1.msra.mxu0 0.0
        %1121 = vmatprep.subr.mxu0 0.0
        %1122 = vmatpush1.msra.mxu0 0.0
        %1123 = vmatprep.subr.mxu0 0.0
        %1124 = vmatpush1.msra.mxu0 0.0
        %1125 = vmatprep.subr.mxu0 0.0
        %1126 = vmatpush1.msra.mxu0 0.0
        %1127 = vmatprep.subr.mxu0 0.0
        %1128 = vmatpush1.msra.mxu0 0.0
        %1129 = vmatprep.subr.mxu0 0.0
        %1130 = vmatpush1.msra.mxu0 0.0
        %1131 = vmatprep.mubr.f32.mxu0 0.0
        %1132 = vmatmul.mubr.f32.gmra.mrb[0].mxu0 %v1065
        %v1133 = vpop.f32.mrb[0].mxu0
        %v1134 = vadd.f32 0.0, %v1133
        %v1135 = vpop.f32.mrb[0].mxu0
        %1136 = vdwg.mxu0
        %v1137 = vmul.f32 %v930, %v1134
        %v1138 = vadd.f32 %v931, %v1137
        %v1140 = vrot.slane %v1134, 1
        %v1142 = vsub.f32 %v1138, %v1140
        %v1143 = vlaneseq
        %v1144 = vshrl.u32 %v1143, 7
        %v1145 = vsub.s32 0, %v1144
        %v1146 = vrot.slane %v1134, %v1145
        %v1147 = vmul.f32 %v922, %v1146
        %v1148 = vmul.f32 %v927, %v1146
        %v1149 = vlaneseq
        %v1150 = vshrl.u32 %v1149, 7
        %v1151 = vsub.s32 0, %v1150
        %v1152 = vrot.slane %v1142, %v1151
        %v1153 = vadd.f32 %v1147, %v1152
        %v1154 = vadd.f32 %v1148, %v1152
        %v1155 = vmax.f32 %v1153, 0.0
        %v1156 = vmax.f32 %v1154, 0.0
        %1157 = vst [vmem:[%s275] sm:$0xff] %v1155
        %1158 = vst [vmem:[%s275 + $0x8] sm:$0xff] %v1156
        %s1159 = sand.u32 %s161, 1
        %s1160 = scalar_lea.sflag [#allocation6], %s1159
        %s1161 = sand.u32 %s161, 1
        %s1162 = smul.addr %s1161, 16
        %s1163 = scalar_lea.vmem [#allocation9], %s1162
        // Predicated region
        $region53: #{tpu_custom_call.1} parent=43 // pred_check
          %p1164 = pneg %p171
        $region54: #{tpu_custom_call.1} parent=43 // pred_check_branch
          %1166 = sbr.rel (%p1164) target = $region56
        $region55: #{tpu_custom_call.1} parent=43 // pred_region
          %s1167 = smul.u32 2, %s22
          %s1169 = ssub.s32 256, 256
          %1170 = vsyncadd %s1160, %s1169
          %s1171 = smul.addr %s1167, 128
          %s1172 = scalar_lea.hbm %s6, %s1171
          %s1173 = sshll.u32 %s1163, 4
          %s1174 = int_to_ptr.vmem [resolvable:$true] %s1173
          %1179 = dma.vmem_to_hbm [thread:$0]  %s1174, 256, %s1172, %s1160, 128, 128, 8
        $region56: #{tpu_custom_call.1} parent=43 // pred_fallthru
          _
      $region44: #{tpu_custom_call.1} parent=5 // pred_fallthru
        _
      %p1180 = scmp.le.s32.totalorder 2, %s17
      // Predicated region
      $region57: #{tpu_custom_call.1} parent=5 // pred_check
        %p1181 = pneg %p1180
      $region58: #{tpu_custom_call.1} parent=5 // pred_check_branch
        %1183 = sbr.rel (%p1181) target = $region60
      $region59: #{tpu_custom_call.1} parent=5 // pred_region
        %s1184 = ssub.s32 %s17, 2
        // Predicated region
        $region61: #{tpu_custom_call.1} parent=59 // pred_check
          %p1185 = pneg %p177
        $region62: #{tpu_custom_call.1} parent=59 // pred_check_branch
          %1187 = sbr.rel (%p1185) target = $region64
        $region63: #{tpu_custom_call.1} parent=59 // pred_region
          %s1188 = sand.u32 %s162, 1
          %s1189 = scalar_lea.sflag [#allocation6], %s1188
          %s1190 = sand.u32 %s162, 1
          %s1191 = smul.addr %s1190, 16
          %s1192 = scalar_lea.vmem [#allocation9], %s1191
          %1193 = dma.done %s1189, 256
        $region64: #{tpu_custom_call.1} parent=59 // pred_fallthru
          _
      $region60: #{tpu_custom_call.1} parent=5 // pred_fallthru
        _
    $region6: #{tpu_custom_call.1} parent=1 // loop_footer
      %s21 = sadd.s32 1, %s17
    $region7: #{tpu_custom_call.1} parent=1 // loop_footer_branch
      %16 = sbr.rel target = $region3
    $region8: #{tpu_custom_call.1} parent=1 // loop_exit
      _
    %1194 = vsyncpa [#allocation5], 1
    %s1195 = scalar_lea.sflag [#allocation5], 1
    %1196 = vsyncpa %s1195, 1
    %1197 = vsyncpa [#allocation8], 1
    %1198 = vsyncpa [#allocation6], 1
    %s1199 = scalar_lea.sflag [#allocation6], 1
    %1200 = vsyncpa %s1199, 1

// kernel: tpu_custom_call.1
$region0: #{tpu_custom_call.1}
  #allocation0 [shape = 'u32[]', space=smem, size = 0x4, offset = 0x4, fixed_abs, tag = 'smem constant byte address 0x4 - core index']
  #allocation1 [shape = 'u32[144,128]{1,0:T(1,128)}', space=vmem, size = 0x12000, scoped, tag = 'internal scratch']
  #allocation2 [shape = 'f32[18,128]{1,0:T(8,128)}', space=vmem, size = 0x3000, scoped, tag = 'scratch operand']
  #allocation3 [shape = 'f32[18,128]{1,0:T(8,128)}', space=vmem, size = 0x3000, scoped, tag = 'scratch operand']
  %s0 = inlined_call_operand.vmem [shape: f32[32,128], index: 0, kind: input, shape index: {}]
  %s1 = inlined_call_operand.hbm [shape: f32[384,128], index: 1, kind: input, shape index: {}]
  %s2 = inlined_call_operand.hbm [shape: f32[384,128], index: 2, kind: input, shape index: {}]
  %s3 = inlined_call_operand.vmem [shape: f32[10,128], index: 3, kind: input, shape index: {}]
  %s4 = inlined_call_operand.vmem [shape: f32[10,128], index: 4, kind: input, shape index: {}]
  %s5 = inlined_call_operand.vmem [shape: f32[128,8], index: 5, kind: input, shape index: {}]
  %s6 = inlined_call_operand.hbm [shape: f32[32,128], index: 6, kind: output, shape index: {}]
  %s7 = sld [smem:[#allocation0]]
  $region65: #{tpu_custom_call.1} parent=0
    _
  %s9 = ssub.s32 1, %s7
  %s10 = scalar_select 0, %s9, %s7
  $region1: #{tpu_custom_call.1} parent=0
    #allocation4 [shape = 'u8[196608]{0}', space=vmem, size = 0x30000, scoped, tag = 'input window, operand 1, single buffered']
    #allocation5 [shape = 's32[2]{0}', space=sflag, size = 0x8, scoped, tag = 'scoped memory for tpu_custom_call.1']
    #allocation6 [shape = 's32[2]{0}', space=sflag, size = 0x8, scoped, tag = 'scoped memory for tpu_custom_call.1']
    #allocation7 [shape = 'u8[196608]{0}', space=vmem, size = 0x30000, scoped, tag = 'input window, operand 2, single buffered']
    #allocation8 [shape = 's32[1]{0}', space=sflag, size = 0x4, scoped, tag = 'scoped memory for tpu_custom_call.1']
    #allocation9 [shape = 'u8[16384]{0}', space=vmem, size = 0x4000, scoped, tag = 'output window, operand 0']
    %11 = vsyncpa [#allocation5], 0
    %12 = vsyncpa [#allocation8], 0
    %13 = vsyncpa [#allocation6], 0
    %s14 = scalar_lea.sflag [#allocation6], 1
    %15 = vsyncpa %s14, 0
    loop: start=0, step=1, limit=4
    $region2: #{tpu_custom_call.1} parent=1 // loop_pre_header
      _
    $region3: #{tpu_custom_call.1} parent=1 // loop_header
      %s17 = sphi 0, %s21
      %p18 = scmp.ge.s32.totalorder %s17, 4
      %s27 = sphi 0, %s29
      %s30 = sphi 0, %s27
      %s31 = sphi 0, %s30
      %s47 = sphi 0, %s31
      %s51 = sphi 0, %s51
      %s53 = sphi 0, %s51
      %s54 = sphi 0, %s53
      %s68 = sphi 0, %s54
      %s72 = sphi 0, %s72
      %s74 = sphi 0, %s72
      %s75 = sphi 0, %s74
      %s89 = sphi 0, %s75
      %s93 = sphi 0, %s93
      %s95 = sphi 0, %s93
      %s96 = sphi 0, %s95
      %s110 = sphi 0, %s96
      %s114 = sphi 0, %s114
      %s116 = sphi 0, %s114
      %s117 = sphi 0, %s116
      %s131 = sphi 0, %s117
      %s135 = sphi 0, %s135
      %s137 = sphi 0, %s135
      %s138 = sphi 0, %s137
      %s152 = sphi 0, %s138
      %s158 = sphi 0, %s160
      %s161 = sphi 0, %s158
      %s162 = sphi 0, %s161
      %s178 = sphi 0, %s162
    $region4: #{tpu_custom_call.1} parent=1 // loop_header_branch
      %20 = sbr.rel (%p18) target = $region8
    $region5: #{tpu_custom_call.1} parent=1 // loop_body
      %s22 = ssub.s32 %s17, 1
      %s23 = ssub.s32 %s17, 2
      %s24 = sadd.s32 %s17, 1
      %s25 = ssub.s32 %s17, %s24
      %p26 = scmp.eq.s32.totalorder %s25, 0
      %s28 = sadd.s32 %s27, 1
      %s29 = scalar_select %p26, %s27, %s28
      %p32 = pneg %p26
      %p33 = scmp.eq.s32.totalorder %s17, 1
      %p34 = por %p32, %p33
      %p35 = scmp.ne.s32.totalorder %s27, %s30
      %p36 = scmp.eq.s32.totalorder %s17, 0
      %p37 = por %p35, %p36
      %p38 = scmp.ne.s32.totalorder %s27, %s30
      %p39 = scmp.eq.s32.totalorder %s22, 1
      %p40 = por %p38, %p39
      %p41 = scmp.ne.s32.totalorder %s30, %s31
      %p42 = scmp.eq.s32.totalorder %s22, 0
      %p43 = por %p41, %p42
      %p44 = scmp.ne.s32.totalorder %s30, %s31
      %p45 = scmp.eq.s32.totalorder %s23, 1
      %p46 = por %p44, %p45
      %p48 = scmp.ne.s32.totalorder %s31, %s47
      %p49 = scmp.eq.s32.totalorder %s23, 0
      %p50 = por %p48, %p49
      %s52 = sadd.s32 %s51, 1
      %p55 = scmp.eq.s32.totalorder %s17, 1
      %p56 = scmp.ne.s32.totalorder %s51, %s53
      %p57 = scmp.eq.s32.totalorder %s17, 0
      %p58 = por %p56, %p57
      %p59 = scmp.ne.s32.totalorder %s51, %s53
      %p60 = scmp.eq.s32.totalorder %s22, 1
      %p61 = por %p59, %p60
      %p62 = scmp.ne.s32.totalorder %s53, %s54
      %p63 = scmp.eq.s32.totalorder %s22, 0
      %p64 = por %p62, %p63
      %p65 = scmp.ne.s32.totalorder %s53, %s54
      %p66 = scmp.eq.s32.totalorder %s23, 1
      %p67 = por %p65, %p66
      %p69 = scmp.ne.s32.totalorder %s54, %s68
      %p70 = scmp.eq.s32.totalorder %s23, 0
      %p71 = por %p69, %p70
      %s73 = sadd.s32 %s72, 1
      %p76 = scmp.eq.s32.totalorder %s17, 1
      %p77 = scmp.ne.s32.totalorder %s72, %s74
      %p78 = scmp.eq.s32.totalorder %s17, 0
      %p79 = por %p77, %p78
      %p80 = scmp.ne.s32.totalorder %s72, %s74
      %p81 = scmp.eq.s32.totalorder %s22, 1
      %p82 = por %p80, %p81
      %p83 = scmp.ne.s32.totalorder %s74, %s75
      %p84 = scmp.eq.s32.totalorder %s22, 0
      %p85 = por %p83, %p84
      %p86 = scmp.ne.s32.totalorder %s74, %s75
      %p87 = scmp.eq.s32.totalorder %s23, 1
      %p88 = por %p86, %p87
      %p90 = scmp.ne.s32.totalorder %s75, %s89
      %p91 = scmp.eq.s32.totalorder %s23, 0
      %p92 = por %p90, %p91
      %s94 = sadd.s32 %s93, 1
      %p97 = scmp.eq.s32.totalorder %s17, 1
      %p98 = scmp.ne.s32.totalorder %s93, %s95
      %p99 = scmp.eq.s32.totalorder %s17, 0
      %p100 = por %p98, %p99
      %p101 = scmp.ne.s32.totalorder %s93, %s95
      %p102 = scmp.eq.s32.totalorder %s22, 1
      %p103 = por %p101, %p102
      %p104 = scmp.ne.s32.totalorder %s95, %s96
      %p105 = scmp.eq.s32.totalorder %s22, 0
      %p106 = por %p104, %p105
      %p107 = scmp.ne.s32.totalorder %s95, %s96
      %p108 = scmp.eq.s32.totalorder %s23, 1
      %p109 = por %p107, %p108
      %p111 = scmp.ne.s32.totalorder %s96, %s110
      %p112 = scmp.eq.s32.totalorder %s23, 0
      %p113 = por %p111, %p112
      %s115 = sadd.s32 %s114, 1
      %p118 = scmp.eq.s32.totalorder %s17, 1
      %p119 = scmp.ne.s32.totalorder %s114, %s116
      %p120 = scmp.eq.s32.totalorder %s17, 0
      %p121 = por %p119, %p120
      %p122 = scmp.ne.s32.totalorder %s114, %s116
      %p123 = scmp.eq.s32.totalorder %s22, 1
      %p124 = por %p122, %p123
      %p125 = scmp.ne.s32.totalorder %s116, %s117
      %p126 = scmp.eq.s32.totalorder %s22, 0
      %p127 = por %p125, %p126
      %p128 = scmp.ne.s32.totalorder %s116, %s117
      %p129 = scmp.eq.s32.totalorder %s23, 1
      %p130 = por %p128, %p129
      %p132 = scmp.ne.s32.totalorder %s117, %s131
      %p133 = scmp.eq.s32.totalorder %s23, 0
      %p134 = por %p132, %p133
      %s136 = sadd.s32 %s135, 1
      %p139 = scmp.eq.s32.totalorder %s17, 1
      %p140 = scmp.ne.s32.totalorder %s135, %s137
      %p141 = scmp.eq.s32.totalorder %s17, 0
      %p142 = por %p140, %p141
      %p143 = scmp.ne.s32.totalorder %s135, %s137
      %p144 = scmp.eq.s32.totalorder %s22, 1
      %p145 = por %p143, %p144
      %p146 = scmp.ne.s32.totalorder %s137, %s138
      %p147 = scmp.eq.s32.totalorder %s22, 0
      %p148 = por %p146, %p147
      %p149 = scmp.ne.s32.totalorder %s137, %s138
      %p150 = scmp.eq.s32.totalorder %s23, 1
      %p151 = por %p149, %p150
      %p153 = scmp.ne.s32.totalorder %s138, %s152
      %p154 = scmp.eq.s32.totalorder %s23, 0
      %p155 = por %p153, %p154
      %s156 = ssub.s32 %s17, %s24
      %p157 = scmp.eq.s32.totalorder %s156, 0
      %s159 = sadd.s32 %s158, 1
      %s160 = scalar_select %p157, %s158, %s159
      %p163 = pneg %p157
      %p164 = scmp.eq.s32.totalorder %s17, 1
      %p165 = por %p163, %p164
      %p166 = scmp.ne.s32.totalorder %s158, %s161
      %p167 = scmp.eq.s32.totalorder %s17, 0
      %p168 = por %p166, %p167
      %p169 = scmp.ne.s32.totalorder %s158, %s161
      %p170 = scmp.eq.s32.totalorder %s22, 1
      %p171 = por %p169, %p170
      %p172 = scmp.ne.s32.totalorder %s161, %s162
      %p173 = scmp.eq.s32.totalorder %s22, 0
      %p174 = por %p172, %p173
      %p175 = scmp.ne.s32.totalorder %s161, %s162
      %p176 = scmp.eq.s32.totalorder %s23, 1
      %p177 = por %p175, %p176
      %p179 = scmp.ne.s32.totalorder %s162, %s178
      %p180 = scmp.eq.s32.totalorder %s23, 0
      %p181 = por %p179, %p180
      %p182 = scmp.le.s32.totalorder 1, %s17
      %p183 = scmp.lt.s32.totalorder %s17, 3
      %p184 = pnand %p182, %p183
      %p185 = pneg %p184
      // Predicated region
      $region9: #{tpu_custom_call.1} parent=5 // pred_check
        _
      $region10: #{tpu_custom_call.1} parent=5 // pred_check_branch
        %187 = sbr.rel (%p184) target = $region12
      $region11: #{tpu_custom_call.1} parent=5 // pred_region
        %s188 = ssub.s32 %s17, 1
        // Predicated region
        $region13: #{tpu_custom_call.1} parent=11 // pred_check
          %p189 = pneg %p64
        $region14: #{tpu_custom_call.1} parent=11 // pred_check_branch
          %191 = sbr.rel (%p189) target = $region16
        $region15: #{tpu_custom_call.1} parent=11 // pred_region
          %s193 = ssub.s32 6144, 6144
          %194 = vsyncadd [#allocation5], %s193
          %s195 = sshll.u32 [#allocation4], 4
          %s196 = int_to_ptr.vmem [resolvable:$true] %s195
          %201 = dma.hbm_to_vmem [thread:$0]  %s1, 6144, %s196, [#allocation5], 128, 128, 8
        $region16: #{tpu_custom_call.1} parent=11 // pred_fallthru
          _
        // Predicated region
        $region17: #{tpu_custom_call.1} parent=11 // pred_check
          %p202 = pneg %p85
        $region18: #{tpu_custom_call.1} parent=11 // pred_check_branch
          %204 = sbr.rel (%p202) target = $region20
        $region19: #{tpu_custom_call.1} parent=11 // pred_region
          %s206 = ssub.s32 6144, 6144
          %207 = vsyncadd [#allocation8], %s206
          %s208 = sshll.u32 [#allocation7], 4
          %s209 = int_to_ptr.vmem [resolvable:$true] %s208
          %214 = dma.hbm_to_vmem [thread:$0]  %s2, 6144, %s209, [#allocation8], 128, 128, 8
        $region20: #{tpu_custom_call.1} parent=11 // pred_fallthru
          _
        // Predicated region
        $region21: #{tpu_custom_call.1} parent=11 // pred_check
          %p215 = pneg %p106
        $region22: #{tpu_custom_call.1} parent=11 // pred_check_branch
          %217 = sbr.rel (%p215) target = $region24
        $region23: #{tpu_custom_call.1} parent=11 // pred_region
          _
        $region24: #{tpu_custom_call.1} parent=11 // pred_fallthru
          _
        // Predicated region
        $region25: #{tpu_custom_call.1} parent=11 // pred_check
          %p218 = pneg %p127
        $region26: #{tpu_custom_call.1} parent=11 // pred_check_branch
          %220 = sbr.rel (%p218) target = $region28
        $region27: #{tpu_custom_call.1} parent=11 // pred_region
          _
        $region28: #{tpu_custom_call.1} parent=11 // pred_fallthru
          _
        // Predicated region
        $region29: #{tpu_custom_call.1} parent=11 // pred_check
          %p221 = pneg %p148
        $region30: #{tpu_custom_call.1} parent=11 // pred_check_branch
          %223 = sbr.rel (%p221) target = $region32
        $region31: #{tpu_custom_call.1} parent=11 // pred_region
          _
        $region32: #{tpu_custom_call.1} parent=11 // pred_fallthru
          _
      $region12: #{tpu_custom_call.1} parent=5 // pred_fallthru
        _
      %p224 = scmp.lt.s32.totalorder %s17, 2
      // Predicated region
      $region33: #{tpu_custom_call.1} parent=5 // pred_check
        %p225 = pneg %p224
      $region34: #{tpu_custom_call.1} parent=5 // pred_check_branch
        %227 = sbr.rel (%p225) target = $region36
      $region35: #{tpu_custom_call.1} parent=5 // pred_region
        // Predicated region
        $region37: #{tpu_custom_call.1} parent=35 // pred_check
          %p228 = pneg %p37
        $region38: #{tpu_custom_call.1} parent=35 // pred_check_branch
          %230 = sbr.rel (%p228) target = $region40
        $region39: #{tpu_custom_call.1} parent=35 // pred_region
          %s231 = smul.u32 2, %s17
          %p232 = scmp.lt.s32.totalorder %s231, 3
          %s233 = scalar_select %p232, %s231, 3
          %s234 = smul.addr %s233, 8
          %s235 = scalar_lea.vmem %s0, %s234
          %s236 = smul.u32 2, %s17
        $region40: #{tpu_custom_call.1} parent=35 // pred_fallthru
          _
      $region36: #{tpu_custom_call.1} parent=5 // pred_fallthru
        _
      %p237 = scmp.le.s32.totalorder 1, %s17
      %p238 = scmp.lt.s32.totalorder %s17, 3
      %p239 = pnand %p237, %p238
      %p240 = pneg %p239
      // Predicated region
      $region41: #{tpu_custom_call.1} parent=5 // pred_check
        _
      $region42: #{tpu_custom_call.1} parent=5 // pred_check_branch
        %242 = sbr.rel (%p239) target = $region44
      $region43: #{tpu_custom_call.1} parent=5 // pred_region
        %s243 = ssub.s32 %s17, 1
        // Predicated region
        $region45: #{tpu_custom_call.1} parent=43 // pred_check
          %p244 = pneg %p64
        $region46: #{tpu_custom_call.1} parent=43 // pred_check_branch
          %246 = sbr.rel (%p244) target = $region48
        $region47: #{tpu_custom_call.1} parent=43 // pred_region
          %247 = dma.done [#allocation5], 6144
        $region48: #{tpu_custom_call.1} parent=43 // pred_fallthru
          _
        // Predicated region
        $region49: #{tpu_custom_call.1} parent=43 // pred_check
          %p248 = pneg %p85
        $region50: #{tpu_custom_call.1} parent=43 // pred_check_branch
          %250 = sbr.rel (%p248) target = $region52
        $region51: #{tpu_custom_call.1} parent=43 // pred_region
          %251 = dma.done [#allocation8], 6144
        $region52: #{tpu_custom_call.1} parent=43 // pred_fallthru
          _
        %s252 = smul.u32 2, %s22
        %p253 = scmp.lt.s32.totalorder %s252, 3
        %s254 = scalar_select %p253, %s252, 3
        %s255 = smul.addr %s254, 8
        %s256 = scalar_lea.vmem %s0, %s255
        %p257 = pneg %p43
        %p258 = pneg %p40
        %p259 = pneg %p64
        %p260 = pneg %p61
        %p261 = pneg %p85
        %p262 = pneg %p82
        %p263 = pneg %p106
        %p264 = pneg %p103
        %p265 = pneg %p127
        %p266 = pneg %p124
        %p267 = pneg %p148
        %p268 = pneg %p145
        %p269 = pneg %p174
        %p270 = pneg %p171
        %s271 = sand.u32 %s161, 1
        %s272 = scalar_lea.sflag [#allocation6], %s271
        %s273 = sand.u32 %s161, 1
        %s274 = smul.addr %s273, 16
        %s275 = scalar_lea.vmem [#allocation9], %s274
        %s276 = smul.u32 2, %s22
        %p277 = scmp.lt.s32.totalorder %s276, 3
        %s278 = scalar_select %p277, %s276, 3
        %s279 = smul.addr %s278, 8
        %s280 = scalar_lea.vmem %s0, %s279
        %s281 = smul.u32 2, %s22
        %s282 = smul.u32 2, %s22
        %283 = vst [vmem:[#allocation2] sm:$0x1] 0.0
        %284 = vst [vmem:[#allocation2 + $0x11] sm:$0x1] 0.0
        %v285 = vld [vmem:[%s280] sm:$0xff]
        %v286 = vld [vmem:[%s280 + $0x8] sm:$0xff]
        %287 = vst [vmem:[#allocation2 + $0x1] sm:$0xff] %v285
        %288 = vst [vmem:[#allocation2 + $0x9] sm:$0xff] %v286
        %v289 = vld [vmem:[#allocation2] sm:$0xff]
        %v290 = vld [vmem:[#allocation2 + $0x8] sm:$0xff]
        %v291 = vld [vmem:[#allocation2 + $0x1] sm:$0xff]
        %v292 = vld [vmem:[#allocation2 + $0x9] sm:$0xff]
        %v293 = vld [vmem:[#allocation2 + $0x2] sm:$0xff]
        %v294 = vld [vmem:[#allocation2 + $0xa] sm:$0xff]
        %v295 = vld [vmem:[#allocation4] sm:$0xff]
        %v296 = vld [vmem:[#allocation4 + $0x8] sm:$0xff]
        %v297 = vld [vmem:[#allocation4 + $0x10] sm:$0xff]
        %v298 = vld [vmem:[#allocation4 + $0x18] sm:$0xff]
        %v299 = vld [vmem:[#allocation4 + $0x20] sm:$0xff]
        %v300 = vld [vmem:[#allocation4 + $0x28] sm:$0xff]
        %v301 = vld [vmem:[#allocation4 + $0x30] sm:$0xff]
        %v302 = vld [vmem:[#allocation4 + $0x38] sm:$0xff]
        %v303 = vld [vmem:[#allocation4 + $0x40] sm:$0xff]
        %v304 = vld [vmem:[#allocation4 + $0x48] sm:$0xff]
        %v305 = vld [vmem:[#allocation4 + $0x50] sm:$0xff]
        %v306 = vld [vmem:[#allocation4 + $0x58] sm:$0xff]
        %v307 = vld [vmem:[#allocation4 + $0x60] sm:$0xff]
        %v308 = vld [vmem:[#allocation4 + $0x68] sm:$0xff]
        %v309 = vld [vmem:[#allocation4 + $0x70] sm:$0xff]
        %v310 = vld [vmem:[#allocation4 + $0x78] sm:$0xff]
        %v311 = vld [vmem:[#allocation4 + $0x80] sm:$0xff]
        %v312 = vld [vmem:[#allocation4 + $0x88] sm:$0xff]
        %v313 = vld [vmem:[#allocation4 + $0x90] sm:$0xff]
        %v314 = vld [vmem:[#allocation4 + $0x98] sm:$0xff]
        %v315 = vld [vmem:[#allocation4 + $0xa0] sm:$0xff]
        %v316 = vld [vmem:[#allocation4 + $0xa8] sm:$0xff]
        %v317 = vld [vmem:[#allocation4 + $0xb0] sm:$0xff]
        %v318 = vld [vmem:[#allocation4 + $0xb8] sm:$0xff]
        %v319 = vld [vmem:[#allocation4 + $0xc0] sm:$0xff]
        %v320 = vld [vmem:[#allocation4 + $0xc8] sm:$0xff]
        %v321 = vld [vmem:[#allocation4 + $0xd0] sm:$0xff]
        %v322 = vld [vmem:[#allocation4 + $0xd8] sm:$0xff]
        %v323 = vld [vmem:[#allocation4 + $0xe0] sm:$0xff]
        %v324 = vld [vmem:[#allocation4 + $0xe8] sm:$0xff]
        %v325 = vld [vmem:[#allocation4 + $0xf0] sm:$0xff]
        %v326 = vld [vmem:[#allocation4 + $0xf8] sm:$0xff]
        %v327 = vld [vmem:[#allocation4 + $0x100] sm:$0xff]
        %v328 = vld [vmem:[#allocation4 + $0x108] sm:$0xff]
        %v329 = vld [vmem:[#allocation4 + $0x110] sm:$0xff]
        %v330 = vld [vmem:[#allocation4 + $0x118] sm:$0xff]
        %v331 = vld [vmem:[#allocation4 + $0x120] sm:$0xff]
        %v332 = vld [vmem:[#allocation4 + $0x128] sm:$0xff]
        %v333 = vld [vmem:[#allocation4 + $0x130] sm:$0xff]
        %v334 = vld [vmem:[#allocation4 + $0x138] sm:$0xff]
        %v335 = vld [vmem:[#allocation4 + $0x140] sm:$0xff]
        %v336 = vld [vmem:[#allocation4 + $0x148] sm:$0xff]
        %v337 = vld [vmem:[#allocation4 + $0x150] sm:$0xff]
        %v338 = vld [vmem:[#allocation4 + $0x158] sm:$0xff]
        %v339 = vld [vmem:[#allocation4 + $0x160] sm:$0xff]
        %v340 = vld [vmem:[#allocation4 + $0x168] sm:$0xff]
        %v341 = vld [vmem:[#allocation4 + $0x170] sm:$0xff]
        %v342 = vld [vmem:[#allocation4 + $0x178] sm:$0xff]
        %343 = vmatprep.subr.mxu0 0.0
        %344 = vmatpush1.msra.mxu0 %v295
        %345 = vmatprep.subr.mxu0 0.0
        %346 = vmatpush1.msra.mxu0 %v296
        %347 = vmatprep.subr.mxu0 0.0
        %348 = vmatpush1.msra.mxu0 %v297
        %349 = vmatprep.subr.mxu0 0.0
        %350 = vmatpush1.msra.mxu0 %v298
        %351 = vmatprep.subr.mxu0 0.0
        %352 = vmatpush1.msra.mxu0 %v299
        %353 = vmatprep.subr.mxu0 0.0
        %354 = vmatpush1.msra.mxu0 %v300
        %355 = vmatprep.subr.mxu0 0.0
        %356 = vmatpush1.msra.mxu0 %v301
        %357 = vmatprep.subr.mxu0 0.0
        %358 = vmatpush1.msra.mxu0 %v302
        %359 = vmatprep.subr.mxu0 0.0
        %360 = vmatpush1.msra.mxu0 %v303
        %361 = vmatprep.subr.mxu0 0.0
        %362 = vmatpush1.msra.mxu0 %v304
        %363 = vmatprep.subr.mxu0 0.0
        %364 = vmatpush1.msra.mxu0 %v305
        %365 = vmatprep.subr.mxu0 0.0
        %366 = vmatpush1.msra.mxu0 %v306
        %367 = vmatprep.subr.mxu0 0.0
        %368 = vmatpush1.msra.mxu0 %v307
        %369 = vmatprep.subr.mxu0 0.0
        %370 = vmatpush1.msra.mxu0 %v308
        %371 = vmatprep.subr.mxu0 0.0
        %372 = vmatpush1.msra.mxu0 %v309
        %373 = vmatprep.subr.mxu0 0.0
        %374 = vmatpush1.msra.mxu0 %v310
        %375 = vmatprep.subr.mxu0 0.0
        %376 = vmatpush1.msra.mxu0 %v311
        %377 = vmatprep.subr.mxu0 0.0
        %378 = vmatpush1.msra.mxu0 %v312
        %379 = vmatprep.subr.mxu0 0.0
        %380 = vmatpush1.msra.mxu0 %v313
        %381 = vmatprep.subr.mxu0 0.0
        %382 = vmatpush1.msra.mxu0 %v314
        %383 = vmatprep.subr.mxu0 0.0
        %384 = vmatpush1.msra.mxu0 %v315
        %385 = vmatprep.subr.mxu0 0.0
        %386 = vmatpush1.msra.mxu0 %v316
        %387 = vmatprep.subr.mxu0 0.0
        %388 = vmatpush1.msra.mxu0 %v317
        %389 = vmatprep.subr.mxu0 0.0
        %390 = vmatpush1.msra.mxu0 %v318
        %391 = vmatprep.subr.mxu0 0.0
        %392 = vmatpush1.msra.mxu0 %v319
        %393 = vmatprep.subr.mxu0 0.0
        %394 = vmatpush1.msra.mxu0 %v320
        %395 = vmatprep.subr.mxu0 0.0
        %396 = vmatpush1.msra.mxu0 %v321
        %397 = vmatprep.subr.mxu0 0.0
        %398 = vmatpush1.msra.mxu0 %v322
        %399 = vmatprep.subr.mxu0 0.0
        %400 = vmatpush1.msra.mxu0 %v323
        %401 = vmatprep.subr.mxu0 0.0
        %402 = vmatpush1.msra.mxu0 %v324
        %403 = vmatprep.subr.mxu0 0.0
        %404 = vmatpush1.msra.mxu0 %v325
        %405 = vmatprep.subr.mxu0 0.0
        %406 = vmatpush1.msra.mxu0 %v326
        %407 = vmatprep.mubr.f32.mxu0 %v291
        %408 = vmatmul.mubr.f32.gmra.mrb[0].mxu0 %v289
        %v409 = vpop.f32.mrb[0].mxu0
        %v410 = vadd.f32 0.0, %v409
        %v411 = vpop.f32.mrb[0].mxu0
        %412 = vmatprep.mubr.f32.mxu0 %v292
        %413 = vmatmul.mubr.f32.gmra.mrb[0].mxu0 %v290
        %v414 = vpop.f32.mrb[0].mxu0
        %v415 = vadd.f32 0.0, %v414
        %v416 = vpop.f32.mrb[0].mxu0
        %417 = vdwg.mxu0
        %418 = vmatprep.subr.mxu0 0.0
        %419 = vmatpush1.msra.mxu0 %v327
        %420 = vmatprep.subr.mxu0 0.0
        %421 = vmatpush1.msra.mxu0 %v328
        %422 = vmatprep.subr.mxu0 0.0
        %423 = vmatpush1.msra.mxu0 %v329
        %424 = vmatprep.subr.mxu0 0.0
        %425 = vmatpush1.msra.mxu0 %v330
        %426 = vmatprep.subr.mxu0 0.0
        %427 = vmatpush1.msra.mxu0 %v331
        %428 = vmatprep.subr.mxu0 0.0
        %429 = vmatpush1.msra.mxu0 %v332
        %430 = vmatprep.subr.mxu0 0.0
        %431 = vmatpush1.msra.mxu0 %v333
        %432 = vmatprep.subr.mxu0 0.0
        %433 = vmatpush1.msra.mxu0 %v334
        %434 = vmatprep.subr.mxu0 0.0
        %435 = vmatpush1.msra.mxu0 %v335
        %436 = vmatprep.subr.mxu0 0.0
        %437 = vmatpush1.msra.mxu0 %v336
        %438 = vmatprep.subr.mxu0 0.0
        %439 = vmatpush1.msra.mxu0 %v337
        %440 = vmatprep.subr.mxu0 0.0
        %441 = vmatpush1.msra.mxu0 %v338
        %442 = vmatprep.subr.mxu0 0.0
        %443 = vmatpush1.msra.mxu0 %v339
        %444 = vmatprep.subr.mxu0 0.0
        %445 = vmatpush1.msra.mxu0 %v340
        %446 = vmatprep.subr.mxu0 0.0
        %447 = vmatpush1.msra.mxu0 %v341
        %448 = vmatprep.subr.mxu0 0.0
        %449 = vmatpush1.msra.mxu0 %v342
        %450 = vmatprep.subr.mxu0 0.0
        %451 = vmatpush1.msra.mxu0 0.0
        %452 = vmatprep.subr.mxu0 0.0
        %453 = vmatpush1.msra.mxu0 0.0
        %454 = vmatprep.subr.mxu0 0.0
        %455 = vmatpush1.msra.mxu0 0.0
        %456 = vmatprep.subr.mxu0 0.0
        %457 = vmatpush1.msra.mxu0 0.0
        %458 = vmatprep.subr.mxu0 0.0
        %459 = vmatpush1.msra.mxu0 0.0
        %460 = vmatprep.subr.mxu0 0.0
        %461 = vmatpush1.msra.mxu0 0.0
        %462 = vmatprep.subr.mxu0 0.0
        %463 = vmatpush1.msra.mxu0 0.0
        %464 = vmatprep.subr.mxu0 0.0
        %465 = vmatpush1.msra.mxu0 0.0
        %466 = vmatprep.subr.mxu0 0.0
        %467 = vmatpush1.msra.mxu0 0.0
        %468 = vmatprep.subr.mxu0 0.0
        %469 = vmatpush1.msra.mxu0 0.0
        %470 = vmatprep.subr.mxu0 0.0
        %471 = vmatpush1.msra.mxu0 0.0
        %472 = vmatprep.subr.mxu0 0.0
        %473 = vmatpush1.msra.mxu0 0.0
        %474 = vmatprep.subr.mxu0 0.0
        %475 = vmatpush1.msra.mxu0 0.0
        %476 = vmatprep.subr.mxu0 0.0
        %477 = vmatpush1.msra.mxu0 0.0
        %478 = vmatprep.subr.mxu0 0.0
        %479 = vmatpush1.msra.mxu0 0.0
        %480 = vmatprep.subr.mxu0 0.0
        %481 = vmatpush1.msra.mxu0 0.0
        %482 = vmatprep.mubr.f32.mxu0 0.0
        %483 = vmatmul.mubr.f32.gmra.mrb[0].mxu0 %v293
        %v484 = vpop.f32.mrb[0].mxu0
        %v485 = vadd.f32 %v410, %v484
        %v486 = vpop.f32.mrb[0].mxu0
        %487 = vmatprep.mubr.f32.mxu0 0.0
        %488 = vmatmul.mubr.f32.gmra.mrb[0].mxu0 %v294
        %v489 = vpop.f32.mrb[0].mxu0
        %v490 = vadd.f32 %v415, %v489
        %v491 = vpop.f32.mrb[0].mxu0
        %492 = vdwg.mxu0
        %v493 = vld [vmem:[%s3 + $0x8] sm:$0x1]
        %v494 = vld [vmem:[%s3 + $0x9] sm:$0x1]
        %v495 = vadd.f32 %v485, %v490
        %v496 = vrot.slane %v495, 4
        %v497 = vadd.f32 %v495, %v496
        %v498 = vrot.slane %v497, 2
        %v499 = vadd.f32 %v497, %v498
        %v500 = vrot.slane %v499, 1
        %v501 = vadd.f32 %v499, %v500
        %v502 = vmul.f32 %v485, %v485
        %v503 = vmul.f32 %v490, %v490
        %v504 = vadd.f32 %v502, %v503
        %v505 = vrot.slane %v504, 4
        %v506 = vadd.f32 %v504, %v505
        %v507 = vrot.slane %v506, 2
        %v508 = vadd.f32 %v506, %v507
        %v509 = vrot.slane %v508, 1
        %v510 = vadd.f32 %v508, %v509
        %v511 = vmul.f32 %v493, 16.0
        %v512 = vadd.f32 %v501, %v511
        %v513 = vmul.f32 %v493, 2.0
        %v514 = vmul.f32 %v513, %v501
        %v515 = vadd.f32 %v510, %v514
        %v516 = vmul.f32 %v493, %v493
        %v517 = vmul.f32 %v516, 16.0
        %v518 = vadd.f32 %v515, %v517
        %v520 = vrot.slane %v518, 7
        %vm522 = vcmask 1040384
        %v523 = vsel %vm522, %v512, %v520
        %v524 = vld [vmem:[%s5] sm:$0xff]
        %v525 = vld [vmem:[%s5 + $0x8] sm:$0xff]
        %v526 = vld [vmem:[%s5 + $0x10] sm:$0xff]
        %v527 = vld [vmem:[%s5 + $0x18] sm:$0xff]
        %v528 = vld [vmem:[%s5 + $0x20] sm:$0xff]
        %v529 = vld [vmem:[%s5 + $0x28] sm:$0xff]
        %v530 = vld [vmem:[%s5 + $0x30] sm:$0xff]
        %v531 = vld [vmem:[%s5 + $0x38] sm:$0xff]
        %v532 = vld [vmem:[%s5 + $0x40] sm:$0xff]
        %v533 = vld [vmem:[%s5 + $0x48] sm:$0xff]
        %v534 = vld [vmem:[%s5 + $0x50] sm:$0xff]
        %v535 = vld [vmem:[%s5 + $0x58] sm:$0xff]
        %v536 = vld [vmem:[%s5 + $0x60] sm:$0xff]
        %v537 = vld [vmem:[%s5 + $0x68] sm:$0xff]
        %v538 = vld [vmem:[%s5 + $0x70] sm:$0xff]
        %v539 = vld [vmem:[%s5 + $0x78] sm:$0xff]
        %540 = vmatprep.subr.mxu0 0.0
        %541 = vmatpush1.msra.mxu0 %v524
        %542 = vmatprep.subr.mxu0 0.0
        %543 = vmatpush1.msra.mxu0 %v525
        %544 = vmatprep.subr.mxu0 0.0
        %545 = vmatpush1.msra.mxu0 %v526
        %546 = vmatprep.subr.mxu0 0.0
        %547 = vmatpush1.msra.mxu0 %v527
        %548 = vmatprep.subr.mxu0 0.0
        %549 = vmatpush1.msra.mxu0 %v528
        %550 = vmatprep.subr.mxu0 0.0
        %551 = vmatpush1.msra.mxu0 %v529
        %552 = vmatprep.subr.mxu0 0.0
        %553 = vmatpush1.msra.mxu0 %v530
        %554 = vmatprep.subr.mxu0 0.0
        %555 = vmatpush1.msra.mxu0 %v531
        %556 = vmatprep.subr.mxu0 0.0
        %557 = vmatpush1.msra.mxu0 %v532
        %558 = vmatprep.subr.mxu0 0.0
        %559 = vmatpush1.msra.mxu0 %v533
        %560 = vmatprep.subr.mxu0 0.0
        %561 = vmatpush1.msra.mxu0 %v534
        %562 = vmatprep.subr.mxu0 0.0
        %563 = vmatpush1.msra.mxu0 %v535
        %564 = vmatprep.subr.mxu0 0.0
        %565 = vmatpush1.msra.mxu0 %v536
        %566 = vmatprep.subr.mxu0 0.0
        %567 = vmatpush1.msra.mxu0 %v537
        %568 = vmatprep.subr.mxu0 0.0
        %569 = vmatpush1.msra.mxu0 %v538
        %570 = vmatprep.subr.mxu0 0.0
        %571 = vmatpush1.msra.mxu0 %v539
        %572 = vmatprep.subr.mxu0 0.0
        %573 = vmatpush1.msra.mxu0 0.0
        %574 = vmatprep.subr.mxu0 0.0
        %575 = vmatpush1.msra.mxu0 0.0
        %576 = vmatprep.subr.mxu0 0.0
        %577 = vmatpush1.msra.mxu0 0.0
        %578 = vmatprep.subr.mxu0 0.0
        %579 = vmatpush1.msra.mxu0 0.0
        %580 = vmatprep.subr.mxu0 0.0
        %581 = vmatpush1.msra.mxu0 0.0
        %582 = vmatprep.subr.mxu0 0.0
        %583 = vmatpush1.msra.mxu0 0.0
        %584 = vmatprep.subr.mxu0 0.0
        %585 = vmatpush1.msra.mxu0 0.0
        %586 = vmatprep.subr.mxu0 0.0
        %587 = vmatpush1.msra.mxu0 0.0
        %588 = vmatprep.subr.mxu0 0.0
        %589 = vmatpush1.msra.mxu0 0.0
        %590 = vmatprep.subr.mxu0 0.0
        %591 = vmatpush1.msra.mxu0 0.0
        %592 = vmatprep.subr.mxu0 0.0
        %593 = vmatpush1.msra.mxu0 0.0
        %594 = vmatprep.subr.mxu0 0.0
        %595 = vmatpush1.msra.mxu0 0.0
        %596 = vmatprep.subr.mxu0 0.0
        %597 = vmatpush1.msra.mxu0 0.0
        %598 = vmatprep.subr.mxu0 0.0
        %599 = vmatpush1.msra.mxu0 0.0
        %600 = vmatprep.subr.mxu0 0.0
        %601 = vmatpush1.msra.mxu0 0.0
        %602 = vmatprep.subr.mxu0 0.0
        %603 = vmatpush1.msra.mxu0 0.0
        %604 = vmatprep.mubr.f32.mxu0 0.0
        %605 = vmatmul.mubr.f32.gmra.mrb[0].mxu0 %v523
        %v606 = vpop.f32.mrb[0].mxu0
        %v607 = vadd.f32 0.0, %v606
        %v608 = vpop.f32.mrb[0].mxu0
        %609 = vdwg.mxu0
        %v610 = vmul.f32 %v607, 0.00390625
        %v611 = vmul.f32 %v610, %v610
        %v613 = vrot.slane %v611, 7
        %v615 = vsub.f32 %v610, %v613
        %v616 = vmax.f32 %v615, 0.0
        %v617 = vadd.f32 %v616, 1e-05
        %v618 = vrsqrt.pop %v617
        %v620 = vrot.slane %v618, 1
        %v622 = vmul.f32 %v610, %v620
        %v624 = vrot.slane %v622, 7
        %v626 = vsel %vm522, %v620, %v624
        %v627 = vld [vmem:[%s3] sm:$0xff]
        %vm628 = vcmask 64512
        %v630 = vsel %vm628, %v626, 0
        %632 = vmatprep.subr.mxu0 0.0
        %633 = vmatpush1.msra.mxu0 %v627
        %634 = vmatprep.subr.mxu0 0.0
        %635 = vmatpush1.msra.mxu0 0.0
        %636 = vmatprep.subr.mxu0 0.0
        %637 = vmatpush1.msra.mxu0 0.0
        %638 = vmatprep.subr.mxu0 0.0
        %639 = vmatpush1.msra.mxu0 0.0
        %640 = vmatprep.subr.mxu0 0.0
        %641 = vmatpush1.msra.mxu0 0.0
        %642 = vmatprep.subr.mxu0 0.0
        %643 = vmatpush1.msra.mxu0 0.0
        %644 = vmatprep.subr.mxu0 0.0
        %645 = vmatpush1.msra.mxu0 0.0
        %646 = vmatprep.subr.mxu0 0.0
        %647 = vmatpush1.msra.mxu0 0.0
        %648 = vmatprep.subr.mxu0 0.0
        %649 = vmatpush1.msra.mxu0 0.0
        %650 = vmatprep.subr.mxu0 0.0
        %651 = vmatpush1.msra.mxu0 0.0
        %652 = vmatprep.subr.mxu0 0.0
        %653 = vmatpush1.msra.mxu0 0.0
        %654 = vmatprep.subr.mxu0 0.0
        %655 = vmatpush1.msra.mxu0 0.0
        %656 = vmatprep.subr.mxu0 0.0
        %657 = vmatpush1.msra.mxu0 0.0
        %658 = vmatprep.subr.mxu0 0.0
        %659 = vmatpush1.msra.mxu0 0.0
        %660 = vmatprep.subr.mxu0 0.0
        %661 = vmatpush1.msra.mxu0 0.0
        %662 = vmatprep.subr.mxu0 0.0
        %663 = vmatpush1.msra.mxu0 0.0
        %664 = vmatprep.subr.mxu0 0.0
        %665 = vmatpush1.msra.mxu0 0.0
        %666 = vmatprep.subr.mxu0 0.0
        %667 = vmatpush1.msra.mxu0 0.0
        %668 = vmatprep.subr.mxu0 0.0
        %669 = vmatpush1.msra.mxu0 0.0
        %670 = vmatprep.subr.mxu0 0.0
        %671 = vmatpush1.msra.mxu0 0.0
        %672 = vmatprep.subr.mxu0 0.0
        %673 = vmatpush1.msra.mxu0 0.0
        %674 = vmatprep.subr.mxu0 0.0
        %675 = vmatpush1.msra.mxu0 0.0
        %676 = vmatprep.subr.mxu0 0.0
        %677 = vmatpush1.msra.mxu0 0.0
        %678 = vmatprep.subr.mxu0 0.0
        %679 = vmatpush1.msra.mxu0 0.0
        %680 = vmatprep.subr.mxu0 0.0
        %681 = vmatpush1.msra.mxu0 0.0
        %682 = vmatprep.subr.mxu0 0.0
        %683 = vmatpush1.msra.mxu0 0.0
        %684 = vmatprep.subr.mxu0 0.0
        %685 = vmatpush1.msra.mxu0 0.0
        %686 = vmatprep.subr.mxu0 0.0
        %687 = vmatpush1.msra.mxu0 0.0
        %688 = vmatprep.subr.mxu0 0.0
        %689 = vmatpush1.msra.mxu0 0.0
        %690 = vmatprep.subr.mxu0 0.0
        %691 = vmatpush1.msra.mxu0 0.0
        %692 = vmatprep.subr.mxu0 0.0
        %693 = vmatpush1.msra.mxu0 0.0
        %694 = vmatprep.subr.mxu0 0.0
        %695 = vmatpush1.msra.mxu0 0.0
        %696 = vmatprep.mubr.f32.mxu0 0.0
        %697 = vmatmul.mubr.f32.gmra.mrb[0].mxu0 %v630
        %v698 = vpop.f32.mrb[0].mxu0
        %v699 = vadd.f32 0.0, %v698
        %v700 = vpop.f32.mrb[0].mxu0
        %701 = vdwg.mxu0
        %v702 = vmul.f32 %v493, %v699
        %v703 = vadd.f32 %v494, %v702
        %v705 = vrot.slane %v699, 1
        %v707 = vsub.f32 %v703, %v705
        %v708 = vlaneseq
        %v709 = vshrl.u32 %v708, 7
        %v710 = vsub.s32 0, %v709
        %v711 = vrot.slane %v699, %v710
        %v712 = vmul.f32 %v485, %v711
        %v713 = vmul.f32 %v490, %v711
        %v714 = vlaneseq
        %v715 = vshrl.u32 %v714, 7
        %v716 = vsub.s32 0, %v715
        %v717 = vrot.slane %v707, %v716
        %v718 = vadd.f32 %v712, %v717
        %v719 = vadd.f32 %v713, %v717
        %v720 = vmax.f32 %v718, 0.0
        %v721 = vmax.f32 %v719, 0.0
        %722 = vst [vmem:[#allocation3] sm:$0x1] 0.0
        %723 = vst [vmem:[#allocation3 + $0x11] sm:$0x1] 0.0
        %724 = vst [vmem:[#allocation3 + $0x1] sm:$0xff] %v720
        %725 = vst [vmem:[#allocation3 + $0x9] sm:$0xff] %v721
        %v726 = vld [vmem:[#allocation3] sm:$0xff]
        %v727 = vld [vmem:[#allocation3 + $0x8] sm:$0xff]
        %v728 = vld [vmem:[#allocation3 + $0x1] sm:$0xff]
        %v729 = vld [vmem:[#allocation3 + $0x9] sm:$0xff]
        %v730 = vld [vmem:[#allocation3 + $0x2] sm:$0xff]
        %v731 = vld [vmem:[#allocation3 + $0xa] sm:$0xff]
        %v732 = vld [vmem:[#allocation7] sm:$0xff]
        %v733 = vld [vmem:[#allocation7 + $0x8] sm:$0xff]
        %v734 = vld [vmem:[#allocation7 + $0x10] sm:$0xff]
        %v735 = vld [vmem:[#allocation7 + $0x18] sm:$0xff]
        %v736 = vld [vmem:[#allocation7 + $0x20] sm:$0xff]
        %v737 = vld [vmem:[#allocation7 + $0x28] sm:$0xff]
        %v738 = vld [vmem:[#allocation7 + $0x30] sm:$0xff]
        %v739 = vld [vmem:[#allocation7 + $0x38] sm:$0xff]
        %v740 = vld [vmem:[#allocation7 + $0x40] sm:$0xff]
        %v741 = vld [vmem:[#allocation7 + $0x48] sm:$0xff]
        %v742 = vld [vmem:[#allocation7 + $0x50] sm:$0xff]
        %v743 = vld [vmem:[#allocation7 + $0x58] sm:$0xff]
        %v744 = vld [vmem:[#allocation7 + $0x60] sm:$0xff]
        %v745 = vld [vmem:[#allocation7 + $0x68] sm:$0xff]
        %v746 = vld [vmem:[#allocation7 + $0x70] sm:$0xff]
        %v747 = vld [vmem:[#allocation7 + $0x78] sm:$0xff]
        %v748 = vld [vmem:[#allocation7 + $0x80] sm:$0xff]
        %v749 = vld [vmem:[#allocation7 + $0x88] sm:$0xff]
        %v750 = vld [vmem:[#allocation7 + $0x90] sm:$0xff]
        %v751 = vld [vmem:[#allocation7 + $0x98] sm:$0xff]
        %v752 = vld [vmem:[#allocation7 + $0xa0] sm:$0xff]
        %v753 = vld [vmem:[#allocation7 + $0xa8] sm:$0xff]
        %v754 = vld [vmem:[#allocation7 + $0xb0] sm:$0xff]
        %v755 = vld [vmem:[#allocation7 + $0xb8] sm:$0xff]
        %v756 = vld [vmem:[#allocation7 + $0xc0] sm:$0xff]
        %v757 = vld [vmem:[#allocation7 + $0xc8] sm:$0xff]
        %v758 = vld [vmem:[#allocation7 + $0xd0] sm:$0xff]
        %v759 = vld [vmem:[#allocation7 + $0xd8] sm:$0xff]
        %v760 = vld [vmem:[#allocation7 + $0xe0] sm:$0xff]
        %v761 = vld [vmem:[#allocation7 + $0xe8] sm:$0xff]
        %v762 = vld [vmem:[#allocation7 + $0xf0] sm:$0xff]
        %v763 = vld [vmem:[#allocation7 + $0xf8] sm:$0xff]
        %v764 = vld [vmem:[#allocation7 + $0x100] sm:$0xff]
        %v765 = vld [vmem:[#allocation7 + $0x108] sm:$0xff]
        %v766 = vld [vmem:[#allocation7 + $0x110] sm:$0xff]
        %v767 = vld [vmem:[#allocation7 + $0x118] sm:$0xff]
        %v768 = vld [vmem:[#allocation7 + $0x120] sm:$0xff]
        %v769 = vld [vmem:[#allocation7 + $0x128] sm:$0xff]
        %v770 = vld [vmem:[#allocation7 + $0x130] sm:$0xff]
        %v771 = vld [vmem:[#allocation7 + $0x138] sm:$0xff]
        %v772 = vld [vmem:[#allocation7 + $0x140] sm:$0xff]
        %v773 = vld [vmem:[#allocation7 + $0x148] sm:$0xff]
        %v774 = vld [vmem:[#allocation7 + $0x150] sm:$0xff]
        %v775 = vld [vmem:[#allocation7 + $0x158] sm:$0xff]
        %v776 = vld [vmem:[#allocation7 + $0x160] sm:$0xff]
        %v777 = vld [vmem:[#allocation7 + $0x168] sm:$0xff]
        %v778 = vld [vmem:[#allocation7 + $0x170] sm:$0xff]
        %v779 = vld [vmem:[#allocation7 + $0x178] sm:$0xff]
        %780 = vmatprep.subr.mxu0 0.0
        %781 = vmatpush1.msra.mxu0 %v732
        %782 = vmatprep.subr.mxu0 0.0
        %783 = vmatpush1.msra.mxu0 %v733
        %784 = vmatprep.subr.mxu0 0.0
        %785 = vmatpush1.msra.mxu0 %v734
        %786 = vmatprep.subr.mxu0 0.0
        %787 = vmatpush1.msra.mxu0 %v735
        %788 = vmatprep.subr.mxu0 0.0
        %789 = vmatpush1.msra.mxu0 %v736
        %790 = vmatprep.subr.mxu0 0.0
        %791 = vmatpush1.msra.mxu0 %v737
        %792 = vmatprep.subr.mxu0 0.0
        %793 = vmatpush1.msra.mxu0 %v738
        %794 = vmatprep.subr.mxu0 0.0
        %795 = vmatpush1.msra.mxu0 %v739
        %796 = vmatprep.subr.mxu0 0.0
        %797 = vmatpush1.msra.mxu0 %v740
        %798 = vmatprep.subr.mxu0 0.0
        %799 = vmatpush1.msra.mxu0 %v741
        %800 = vmatprep.subr.mxu0 0.0
        %801 = vmatpush1.msra.mxu0 %v742
        %802 = vmatprep.subr.mxu0 0.0
        %803 = vmatpush1.msra.mxu0 %v743
        %804 = vmatprep.subr.mxu0 0.0
        %805 = vmatpush1.msra.mxu0 %v744
        %806 = vmatprep.subr.mxu0 0.0
        %807 = vmatpush1.msra.mxu0 %v745
        %808 = vmatprep.subr.mxu0 0.0
        %809 = vmatpush1.msra.mxu0 %v746
        %810 = vmatprep.subr.mxu0 0.0
        %811 = vmatpush1.msra.mxu0 %v747
        %812 = vmatprep.subr.mxu0 0.0
        %813 = vmatpush1.msra.mxu0 %v748
        %814 = vmatprep.subr.mxu0 0.0
        %815 = vmatpush1.msra.mxu0 %v749
        %816 = vmatprep.subr.mxu0 0.0
        %817 = vmatpush1.msra.mxu0 %v750
        %818 = vmatprep.subr.mxu0 0.0
        %819 = vmatpush1.msra.mxu0 %v751
        %820 = vmatprep.subr.mxu0 0.0
        %821 = vmatpush1.msra.mxu0 %v752
        %822 = vmatprep.subr.mxu0 0.0
        %823 = vmatpush1.msra.mxu0 %v753
        %824 = vmatprep.subr.mxu0 0.0
        %825 = vmatpush1.msra.mxu0 %v754
        %826 = vmatprep.subr.mxu0 0.0
        %827 = vmatpush1.msra.mxu0 %v755
        %828 = vmatprep.subr.mxu0 0.0
        %829 = vmatpush1.msra.mxu0 %v756
        %830 = vmatprep.subr.mxu0 0.0
        %831 = vmatpush1.msra.mxu0 %v757
        %832 = vmatprep.subr.mxu0 0.0
        %833 = vmatpush1.msra.mxu0 %v758
        %834 = vmatprep.subr.mxu0 0.0
        %835 = vmatpush1.msra.mxu0 %v759
        %836 = vmatprep.subr.mxu0 0.0
        %837 = vmatpush1.msra.mxu0 %v760
        %838 = vmatprep.subr.mxu0 0.0
        %839 = vmatpush1.msra.mxu0 %v761
        %840 = vmatprep.subr.mxu0 0.0
        %841 = vmatpush1.msra.mxu0 %v762
        %842 = vmatprep.subr.mxu0 0.0
        %843 = vmatpush1.msra.mxu0 %v763
        %844 = vmatprep.mubr.f32.mxu0 %v728
        %845 = vmatmul.mubr.f32.gmra.mrb[0].mxu0 %v726
        %v846 = vpop.f32.mrb[0].mxu0
        %v847 = vadd.f32 0.0, %v846
        %v848 = vpop.f32.mrb[0].mxu0
        %849 = vmatprep.mubr.f32.mxu0 %v729
        %850 = vmatmul.mubr.f32.gmra.mrb[0].mxu0 %v727
        %v851 = vpop.f32.mrb[0].mxu0
        %v852 = vadd.f32 0.0, %v851
        %v853 = vpop.f32.mrb[0].mxu0
        %854 = vdwg.mxu0
        %855 = vmatprep.subr.mxu0 0.0
        %856 = vmatpush1.msra.mxu0 %v764
        %857 = vmatprep.subr.mxu0 0.0
        %858 = vmatpush1.msra.mxu0 %v765
        %859 = vmatprep.subr.mxu0 0.0
        %860 = vmatpush1.msra.mxu0 %v766
        %861 = vmatprep.subr.mxu0 0.0
        %862 = vmatpush1.msra.mxu0 %v767
        %863 = vmatprep.subr.mxu0 0.0
        %864 = vmatpush1.msra.mxu0 %v768
        %865 = vmatprep.subr.mxu0 0.0
        %866 = vmatpush1.msra.mxu0 %v769
        %867 = vmatprep.subr.mxu0 0.0
        %868 = vmatpush1.msra.mxu0 %v770
        %869 = vmatprep.subr.mxu0 0.0
        %870 = vmatpush1.msra.mxu0 %v771
        %871 = vmatprep.subr.mxu0 0.0
        %872 = vmatpush1.msra.mxu0 %v772
        %873 = vmatprep.subr.mxu0 0.0
        %874 = vmatpush1.msra.mxu0 %v773
        %875 = vmatprep.subr.mxu0 0.0
        %876 = vmatpush1.msra.mxu0 %v774
        %877 = vmatprep.subr.mxu0 0.0
        %878 = vmatpush1.msra.mxu0 %v775
        %879 = vmatprep.subr.mxu0 0.0
        %880 = vmatpush1.msra.mxu0 %v776
        %881 = vmatprep.subr.mxu0 0.0
        %882 = vmatpush1.msra.mxu0 %v777
        %883 = vmatprep.subr.mxu0 0.0
        %884 = vmatpush1.msra.mxu0 %v778
        %885 = vmatprep.subr.mxu0 0.0
        %886 = vmatpush1.msra.mxu0 %v779
        %887 = vmatprep.subr.mxu0 0.0
        %888 = vmatpush1.msra.mxu0 0.0
        %889 = vmatprep.subr.mxu0 0.0
        %890 = vmatpush1.msra.mxu0 0.0
        %891 = vmatprep.subr.mxu0 0.0
        %892 = vmatpush1.msra.mxu0 0.0
        %893 = vmatprep.subr.mxu0 0.0
        %894 = vmatpush1.msra.mxu0 0.0
        %895 = vmatprep.subr.mxu0 0.0
        %896 = vmatpush1.msra.mxu0 0.0
        %897 = vmatprep.subr.mxu0 0.0
        %898 = vmatpush1.msra.mxu0 0.0
        %899 = vmatprep.subr.mxu0 0.0
        %900 = vmatpush1.msra.mxu0 0.0
        %901 = vmatprep.subr.mxu0 0.0
        %902 = vmatpush1.msra.mxu0 0.0
        %903 = vmatprep.subr.mxu0 0.0
        %904 = vmatpush1.msra.mxu0 0.0
        %905 = vmatprep.subr.mxu0 0.0
        %906 = vmatpush1.msra.mxu0 0.0
        %907 = vmatprep.subr.mxu0 0.0
        %908 = vmatpush1.msra.mxu0 0.0
        %909 = vmatprep.subr.mxu0 0.0
        %910 = vmatpush1.msra.mxu0 0.0
        %911 = vmatprep.subr.mxu0 0.0
        %912 = vmatpush1.msra.mxu0 0.0
        %913 = vmatprep.subr.mxu0 0.0
        %914 = vmatpush1.msra.mxu0 0.0
        %915 = vmatprep.subr.mxu0 0.0
        %916 = vmatpush1.msra.mxu0 0.0
        %917 = vmatprep.subr.mxu0 0.0
        %918 = vmatpush1.msra.mxu0 0.0
        %919 = vmatprep.mubr.f32.mxu0 0.0
        %920 = vmatmul.mubr.f32.gmra.mrb[0].mxu0 %v730
        %v921 = vpop.f32.mrb[0].mxu0
        %v922 = vadd.f32 %v847, %v921
        %v923 = vpop.f32.mrb[0].mxu0
        %924 = vmatprep.mubr.f32.mxu0 0.0
        %925 = vmatmul.mubr.f32.gmra.mrb[0].mxu0 %v731
        %v926 = vpop.f32.mrb[0].mxu0
        %v927 = vadd.f32 %v852, %v926
        %v928 = vpop.f32.mrb[0].mxu0
        %929 = vdwg.mxu0
        %v930 = vld [vmem:[%s4 + $0x8] sm:$0x1]
        %v931 = vld [vmem:[%s4 + $0x9] sm:$0x1]
        %v932 = vadd.f32 %v922, %v927
        %v933 = vrot.slane %v932, 4
        %v934 = vadd.f32 %v932, %v933
        %v935 = vrot.slane %v934, 2
        %v936 = vadd.f32 %v934, %v935
        %v937 = vrot.slane %v936, 1
        %v938 = vadd.f32 %v936, %v937
        %v939 = vmul.f32 %v922, %v922
        %v940 = vmul.f32 %v927, %v927
        %v941 = vadd.f32 %v939, %v940
        %v942 = vrot.slane %v941, 4
        %v943 = vadd.f32 %v941, %v942
        %v944 = vrot.slane %v943, 2
        %v945 = vadd.f32 %v943, %v944
        %v946 = vrot.slane %v945, 1
        %v947 = vadd.f32 %v945, %v946
        %v948 = vmul.f32 %v930, 16.0
        %v949 = vadd.f32 %v938, %v948
        %v950 = vmul.f32 %v930, 2.0
        %v951 = vmul.f32 %v950, %v938
        %v952 = vadd.f32 %v947, %v951
        %v953 = vmul.f32 %v930, %v930
        %v954 = vmul.f32 %v953, 16.0
        %v955 = vadd.f32 %v952, %v954
        %v957 = vrot.slane %v955, 7
        %v959 = vsel %vm522, %v949, %v957
        %v960 = vld [vmem:[%s5] sm:$0xff]
        %v961 = vld [vmem:[%s5 + $0x8] sm:$0xff]
        %v962 = vld [vmem:[%s5 + $0x10] sm:$0xff]
        %v963 = vld [vmem:[%s5 + $0x18] sm:$0xff]
        %v964 = vld [vmem:[%s5 + $0x20] sm:$0xff]
        %v965 = vld [vmem:[%s5 + $0x28] sm:$0xff]
        %v966 = vld [vmem:[%s5 + $0x30] sm:$0xff]
        %v967 = vld [vmem:[%s5 + $0x38] sm:$0xff]
        %v968 = vld [vmem:[%s5 + $0x40] sm:$0xff]
        %v969 = vld [vmem:[%s5 + $0x48] sm:$0xff]
        %v970 = vld [vmem:[%s5 + $0x50] sm:$0xff]
        %v971 = vld [vmem:[%s5 + $0x58] sm:$0xff]
        %v972 = vld [vmem:[%s5 + $0x60] sm:$0xff]
        %v973 = vld [vmem:[%s5 + $0x68] sm:$0xff]
        %v974 = vld [vmem:[%s5 + $0x70] sm:$0xff]
        %v975 = vld [vmem:[%s5 + $0x78] sm:$0xff]
        %976 = vmatprep.subr.mxu0 0.0
        %977 = vmatpush1.msra.mxu0 %v960
        %978 = vmatprep.subr.mxu0 0.0
        %979 = vmatpush1.msra.mxu0 %v961
        %980 = vmatprep.subr.mxu0 0.0
        %981 = vmatpush1.msra.mxu0 %v962
        %982 = vmatprep.subr.mxu0 0.0
        %983 = vmatpush1.msra.mxu0 %v963
        %984 = vmatprep.subr.mxu0 0.0
        %985 = vmatpush1.msra.mxu0 %v964
        %986 = vmatprep.subr.mxu0 0.0
        %987 = vmatpush1.msra.mxu0 %v965
        %988 = vmatprep.subr.mxu0 0.0
        %989 = vmatpush1.msra.mxu0 %v966
        %990 = vmatprep.subr.mxu0 0.0
        %991 = vmatpush1.msra.mxu0 %v967
        %992 = vmatprep.subr.mxu0 0.0
        %993 = vmatpush1.msra.mxu0 %v968
        %994 = vmatprep.subr.mxu0 0.0
        %995 = vmatpush1.msra.mxu0 %v969
        %996 = vmatprep.subr.mxu0 0.0
        %997 = vmatpush1.msra.mxu0 %v970
        %998 = vmatprep.subr.mxu0 0.0
        %999 = vmatpush1.msra.mxu0 %v971
        %1000 = vmatprep.subr.mxu0 0.0
        %1001 = vmatpush1.msra.mxu0 %v972
        %1002 = vmatprep.subr.mxu0 0.0
        %1003 = vmatpush1.msra.mxu0 %v973
        %1004 = vmatprep.subr.mxu0 0.0
        %1005 = vmatpush1.msra.mxu0 %v974
        %1006 = vmatprep.subr.mxu0 0.0
        %1007 = vmatpush1.msra.mxu0 %v975
        %1008 = vmatprep.subr.mxu0 0.0
        %1009 = vmatpush1.msra.mxu0 0.0
        %1010 = vmatprep.subr.mxu0 0.0
        %1011 = vmatpush1.msra.mxu0 0.0
        %1012 = vmatprep.subr.mxu0 0.0
        %1013 = vmatpush1.msra.mxu0 0.0
        %1014 = vmatprep.subr.mxu0 0.0
        %1015 = vmatpush1.msra.mxu0 0.0
        %1016 = vmatprep.subr.mxu0 0.0
        %1017 = vmatpush1.msra.mxu0 0.0
        %1018 = vmatprep.subr.mxu0 0.0
        %1019 = vmatpush1.msra.mxu0 0.0
        %1020 = vmatprep.subr.mxu0 0.0
        %1021 = vmatpush1.msra.mxu0 0.0
        %1022 = vmatprep.subr.mxu0 0.0
        %1023 = vmatpush1.msra.mxu0 0.0
        %1024 = vmatprep.subr.mxu0 0.0
        %1025 = vmatpush1.msra.mxu0 0.0
        %1026 = vmatprep.subr.mxu0 0.0
        %1027 = vmatpush1.msra.mxu0 0.0
        %1028 = vmatprep.subr.mxu0 0.0
        %1029 = vmatpush1.msra.mxu0 0.0
        %1030 = vmatprep.subr.mxu0 0.0
        %1031 = vmatpush1.msra.mxu0 0.0
        %1032 = vmatprep.subr.mxu0 0.0
        %1033 = vmatpush1.msra.mxu0 0.0
        %1034 = vmatprep.subr.mxu0 0.0
        %1035 = vmatpush1.msra.mxu0 0.0
        %1036 = vmatprep.subr.mxu0 0.0
        %1037 = vmatpush1.msra.mxu0 0.0
        %1038 = vmatprep.subr.mxu0 0.0
        %1039 = vmatpush1.msra.mxu0 0.0
        %1040 = vmatprep.mubr.f32.mxu0 0.0
        %1041 = vmatmul.mubr.f32.gmra.mrb[0].mxu0 %v959
        %v1042 = vpop.f32.mrb[0].mxu0
        %v1043 = vadd.f32 0.0, %v1042
        %v1044 = vpop.f32.mrb[0].mxu0
        %1045 = vdwg.mxu0
        %v1046 = vmul.f32 %v1043, 0.00390625
        %v1047 = vmul.f32 %v1046, %v1046
        %v1049 = vrot.slane %v1047, 7
        %v1051 = vsub.f32 %v1046, %v1049
        %v1052 = vmax.f32 %v1051, 0.0
        %v1053 = vadd.f32 %v1052, 1e-05
        %v1054 = vrsqrt.pop %v1053
        %v1056 = vrot.slane %v1054, 1
        %v1058 = vmul.f32 %v1046, %v1056
        %v1060 = vrot.slane %v1058, 7
        %v1062 = vsel %vm522, %v1056, %v1060
        %v1063 = vld [vmem:[%s4] sm:$0xff]
        %v1065 = vsel %vm628, %v1062, 0
        %1067 = vmatprep.subr.mxu0 0.0
        %1068 = vmatpush1.msra.mxu0 %v1063
        %1069 = vmatprep.subr.mxu0 0.0
        %1070 = vmatpush1.msra.mxu0 0.0
        %1071 = vmatprep.subr.mxu0 0.0
        %1072 = vmatpush1.msra.mxu0 0.0
        %1073 = vmatprep.subr.mxu0 0.0
        %1074 = vmatpush1.msra.mxu0 0.0
        %1075 = vmatprep.subr.mxu0 0.0
        %1076 = vmatpush1.msra.mxu0 0.0
        %1077 = vmatprep.subr.mxu0 0.0
        %1078 = vmatpush1.msra.mxu0 0.0
        %1079 = vmatprep.subr.mxu0 0.0
        %1080 = vmatpush1.msra.mxu0 0.0
        %1081 = vmatprep.subr.mxu0 0.0
        %1082 = vmatpush1.msra.mxu0 0.0
        %1083 = vmatprep.subr.mxu0 0.0
        %1084 = vmatpush1.msra.mxu0 0.0
        %1085 = vmatprep.subr.mxu0 0.0
        %1086 = vmatpush1.msra.mxu0 0.0
        %1087 = vmatprep.subr.mxu0 0.0
        %1088 = vmatpush1.msra.mxu0 0.0
        %1089 = vmatprep.subr.mxu0 0.0
        %1090 = vmatpush1.msra.mxu0 0.0
        %1091 = vmatprep.subr.mxu0 0.0
        %1092 = vmatpush1.msra.mxu0 0.0
        %1093 = vmatprep.subr.mxu0 0.0
        %1094 = vmatpush1.msra.mxu0 0.0
        %1095 = vmatprep.subr.mxu0 0.0
        %1096 = vmatpush1.msra.mxu0 0.0
        %1097 = vmatprep.subr.mxu0 0.0
        %1098 = vmatpush1.msra.mxu0 0.0
        %1099 = vmatprep.subr.mxu0 0.0
        %1100 = vmatpush1.msra.mxu0 0.0
        %1101 = vmatprep.subr.mxu0 0.0
        %1102 = vmatpush1.msra.mxu0 0.0
        %1103 = vmatprep.subr.mxu0 0.0
        %1104 = vmatpush1.msra.mxu0 0.0
        %1105 = vmatprep.subr.mxu0 0.0
        %1106 = vmatpush1.msra.mxu0 0.0
        %1107 = vmatprep.subr.mxu0 0.0
        %1108 = vmatpush1.msra.mxu0 0.0
        %1109 = vmatprep.subr.mxu0 0.0
        %1110 = vmatpush1.msra.mxu0 0.0
        %1111 = vmatprep.subr.mxu0 0.0
        %1112 = vmatpush1.msra.mxu0 0.0
        %1113 = vmatprep.subr.mxu0 0.0
        %1114 = vmatpush1.msra.mxu0 0.0
        %1115 = vmatprep.subr.mxu0 0.0
        %1116 = vmatpush1.msra.mxu0 0.0
        %1117 = vmatprep.subr.mxu0 0.0
        %1118 = vmatpush1.msra.mxu0 0.0
        %1119 = vmatprep.subr.mxu0 0.0
        %1120 = vmatpush1.msra.mxu0 0.0
        %1121 = vmatprep.subr.mxu0 0.0
        %1122 = vmatpush1.msra.mxu0 0.0
        %1123 = vmatprep.subr.mxu0 0.0
        %1124 = vmatpush1.msra.mxu0 0.0
        %1125 = vmatprep.subr.mxu0 0.0
        %1126 = vmatpush1.msra.mxu0 0.0
        %1127 = vmatprep.subr.mxu0 0.0
        %1128 = vmatpush1.msra.mxu0 0.0
        %1129 = vmatprep.subr.mxu0 0.0
        %1130 = vmatpush1.msra.mxu0 0.0
        %1131 = vmatprep.mubr.f32.mxu0 0.0
        %1132 = vmatmul.mubr.f32.gmra.mrb[0].mxu0 %v1065
        %v1133 = vpop.f32.mrb[0].mxu0
        %v1134 = vadd.f32 0.0, %v1133
        %v1135 = vpop.f32.mrb[0].mxu0
        %1136 = vdwg.mxu0
        %v1137 = vmul.f32 %v930, %v1134
        %v1138 = vadd.f32 %v931, %v1137
        %v1140 = vrot.slane %v1134, 1
        %v1142 = vsub.f32 %v1138, %v1140
        %v1143 = vlaneseq
        %v1144 = vshrl.u32 %v1143, 7
        %v1145 = vsub.s32 0, %v1144
        %v1146 = vrot.slane %v1134, %v1145
        %v1147 = vmul.f32 %v922, %v1146
        %v1148 = vmul.f32 %v927, %v1146
        %v1149 = vlaneseq
        %v1150 = vshrl.u32 %v1149, 7
        %v1151 = vsub.s32 0, %v1150
        %v1152 = vrot.slane %v1142, %v1151
        %v1153 = vadd.f32 %v1147, %v1152
        %v1154 = vadd.f32 %v1148, %v1152
        %v1155 = vmax.f32 %v1153, 0.0
        %v1156 = vmax.f32 %v1154, 0.0
        %1157 = vst [vmem:[%s275] sm:$0xff] %v1155
        %1158 = vst [vmem:[%s275 + $0x8] sm:$0xff] %v1156
        %s1159 = sand.u32 %s161, 1
        %s1160 = scalar_lea.sflag [#allocation6], %s1159
        %s1161 = sand.u32 %s161, 1
        %s1162 = smul.addr %s1161, 16
        %s1163 = scalar_lea.vmem [#allocation9], %s1162
        // Predicated region
        $region53: #{tpu_custom_call.1} parent=43 // pred_check
          %p1164 = pneg %p171
        $region54: #{tpu_custom_call.1} parent=43 // pred_check_branch
          %1166 = sbr.rel (%p1164) target = $region56
        $region55: #{tpu_custom_call.1} parent=43 // pred_region
          %s1167 = smul.u32 2, %s22
          %s1169 = ssub.s32 256, 256
          %1170 = vsyncadd %s1160, %s1169
          %s1171 = smul.addr %s1167, 128
          %s1172 = scalar_lea.hbm %s6, %s1171
          %s1173 = sshll.u32 %s1163, 4
          %s1174 = int_to_ptr.vmem [resolvable:$true] %s1173
          %1179 = dma.vmem_to_hbm [thread:$0]  %s1174, 256, %s1172, %s1160, 128, 128, 8
        $region56: #{tpu_custom_call.1} parent=43 // pred_fallthru
          _
      $region44: #{tpu_custom_call.1} parent=5 // pred_fallthru
        _
      %p1180 = scmp.le.s32.totalorder 2, %s17
      // Predicated region
      $region57: #{tpu_custom_call.1} parent=5 // pred_check
        %p1181 = pneg %p1180
      $region58: #{tpu_custom_call.1} parent=5 // pred_check_branch
        %1183 = sbr.rel (%p1181) target = $region60
      $region59: #{tpu_custom_call.1} parent=5 // pred_region
        %s1184 = ssub.s32 %s17, 2
        // Predicated region
        $region61: #{tpu_custom_call.1} parent=59 // pred_check
          %p1185 = pneg %p177
        $region62: #{tpu_custom_call.1} parent=59 // pred_check_branch
          %1187 = sbr.rel (%p1185) target = $region64
        $region63: #{tpu_custom_call.1} parent=59 // pred_region
          %s1188 = sand.u32 %s162, 1
          %s1189 = scalar_lea.sflag [#allocation6], %s1188
          %s1190 = sand.u32 %s162, 1
          %s1191 = smul.addr %s1190, 16
          %s1192 = scalar_lea.vmem [#allocation9], %s1191
          %1193 = dma.done %s1189, 256
        $region64: #{tpu_custom_call.1} parent=59 // pred_fallthru
          _
      $region60: #{tpu_custom_call.1} parent=5 // pred_fallthru
        _
    $region6: #{tpu_custom_call.1} parent=1 // loop_footer
      %s21 = sadd.s32 1, %s17
    $region7: #{tpu_custom_call.1} parent=1 // loop_footer_branch
      %16 = sbr.rel target = $region3
    $region8: #{tpu_custom_call.1} parent=1 // loop_exit
      _
    %1194 = vsyncpa [#allocation5], 1
    %s1195 = scalar_lea.sflag [#allocation5], 1
    %1196 = vsyncpa %s1195, 1
    %1197 = vsyncpa [#allocation8], 1
    %1198 = vsyncpa [#allocation6], 1
    %s1199 = scalar_lea.sflag [#allocation6], 1
    %1200 = vsyncpa %s1199, 1

</llo_original>
